<compile_context>
chip_gen: v7x
topology: tpu7x:2x2x1
jax: 0.10.0
libtpu: 0.0.40
codegen_flags: <defaults>
</compile_context>

<pallas_src>
import functools
import math

import jax
import jax.numpy as jnp
from jax.experimental import pallas as pl
from jax.experimental.pallas import tpu as pltpu

LN_EPS = 1e-6
MASK_FILL = -1e9


def _vmem_limit_bytes(per_step_bytes):
    # Stay >= the default scoped limit but never above v7x's 64 MiB physical per-core VMEM.
    return int(min(64 * 1024 * 1024,
                   max(32 * 1024 * 1024, 2 * per_step_bytes + 16 * 1024 * 1024)))


def _layer_norm_f32(x_f32, gamma, beta, eps=LN_EPS):
    """Torch-style LayerNormalization: alpha*(x-mean)/(std+eps)+bias, unbiased std."""
    d = x_f32.shape[-1]
    mean = jnp.mean(x_f32, axis=-1, keepdims=True)
    var = jnp.sum((x_f32 - mean) ** 2, axis=-1, keepdims=True) / (d - 1)
    return gamma * (x_f32 - mean) / (jnp.sqrt(var) + eps) + beta


# ---------------------------------------------------------------------------
# Kernel 1: pre-LN + multi-head self-attention + W_o + residual (one batch per step)
# ---------------------------------------------------------------------------
def _attn_block_kernel(x_ref, mask_ref, wq_ref, bq_ref, wk_ref, bk_ref,
                       wv_ref, bv_ref, wo_ref, bo_ref, gamma_ref, beta_ref,
                       o_ref, *, num_heads):
    x = x_ref[0].astype(jnp.float32)                       # (S, D) residual stream
    d_model = x.shape[-1]
    d_k = d_model // num_heads
    cd = wq_ref.dtype                                      # MXU operand dtype (bf16 preferred)

    xn = _layer_norm_f32(x, gamma_ref[0], beta_ref[0]).astype(cd)

    q = jnp.dot(xn, wq_ref[...], preferred_element_type=jnp.float32) + bq_ref[...]
    k = jnp.dot(xn, wk_ref[...], preferred_element_type=jnp.float32) + bk_ref[...]
    v = jnp.dot(xn, wv_ref[...], preferred_element_type=jnp.float32) + bv_ref[...]

    key_mask = mask_ref[0]                                 # (1, S) int32; 0 == masked key
    scale = 1.0 / math.sqrt(d_k)

    ctx_heads = []
    for h in range(num_heads):                             # unrolled; head slices lane-aligned
        sl = slice(h * d_k, (h + 1) * d_k)
        qh, kh, vh = q[:, sl], k[:, sl], v[:, sl]
        s = jax.lax.dot_general(qh.astype(cd), kh.astype(cd),
                                (((1,), (1,)), ((), ())),
                                preferred_element_type=jnp.float32) * scale
        s = jnp.where(jnp.broadcast_to(key_mask == 0, s.shape), MASK_FILL, s)
        s = s - jnp.max(s, axis=-1, keepdims=True)         # softmax in f32
        p = jnp.exp(s)
        p = p / jnp.sum(p, axis=-1, keepdims=True)
        # TODO(synk): training-mode attention dropout (pltpu.prng_*) would mask p here.
        ctx_heads.append(jnp.dot(p.astype(cd), vh.astype(cd),
                                 preferred_element_type=jnp.float32))
    ctx = jnp.concatenate(ctx_heads, axis=-1)              # (S, D)

    attn = jnp.dot(ctx.astype(cd), wo_ref[...],
                   preferred_element_type=jnp.float32) + bo_ref[...]
    # ResidualConnection: x + dropout(sublayer(norm(x))); dropout = identity in eval.
    o_ref[0] = (x + attn).astype(o_ref.dtype)


def attention_residual_block(x, src_mask, wq, bq, wk, bk, wv, bv, wo, bo,
                             gamma, beta, *, num_heads):
    batch, seq, d_model = x.shape
    assert d_model % num_heads == 0
    assert d_model % 128 == 0, "keep feature dims lane-dense (multiple of 128)"
    itemsize = lambda a: jnp.dtype(a.dtype).itemsize

    wspec = pl.BlockSpec((d_model, d_model), lambda i: (0, 0))
    bspec = pl.BlockSpec((1, d_model), lambda i: (0, 0))
    smem = pl.BlockSpec(memory_space=pltpu.MemorySpace.SMEM)

    vmem_need = (
        2 * seq * d_model * itemsize(x)                # x block + out block
        + seq * 4                                      # mask block
        + 4 * d_model * d_model * itemsize(wq)         # resident projection weights
        + 4 * d_model * 4                              # biases (f32)
        + 6 * seq * d_model * 4                        # q,k,v,ctx,xn,attn f32 intermediates
    )
    cost = pl.CostEstimate(
        flops=int(batch * (8 * seq * d_model * d_model + 4 * seq * seq * d_model)),
        transcendentals=int(batch * num_heads * seq * seq),
        bytes_accessed=int(sum(a.size * itemsize(a)
                               for a in (x, src_mask, wq, wk, wv, wo, bq, bk, bv, bo))
                           + x.size * itemsize(x)),
    )

    kernel = functools.partial(_attn_block_kernel, num_heads=num_heads)
    return pl.pallas_call(
        kernel,
        out_shape=jax.ShapeDtypeStruct((batch, seq, d_model), x.dtype),
        grid_spec=pltpu.PrefetchScalarGridSpec(
            num_scalar_prefetch=0,
            grid=(batch,),
            in_specs=[
                pl.BlockSpec((1, seq, d_model), lambda i: (i, 0, 0)),   # x
                pl.BlockSpec((1, 1, seq), lambda i: (i, 0, 0)),         # key mask
                wspec, bspec,                                           # W_q, b_q
                wspec, bspec,                                           # W_k, b_k
                wspec, bspec,                                           # W_v, b_v
                wspec, bspec,                                           # W_o, b_o
                smem, smem,                                             # LN alpha, bias
            ],
            out_specs=pl.BlockSpec((1, seq, d_model), lambda i: (i, 0, 0)),
        ),
        compiler_params=pltpu.CompilerParams(
            dimension_semantics=("parallel",),
            vmem_limit_bytes=_vmem_limit_bytes(vmem_need)),
        cost_estimate=cost,
    )(x, src_mask, wq, bq.reshape(1, d_model), wk, bk.reshape(1, d_model),
      wv, bv.reshape(1, d_model), wo, bo.reshape(1, d_model), gamma, beta)


# ---------------------------------------------------------------------------
# Kernel 2: pre-LN + FFN (Linear/ReLU/Linear) + residual, tiled (tokens x d_ff)
# ---------------------------------------------------------------------------
def _ffn_block_kernel(x_ref, w1_ref, b1_ref, w2_ref, b2_ref, gamma_ref, beta_ref,
                      o_ref, acc_ref):
    k = pl.program_id(1)

    x = x_ref[...].astype(jnp.float32)                     # (tile_n, d_model)
    xn = _layer_norm_f32(x, gamma_ref[0], beta_ref[0])     # cheap VPU work, per d_ff tile
    cd = w1_ref.dtype                                      # MXU operand dtype

    @pl.when(k == 0)
    def _init():
        acc_ref[...] = jnp.zeros_like(acc_ref)

    h = jnp.dot(xn.astype(cd), w1_ref[...], preferred_element_type=jnp.float32) + b1_ref[...]
    h = jnp.maximum(h, 0.0)                                # ReLU on f32 accumulator
    # TODO(synk): training-mode dropout (pltpu.prng_seed/prng_random_bits) would mask h here.
    acc_ref[...] += jnp.dot(h.astype(cd), w2_ref[...], preferred_element_type=jnp.float32)

    @pl.when(k == pl.num_programs(1) - 1)
    def _finalize():
        # Fused epilogue: second bias + residual add, written lane-dense.
        o_ref[...] = (x + acc_ref[...] + b2_ref[...]).astype(o_ref.dtype)


def ffn_residual_block(x, w1, b1, w2, b2, gamma, beta, *, tile_n=256, tile_ff=256):
    batch, seq, d_model = x.shape
    d_ff = w1.shape[1]
    n = batch * seq
    assert d_model % 128 == 0 and d_ff % 128 == 0, \
        "keep feature dims lane-dense (multiples of 128)"
    tile_n = min(tile_n, n)
    assert n % tile_n == 0 and (tile_n % 8 == 0 or tile_n == n)
    tile_ff = min(tile_ff, d_ff)
    assert d_ff % tile_ff == 0

    itemsize = lambda a: jnp.dtype(a.dtype).itemsize
    x2d = x.reshape(n, d_model)
    b1_2d = b1.reshape(1, d_ff)
    b2_2d = b2.reshape(1, d_model)
    grid = (n // tile_n, d_ff // tile_ff)                  # reduction (d_ff) axis last

    vmem_need = (
        2 * tile_n * d_model * itemsize(x)                 # x tile + out tile
        + d_model * tile_ff * itemsize(w1)
        + tile_ff * d_model * itemsize(w2)
        + tile_ff * itemsize(b1) + d_model * itemsize(b2)
        + tile_n * d_model * 4                             # f32 accumulator scratch
        + tile_n * tile_ff * 4                             # ReLU intermediate
    )
    cost = pl.CostEstimate(
        flops=int(4 * n * d_model * d_ff),
        transcendentals=int(n),
        bytes_accessed=int(sum(a.size * itemsize(a) for a in (x2d, w1, w2, b1_2d, b2_2d))
                           + x2d.size * itemsize(x2d)),
    )

    out2d = pl.pallas_call(
        _ffn_block_kernel,
        out_shape=jax.ShapeDtypeStruct((n, d_model), x.dtype),
        grid_spec=pltpu.PrefetchScalarGridSpec(
            num_scalar_prefetch=0,
            grid=grid,
            in_specs=[
                pl.BlockSpec((tile_n, d_model), lambda i, j: (i, 0)),    # x rows
                pl.BlockSpec((d_model, tile_ff), lambda i, j: (0, j)),   # W1 column tile
                pl.BlockSpec((1, tile_ff), lambda i, j: (0, j)),         # b1 tile
                pl.BlockSpec((tile_ff, d_model), lambda i, j: (j, 0)),   # W2 row tile
                pl.BlockSpec((1, d_model), lambda i, j: (0, 0)),         # b2
                pl.BlockSpec(memory_space=pltpu.MemorySpace.SMEM),       # LN alpha
                pl.BlockSpec(memory_space=pltpu.MemorySpace.SMEM),       # LN bias
            ],
            out_specs=pl.BlockSpec((tile_n, d_model), lambda i, j: (i, 0)),
            scratch_shapes=[pltpu.VMEM((tile_n, d_model), jnp.float32)],
        ),
        compiler_params=pltpu.CompilerParams(
            dimension_semantics=("parallel", "arbitrary"),
            vmem_limit_bytes=_vmem_limit_bytes(vmem_need)),
        cost_estimate=cost,
    )(x2d, w1, b1_2d, w2, b2_2d, gamma, beta)

    return out2d.reshape(batch, seq, d_model)


def encoder_block(x, src_mask, p, *, num_heads, tile_n=256, tile_ff=256):
    """EncoderBlock.forward: x = x + MHA(LN(x)); x = x + FFN(LN(x))  (dropout = identity)."""
    x = attention_residual_block(
        x, src_mask, p["wq"], p["bq"], p["wk"], p["bk"], p["wv"], p["bv"],
        p["wo"], p["bo"], p["ln1_alpha"], p["ln1_bias"], num_heads=num_heads)
    x = ffn_residual_block(
        x, p["w1"], p["b1"], p["w2"], p["b2"], p["ln2_alpha"], p["ln2_bias"],
        tile_n=tile_n, tile_ff=tile_ff)
    return x


# ---------------------------------------------------------------------------
# Pure-JAX reference (mirrors the PyTorch module semantics in f32)
# ---------------------------------------------------------------------------
def encoder_block_ref(x, src_mask, p, *, num_heads):
    b, s, d_model = x.shape
    d_k = d_model // num_heads

    def layer_norm(z, alpha, bias):
        mean = z.mean(axis=-1, keepdims=True)
        std = jnp.std(z, axis=-1, keepdims=True, ddof=1)   # torch .std() is unbiased
        return alpha * (z - mean) / (std + LN_EPS) + bias

    xn = layer_norm(x, p["ln1_alpha"], p["ln1_bias"])
    q = (xn @ p["wq"] + p["bq"]).reshape(b, s, num_heads, d_k).transpose(0, 2, 1, 3)
    k = (xn @ p["wk"] + p["bk"]).reshape(b, s, num_heads, d_k).transpose(0, 2, 1, 3)
    v = (xn @ p["wv"] + p["bv"]).reshape(b, s, num_heads, d_k).transpose(0, 2, 1, 3)
    scores = jnp.einsum("bhqd,bhkd->bhqk", q, k) / math.sqrt(d_k)
    scores = jnp.where(src_mask[:, :, None, :] == 0, MASK_FILL, scores)
    attn = jax.nn.softmax(scores, axis=-1)
    ctx = jnp.einsum("bhqk,bhkd->bhqd", attn, v).transpose(0, 2, 1, 3).reshape(b, s, d_model)
    x = x + (ctx @ p["wo"] + p["bo"])

    xn = layer_norm(x, p["ln2_alpha"], p["ln2_bias"])
    h = jnp.maximum(xn @ p["w1"] + p["b1"], 0.0)
    return x + (h @ p["w2"] + p["b2"])


def init_encoder_params(key, d_model, d_ff, dtype=jnp.float32):
    """nn.Linear-style init; weights stored (in_features, out_features)."""
    ks = jax.random.split(key, 12)

    def linear(kw, kb, fan_in, fan_out):
        bound = 1.0 / math.sqrt(fan_in)
        w = jax.random.uniform(kw, (fan_in, fan_out), dtype, -bound, bound)
        b = jax.random.uniform(kb, (fan_out,), jnp.float32, -bound, bound)
        return w, b

    wq, bq = linear(ks[0], ks[1], d_model, d_model)
    wk, bk = linear(ks[2], ks[3], d_model, d_model)
    wv, bv = linear(ks[4], ks[5], d_model, d_model)
    wo, bo = linear(ks[6], ks[7], d_model, d_model)
    w1, b1 = linear(ks[8], ks[9], d_model, d_ff)
    w2, b2 = linear(ks[10], ks[11], d_ff, d_model)
    return dict(
        wq=wq, bq=bq, wk=wk, bk=bk, wv=wv, bv=bv, wo=wo, bo=bo,
        w1=w1, b1=b1, w2=w2, b2=b2,
        ln1_alpha=jnp.ones((1,), jnp.float32), ln1_bias=jnp.zeros((1,), jnp.float32),
        ln2_alpha=jnp.ones((1,), jnp.float32), ln2_bias=jnp.zeros((1,), jnp.float32))


if __name__ == "__main__":
    # Small but lane-dense shapes (d_model, d_ff multiples of 128 per perf review).
    batch, seq, d_model, d_ff, num_heads = 2, 128, 256, 512, 2

    key = jax.random.PRNGKey(0)
    kx, kp = jax.random.split(key)
    x_f32 = jax.random.normal(kx, (batch, seq, d_model), jnp.float32)
    params_f32 = init_encoder_params(kp, d_model, d_ff, jnp.float32)

    # src_mask: (batch, 1, seq) key-padding mask; batch 1 has its last 32 keys masked.
    valid_len = jnp.array([seq, seq - 32], jnp.int32)
    src_mask = (jnp.arange(seq)[None, None, :] < valid_len[:, None, None]).astype(jnp.int32)

    with jax.default_matmul_precision("highest"):
        ref = encoder_block_ref(x_f32, src_mask, params_f32, num_heads=num_heads)

    # 1) f32-operand run: checks the fused LN / attention / FFN / residual math.
    out_f32 = encoder_block(x_f32, src_mask, params_f32, num_heads=num_heads)
    jax.block_until_ready(out_f32)
    assert out_f32.shape == (batch, seq, d_model)
    assert jnp.allclose(out_f32, ref, atol=5e-2, rtol=5e-2), \
        float(jnp.max(jnp.abs(out_f32 - ref)))

    # 2) bf16-operand run (perf-feedback path): bf16 MXU matmuls, f32 accumulation.
    params_bf16 = dict(params_f32)
    for name in ("wq", "wk", "wv", "wo", "w1", "w2"):
        params_bf16[name] = params_f32[name].astype(jnp.bfloat16)
    out_bf16 = encoder_block(x_f32.astype(jnp.bfloat16), src_mask, params_bf16,
                             num_heads=num_heads)
    jax.block_until_ready(out_bf16)
    assert out_bf16.dtype == jnp.bfloat16
    assert jnp.allclose(out_bf16.astype(jnp.float32), ref, atol=1e-1, rtol=1e-1), \
        float(jnp.max(jnp.abs(out_bf16.astype(jnp.float32) - ref)))

    print("KERNEL_OK")
</pallas_src>

<mosaic_0001>
module attributes {stable_mosaic.version = 11 : i64} {
  func.func @_attn_block_kernel(%arg0: i32, %arg1: memref<1x128x256xf32, #tpu.memory_space<vmem>>, %arg2: memref<1x1x128xi32, #tpu.memory_space<vmem>>, %arg3: memref<256x256xf32, #tpu.memory_space<vmem>>, %arg4: memref<1x256xf32, #tpu.memory_space<vmem>>, %arg5: memref<256x256xf32, #tpu.memory_space<vmem>>, %arg6: memref<1x256xf32, #tpu.memory_space<vmem>>, %arg7: memref<256x256xf32, #tpu.memory_space<vmem>>, %arg8: memref<1x256xf32, #tpu.memory_space<vmem>>, %arg9: memref<256x256xf32, #tpu.memory_space<vmem>>, %arg10: memref<1x256xf32, #tpu.memory_space<vmem>>, %arg11: memref<1xf32, #tpu.memory_space<smem>>, %arg12: memref<1xf32, #tpu.memory_space<smem>>, %arg13: memref<1x128x256xf32, #tpu.memory_space<vmem>>) attributes {dimension_semantics = [#tpu.dimension_semantics<parallel>], iteration_bounds = array<i64: 2>, scalar_prefetch = 0 : i64, scratch_operands = 0 : i64, tpu.core_type = #tpu.core_type<tc>, window_params = [{transform_indices = @transform_0, window_bounds = array<i64: 1, 128, 256>}, {transform_indices = @transform_1, window_bounds = array<i64: 1, 1, 128>}, {pipeline_mode = #tpu.pipeline_mode<synchronous>, transform_indices = @transform_2, window_bounds = array<i64: 256, 256>}, {pipeline_mode = #tpu.pipeline_mode<synchronous>, transform_indices = @transform_3, window_bounds = array<i64: 1, 256>}, {pipeline_mode = #tpu.pipeline_mode<synchronous>, transform_indices = @transform_4, window_bounds = array<i64: 256, 256>}, {pipeline_mode = #tpu.pipeline_mode<synchronous>, transform_indices = @transform_5, window_bounds = array<i64: 1, 256>}, {pipeline_mode = #tpu.pipeline_mode<synchronous>, transform_indices = @transform_6, window_bounds = array<i64: 256, 256>}, {pipeline_mode = #tpu.pipeline_mode<synchronous>, transform_indices = @transform_7, window_bounds = array<i64: 1, 256>}, {pipeline_mode = #tpu.pipeline_mode<synchronous>, transform_indices = @transform_8, window_bounds = array<i64: 256, 256>}, {pipeline_mode = #tpu.pipeline_mode<synchronous>, transform_indices = @transform_9, window_bounds = array<i64: 1, 256>}, {transform_indices = @transform_10, window_bounds = array<i64: 1>}, {transform_indices = @transform_11, window_bounds = array<i64: 1>}, {transform_indices = @transform_12, window_bounds = array<i64: 1, 128, 256>}]} {
    %c0 = arith.constant 0 : index
    %c0_0 = arith.constant 0 : index
    %c0_1 = arith.constant 0 : index
    %0 = vector.load %arg1[%c0, %c0_0, %c0_1] : memref<1x128x256xf32, #tpu.memory_space<vmem>>, vector<1x128x256xf32>
    %1 = vector.shape_cast %0 : vector<1x128x256xf32> to vector<128x256xf32>
    %c0_2 = arith.constant 0 : index
    %2 = memref.load %arg11[%c0_2] : memref<1xf32, #tpu.memory_space<smem>>
    %c0_3 = arith.constant 0 : index
    %3 = memref.load %arg12[%c0_3] : memref<1xf32, #tpu.memory_space<smem>>
    %cst = arith.constant dense<0.000000e+00> : vector<128xf32>
    %4 = vector.multi_reduction <add>, %1, %cst [1] : vector<128x256xf32> to vector<128xf32>
    %5 = vector.shape_cast %4 : vector<128xf32> to vector<128x1xf32>
    %cst_4 = arith.constant 2.560000e+02 : f32
    %6 = vector.broadcast %cst_4 : f32 to vector<128x1xf32>
    %7 = arith.divf %5, %6 : vector<128x1xf32>
    %8 = vector.broadcast %7 : vector<128x1xf32> to vector<128x256xf32>
    %9 = arith.subf %1, %8 : vector<128x256xf32>
    %10 = arith.mulf %9, %9 : vector<128x256xf32>
    %cst_5 = arith.constant dense<0.000000e+00> : vector<128xf32>
    %11 = vector.multi_reduction <add>, %10, %cst_5 [1] : vector<128x256xf32> to vector<128xf32>
    %12 = vector.shape_cast %11 : vector<128xf32> to vector<128x1xf32>
    %cst_6 = arith.constant 2.550000e+02 : f32
    %13 = vector.broadcast %cst_6 : f32 to vector<128x1xf32>
    %14 = arith.divf %12, %13 : vector<128x1xf32>
    %15 = vector.broadcast %7 : vector<128x1xf32> to vector<128x256xf32>
    %16 = arith.subf %1, %15 : vector<128x256xf32>
    %17 = vector.broadcast %2 : f32 to vector<128x256xf32>
    %18 = arith.mulf %17, %16 : vector<128x256xf32>
    %19 = math.sqrt %14 : vector<128x1xf32>
    %cst_7 = arith.constant 9.99999997E-7 : f32
    %20 = vector.broadcast %cst_7 : f32 to vector<128x1xf32>
    %21 = arith.addf %19, %20 : vector<128x1xf32>
    %22 = vector.broadcast %21 : vector<128x1xf32> to vector<128x256xf32>
    %23 = arith.divf %18, %22 : vector<128x256xf32>
    %24 = vector.broadcast %3 : f32 to vector<128x256xf32>
    %25 = arith.addf %23, %24 : vector<128x256xf32>
    %c0_8 = arith.constant 0 : index
    %c0_9 = arith.constant 0 : index
    %26 = vector.load %arg3[%c0_8, %c0_9] : memref<256x256xf32, #tpu.memory_space<vmem>>, vector<256x256xf32>
    %cst_10 = arith.constant dense<0.000000e+00> : vector<128x256xf32>
    %27 = tpu.matmul %25, %26, %cst_10 {dimension_numbers = #tpu.dot_dimension_numbers<[1], [0], [0], [1], [0, 0, 1, 1], [], []>} : vector<128x256xf32>, vector<256x256xf32>, vector<128x256xf32> -> vector<128x256xf32>
    %c0_11 = arith.constant 0 : index
    %c0_12 = arith.constant 0 : index
    %28 = vector.load %arg4[%c0_11, %c0_12] : memref<1x256xf32, #tpu.memory_space<vmem>>, vector<1x256xf32>
    %29 = vector.broadcast %28 : vector<1x256xf32> to vector<128x256xf32>
    %30 = arith.addf %27, %29 : vector<128x256xf32>
    %c0_13 = arith.constant 0 : index
    %c0_14 = arith.constant 0 : index
    %31 = vector.load %arg5[%c0_13, %c0_14] : memref<256x256xf32, #tpu.memory_space<vmem>>, vector<256x256xf32>
    %cst_15 = arith.constant dense<0.000000e+00> : vector<128x256xf32>
    %32 = tpu.matmul %25, %31, %cst_15 {dimension_numbers = #tpu.dot_dimension_numbers<[1], [0], [0], [1], [0, 0, 1, 1], [], []>} : vector<128x256xf32>, vector<256x256xf32>, vector<128x256xf32> -> vector<128x256xf32>
    %c0_16 = arith.constant 0 : index
    %c0_17 = arith.constant 0 : index
    %33 = vector.load %arg6[%c0_16, %c0_17] : memref<1x256xf32, #tpu.memory_space<vmem>>, vector<1x256xf32>
    %34 = vector.broadcast %33 : vector<1x256xf32> to vector<128x256xf32>
    %35 = arith.addf %32, %34 : vector<128x256xf32>
    %c0_18 = arith.constant 0 : index
    %c0_19 = arith.constant 0 : index
    %36 = vector.load %arg7[%c0_18, %c0_19] : memref<256x256xf32, #tpu.memory_space<vmem>>, vector<256x256xf32>
    %cst_20 = arith.constant dense<0.000000e+00> : vector<128x256xf32>
    %37 = tpu.matmul %25, %36, %cst_20 {dimension_numbers = #tpu.dot_dimension_numbers<[1], [0], [0], [1], [0, 0, 1, 1], [], []>} : vector<128x256xf32>, vector<256x256xf32>, vector<128x256xf32> -> vector<128x256xf32>
    %c0_21 = arith.constant 0 : index
    %c0_22 = arith.constant 0 : index
    %38 = vector.load %arg8[%c0_21, %c0_22] : memref<1x256xf32, #tpu.memory_space<vmem>>, vector<1x256xf32>
    %39 = vector.broadcast %38 : vector<1x256xf32> to vector<128x256xf32>
    %40 = arith.addf %37, %39 : vector<128x256xf32>
    %c0_23 = arith.constant 0 : index
    %c0_24 = arith.constant 0 : index
    %c0_25 = arith.constant 0 : index
    %41 = vector.load %arg2[%c0_23, %c0_24, %c0_25] : memref<1x1x128xi32, #tpu.memory_space<vmem>>, vector<1x1x128xi32>
    %42 = vector.shape_cast %41 : vector<1x1x128xi32> to vector<1x128xi32>
    %43 = vector.extract_strided_slice %30 {offsets = [0, 0], sizes = [128, 128], strides = [1, 1]} : vector<128x256xf32> to vector<128x128xf32>
    %44 = vector.extract_strided_slice %35 {offsets = [0, 0], sizes = [128, 128], strides = [1, 1]} : vector<128x256xf32> to vector<128x128xf32>
    %45 = vector.extract_strided_slice %40 {offsets = [0, 0], sizes = [128, 128], strides = [1, 1]} : vector<128x256xf32> to vector<128x128xf32>
    %cst_26 = arith.constant dense<0.000000e+00> : vector<128x128xf32>
    %46 = tpu.matmul %43, %44, %cst_26 {dimension_numbers = #tpu.dot_dimension_numbers<[1], [1], [0], [0], [0, 0, 1, 0], [], []>} : vector<128x128xf32>, vector<128x128xf32>, vector<128x128xf32> -> vector<128x128xf32>
    %cst_27 = arith.constant 0.0883883461 : f32
    %47 = vector.broadcast %cst_27 : f32 to vector<128x128xf32>
    %48 = arith.mulf %46, %47 : vector<128x128xf32>
    %c0_i32 = arith.constant 0 : i32
    %49 = vector.broadcast %c0_i32 : i32 to vector<1x128xi32>
    %50 = arith.cmpi eq, %42, %49 : vector<1x128xi32>
    %51 = vector.shape_cast %50 : vector<1x128xi1> to vector<1x128xi1>
    %52 = vector.broadcast %51 : vector<1x128xi1> to vector<128x128xi1>
    %cst_28 = arith.constant -1.000000e+09 : f32
    %53 = vector.broadcast %cst_28 : f32 to vector<128x128xf32>
    %54 = arith.select %52, %53, %48 : vector<128x128xi1>, vector<128x128xf32>
    %cst_29 = arith.constant dense<0xFF800000> : vector<128xf32>
    %55 = vector.multi_reduction <maximumf>, %54, %cst_29 [1] : vector<128x128xf32> to vector<128xf32>
    %56 = vector.shape_cast %55 : vector<128xf32> to vector<128x1xf32>
    %57 = vector.broadcast %56 : vector<128x1xf32> to vector<128x128xf32>
    %58 = arith.subf %54, %57 : vector<128x128xf32>
    %59 = math.exp %58 : vector<128x128xf32>
    %cst_30 = arith.constant dense<0.000000e+00> : vector<128xf32>
    %60 = vector.multi_reduction <add>, %59, %cst_30 [1] : vector<128x128xf32> to vector<128xf32>
    %61 = vector.shape_cast %60 : vector<128xf32> to vector<128x1xf32>
    %62 = vector.broadcast %61 : vector<128x1xf32> to vector<128x128xf32>
    %63 = arith.divf %59, %62 : vector<128x128xf32>
    %cst_31 = arith.constant dense<0.000000e+00> : vector<128x128xf32>
    %64 = tpu.matmul %63, %45, %cst_31 {dimension_numbers = #tpu.dot_dimension_numbers<[1], [0], [0], [1], [0, 0, 1, 1], [], []>} : vector<128x128xf32>, vector<128x128xf32>, vector<128x128xf32> -> vector<128x128xf32>
    %65 = vector.extract_strided_slice %30 {offsets = [0, 128], sizes = [128, 128], strides = [1, 1]} : vector<128x256xf32> to vector<128x128xf32>
    %66 = vector.extract_strided_slice %35 {offsets = [0, 128], sizes = [128, 128], strides = [1, 1]} : vector<128x256xf32> to vector<128x128xf32>
    %67 = vector.extract_strided_slice %40 {offsets = [0, 128], sizes = [128, 128], strides = [1, 1]} : vector<128x256xf32> to vector<128x128xf32>
    %cst_32 = arith.constant dense<0.000000e+00> : vector<128x128xf32>
    %68 = tpu.matmul %65, %66, %cst_32 {dimension_numbers = #tpu.dot_dimension_numbers<[1], [1], [0], [0], [0, 0, 1, 0], [], []>} : vector<128x128xf32>, vector<128x128xf32>, vector<128x128xf32> -> vector<128x128xf32>
    %cst_33 = arith.constant 0.0883883461 : f32
    %69 = vector.broadcast %cst_33 : f32 to vector<128x128xf32>
    %70 = arith.mulf %68, %69 : vector<128x128xf32>
    %c0_i32_34 = arith.constant 0 : i32
    %71 = vector.broadcast %c0_i32_34 : i32 to vector<1x128xi32>
    %72 = arith.cmpi eq, %42, %71 : vector<1x128xi32>
    %73 = vector.shape_cast %72 : vector<1x128xi1> to vector<1x128xi1>
    %74 = vector.broadcast %73 : vector<1x128xi1> to vector<128x128xi1>
    %cst_35 = arith.constant -1.000000e+09 : f32
    %75 = vector.broadcast %cst_35 : f32 to vector<128x128xf32>
    %76 = arith.select %74, %75, %70 : vector<128x128xi1>, vector<128x128xf32>
    %cst_36 = arith.constant dense<0xFF800000> : vector<128xf32>
    %77 = vector.multi_reduction <maximumf>, %76, %cst_36 [1] : vector<128x128xf32> to vector<128xf32>
    %78 = vector.shape_cast %77 : vector<128xf32> to vector<128x1xf32>
    %79 = vector.broadcast %78 : vector<128x1xf32> to vector<128x128xf32>
    %80 = arith.subf %76, %79 : vector<128x128xf32>
    %81 = math.exp %80 : vector<128x128xf32>
    %cst_37 = arith.constant dense<0.000000e+00> : vector<128xf32>
    %82 = vector.multi_reduction <add>, %81, %cst_37 [1] : vector<128x128xf32> to vector<128xf32>
    %83 = vector.shape_cast %82 : vector<128xf32> to vector<128x1xf32>
    %84 = vector.broadcast %83 : vector<128x1xf32> to vector<128x128xf32>
    %85 = arith.divf %81, %84 : vector<128x128xf32>
    %cst_38 = arith.constant dense<0.000000e+00> : vector<128x128xf32>
    %86 = tpu.matmul %85, %67, %cst_38 {dimension_numbers = #tpu.dot_dimension_numbers<[1], [0], [0], [1], [0, 0, 1, 1], [], []>} : vector<128x128xf32>, vector<128x128xf32>, vector<128x128xf32> -> vector<128x128xf32>
    %87 = tpu.concatenate %64, %86 in 1 : vector<128x128xf32>, vector<128x128xf32> -> vector<128x256xf32>
    %c0_39 = arith.constant 0 : index
    %c0_40 = arith.constant 0 : index
    %88 = vector.load %arg9[%c0_39, %c0_40] : memref<256x256xf32, #tpu.memory_space<vmem>>, vector<256x256xf32>
    %cst_41 = arith.constant dense<0.000000e+00> : vector<128x256xf32>
    %89 = tpu.matmul %87, %88, %cst_41 {dimension_numbers = #tpu.dot_dimension_numbers<[1], [0], [0], [1], [0, 0, 1, 1], [], []>} : vector<128x256xf32>, vector<256x256xf32>, vector<128x256xf32> -> vector<128x256xf32>
    %c0_42 = arith.constant 0 : index
    %c0_43 = arith.constant 0 : index
    %90 = vector.load %arg10[%c0_42, %c0_43] : memref<1x256xf32, #tpu.memory_space<vmem>>, vector<1x256xf32>
    %91 = vector.broadcast %90 : vector<1x256xf32> to vector<128x256xf32>
    %92 = arith.addf %89, %91 : vector<128x256xf32>
    %93 = arith.addf %1, %92 : vector<128x256xf32>
    %c0_44 = arith.constant 0 : index
    %c0_45 = arith.constant 0 : index
    %c0_46 = arith.constant 0 : index
    %94 = vector.load %arg13[%c0_44, %c0_45, %c0_46] : memref<1x128x256xf32, #tpu.memory_space<vmem>>, vector<1x128x256xf32>
    %95 = vector.shape_cast %94 : vector<1x128x256xf32> to vector<128x256xf32>
    %96 = vector.shape_cast %93 : vector<128x256xf32> to vector<1x128x256xf32>
    tpu.vector_store %arg13[%c0_44, %c0_45, %c0_46], %96 {strides = array<i32>} : memref<1x128x256xf32, #tpu.memory_space<vmem>>, vector<1x128x256xf32>,
    return
  }
  func.func @transform_0(%arg0: i32) -> (i32, i32, i32) {
    %c0_i32 = arith.constant 0 : i32
    %c0_i32_0 = arith.constant 0 : i32
    %c0_i32_1 = arith.constant 0 : i32
    return %arg0, %c0_i32, %c0_i32_0 : i32, i32, i32
  }
  func.func @transform_1(%arg0: i32) -> (i32, i32, i32) {
    %c0_i32 = arith.constant 0 : i32
    %c0_i32_0 = arith.constant 0 : i32
    %c0_i32_1 = arith.constant 0 : i32
    return %arg0, %c0_i32, %c0_i32_0 : i32, i32, i32
  }
  func.func @transform_2(%arg0: i32) -> (i32, i32) {
    %c0_i32 = arith.constant 0 : i32
    %c0_i32_0 = arith.constant 0 : i32
    %c0_i32_1 = arith.constant 0 : i32
    return %c0_i32, %c0_i32_0 : i32, i32
  }
  func.func @transform_3(%arg0: i32) -> (i32, i32) {
    %c0_i32 = arith.constant 0 : i32
    %c0_i32_0 = arith.constant 0 : i32
    %c0_i32_1 = arith.constant 0 : i32
    return %c0_i32, %c0_i32_0 : i32, i32
  }
  func.func @transform_4(%arg0: i32) -> (i32, i32) {
    %c0_i32 = arith.constant 0 : i32
    %c0_i32_0 = arith.constant 0 : i32
    %c0_i32_1 = arith.constant 0 : i32
    return %c0_i32, %c0_i32_0 : i32, i32
  }
  func.func @transform_5(%arg0: i32) -> (i32, i32) {
    %c0_i32 = arith.constant 0 : i32
    %c0_i32_0 = arith.constant 0 : i32
    %c0_i32_1 = arith.constant 0 : i32
    return %c0_i32, %c0_i32_0 : i32, i32
  }
  func.func @transform_6(%arg0: i32) -> (i32, i32) {
    %c0_i32 = arith.constant 0 : i32
    %c0_i32_0 = arith.constant 0 : i32
    %c0_i32_1 = arith.constant 0 : i32
    return %c0_i32, %c0_i32_0 : i32, i32
  }
  func.func @transform_7(%arg0: i32) -> (i32, i32) {
    %c0_i32 = arith.constant 0 : i32
    %c0_i32_0 = arith.constant 0 : i32
    %c0_i32_1 = arith.constant 0 : i32
    return %c0_i32, %c0_i32_0 : i32, i32
  }
  func.func @transform_8(%arg0: i32) -> (i32, i32) {
    %c0_i32 = arith.constant 0 : i32
    %c0_i32_0 = arith.constant 0 : i32
    %c0_i32_1 = arith.constant 0 : i32
    return %c0_i32, %c0_i32_0 : i32, i32
  }
  func.func @transform_9(%arg0: i32) -> (i32, i32) {
    %c0_i32 = arith.constant 0 : i32
    %c0_i32_0 = arith.constant 0 : i32
    %c0_i32_1 = arith.constant 0 : i32
    return %c0_i32, %c0_i32_0 : i32, i32
  }
  func.func @transform_10(%arg0: i32) -> i32 {
    %c0_i32 = arith.constant 0 : i32
    %c0_i32_0 = arith.constant 0 : i32
    return %c0_i32 : i32
  }
  func.func @transform_11(%arg0: i32) -> i32 {
    %c0_i32 = arith.constant 0 : i32
    %c0_i32_0 = arith.constant 0 : i32
    return %c0_i32 : i32
  }
  func.func @transform_12(%arg0: i32) -> (i32, i32, i32) {
    %c0_i32 = arith.constant 0 : i32
    %c0_i32_0 = arith.constant 0 : i32
    %c0_i32_1 = arith.constant 0 : i32
    return %arg0, %c0_i32, %c0_i32_0 : i32, i32, i32
  }
}

</mosaic_0001>

<llo_original>
// kernel: tpu_custom_call.1
$region0: #{tpu_custom_call.1}
  #allocation0 [shape = 'u32[]', space=smem, size = 0x4, offset = 0x4, fixed_abs, tag = 'smem constant byte address 0x4 - core index']
  #allocation1 [shape = 'u32[144,128]{1,0:T(1,128)}', space=vmem, size = 0x12000, scoped, tag = 'internal scratch']
  #allocation2 [shape = 'f32[1]{0:T(128)S(6)}', space=smem, size = 0x200, scoped, tag = 'scoped memory for tpu_custom_call.1']
  #allocation3 [shape = 'f32[1]{0:T(128)S(6)}', space=smem, size = 0x200, scoped, tag = 'scoped memory for tpu_custom_call.1']
  %s0 = inlined_call_operand.hbm [shape: f32[2,128,256], index: 0, kind: input, shape index: {}]
  %s1 = inlined_call_operand.vmem [shape: s32[2,1,128], index: 1, kind: input, shape index: {}]
  %s2 = inlined_call_operand.hbm [shape: f32[256,256], index: 2, kind: input, shape index: {}]
  %s3 = inlined_call_operand.vmem [shape: f32[1,256], index: 3, kind: input, shape index: {}]
  %s4 = inlined_call_operand.hbm [shape: f32[256,256], index: 4, kind: input, shape index: {}]
  %s5 = inlined_call_operand.vmem [shape: f32[1,256], index: 5, kind: input, shape index: {}]
  %s6 = inlined_call_operand.hbm [shape: f32[256,256], index: 6, kind: input, shape index: {}]
  %s7 = inlined_call_operand.vmem [shape: f32[1,256], index: 7, kind: input, shape index: {}]
  %s8 = inlined_call_operand.hbm [shape: f32[256,256], index: 8, kind: input, shape index: {}]
  %s9 = inlined_call_operand.vmem [shape: f32[1,256], index: 9, kind: input, shape index: {}]
  %s10 = inlined_call_operand.<no memory space> [shape: f32[1], index: 10, kind: input, shape index: {}]
  %s11 = inlined_call_operand.<no memory space> [shape: f32[1], index: 11, kind: input, shape index: {}]
  %s12 = inlined_call_operand.hbm [shape: f32[2,128,256], index: 12, kind: output, shape index: {}]
  %s13 = sld [smem:[#allocation0]]
  $region101: #{tpu_custom_call.1} parent=0
    _
  %s15 = ssub.s32 1, %s13
  %s16 = scalar_select 0, %s15, %s13
  %17 = sst [smem:[#allocation2]] %s10
  %18 = sst [smem:[#allocation3]] %s11
  $region1: #{tpu_custom_call.1} parent=0
    #allocation4 [shape = 'u8[262144]{0}', space=vmem, size = 0x40000, scoped, tag = 'input window, operand 0']
    #allocation5 [shape = 's32[2]{0}', space=sflag, size = 0x8, scoped, tag = 'scoped memory for tpu_custom_call.1']
    #allocation6 [shape = 's32[2]{0}', space=sflag, size = 0x8, scoped, tag = 'scoped memory for tpu_custom_call.1']
    #allocation7 [shape = 'u8[262144]{0}', space=vmem, size = 0x40000, scoped, tag = 'input window, operand 2, single buffered']
    #allocation8 [shape = 's32[1]{0}', space=sflag, size = 0x4, scoped, tag = 'scoped memory for tpu_custom_call.1']
    #allocation9 [shape = 'u8[262144]{0}', space=vmem, size = 0x40000, scoped, tag = 'input window, operand 4, single buffered']
    #allocation10 [shape = 'u8[262144]{0}', space=vmem, size = 0x40000, scoped, tag = 'input window, operand 6, single buffered']
    #allocation11 [shape = 's32[1]{0}', space=sflag, size = 0x4, scoped, tag = 'scoped memory for tpu_custom_call.1']
    #allocation12 [shape = 'u8[262144]{0}', space=vmem, size = 0x40000, scoped, tag = 'input window, operand 8, single buffered']
    #allocation13 [shape = 'u8[262144]{0}', space=vmem, size = 0x40000, scoped, tag = 'output window, operand 0']
    %19 = vsyncpa [#allocation5], 0
    %s20 = scalar_lea.sflag [#allocation5], 1
    %21 = vsyncpa %s20, 0
    %22 = vsyncpa [#allocation8], 0
    %23 = vsyncpa [#allocation11], 0
    %24 = vsyncpa [#allocation6], 0
    %s25 = scalar_lea.sflag [#allocation6], 1
    %26 = vsyncpa %s25, 0
    loop: start=0, step=1, limit=4
    $region2: #{tpu_custom_call.1} parent=1 // loop_pre_header
      _
    $region3: #{tpu_custom_call.1} parent=1 // loop_header
      %s28 = sphi 0, %s32
      %p29 = scmp.ge.s32.totalorder %s28, 4
      %s38 = sphi 0, %s40
      %s41 = sphi 0, %s38
      %s42 = sphi 0, %s41
      %s58 = sphi 0, %s42
      %s64 = sphi 0, %s66
      %s67 = sphi 0, %s64
      %s68 = sphi 0, %s67
      %s84 = sphi 0, %s68
      %s88 = sphi 0, %s88
      %s90 = sphi 0, %s88
      %s91 = sphi 0, %s90
      %s105 = sphi 0, %s91
      %s109 = sphi 0, %s109
      %s111 = sphi 0, %s109
      %s112 = sphi 0, %s111
      %s126 = sphi 0, %s112
      %s130 = sphi 0, %s130
      %s132 = sphi 0, %s130
      %s133 = sphi 0, %s132
      %s147 = sphi 0, %s133
      %s151 = sphi 0, %s151
      %s153 = sphi 0, %s151
      %s154 = sphi 0, %s153
      %s168 = sphi 0, %s154
      %s172 = sphi 0, %s172
      %s174 = sphi 0, %s172
      %s175 = sphi 0, %s174
      %s189 = sphi 0, %s175
      %s193 = sphi 0, %s193
      %s195 = sphi 0, %s193
      %s196 = sphi 0, %s195
      %s210 = sphi 0, %s196
      %s214 = sphi 0, %s214
      %s216 = sphi 0, %s214
      %s217 = sphi 0, %s216
      %s231 = sphi 0, %s217
      %s235 = sphi 0, %s235
      %s237 = sphi 0, %s235
      %s238 = sphi 0, %s237
      %s252 = sphi 0, %s238
      %s256 = sphi 0, %s256
      %s258 = sphi 0, %s256
      %s259 = sphi 0, %s258
      %s273 = sphi 0, %s259
      %s277 = sphi 0, %s277
      %s279 = sphi 0, %s277
      %s280 = sphi 0, %s279
      %s294 = sphi 0, %s280
      %s300 = sphi 0, %s302
      %s303 = sphi 0, %s300
      %s304 = sphi 0, %s303
      %s320 = sphi 0, %s304
    $region4: #{tpu_custom_call.1} parent=1 // loop_header_branch
      %31 = sbr.rel (%p29) target = $region8
    $region5: #{tpu_custom_call.1} parent=1 // loop_body
      %s33 = ssub.s32 %s28, 1
      %s34 = ssub.s32 %s28, 2
      %s35 = sadd.s32 %s28, 1
      %s36 = ssub.s32 %s28, %s35
      %p37 = scmp.eq.s32.totalorder %s36, 0
      %s39 = sadd.s32 %s38, 1
      %s40 = scalar_select %p37, %s38, %s39
      %p43 = pneg %p37
      %p44 = scmp.eq.s32.totalorder %s28, 1
      %p45 = por %p43, %p44
      %p46 = scmp.ne.s32.totalorder %s38, %s41
      %p47 = scmp.eq.s32.totalorder %s28, 0
      %p48 = por %p46, %p47
      %p49 = scmp.ne.s32.totalorder %s38, %s41
      %p50 = scmp.eq.s32.totalorder %s33, 1
      %p51 = por %p49, %p50
      %p52 = scmp.ne.s32.totalorder %s41, %s42
      %p53 = scmp.eq.s32.totalorder %s33, 0
      %p54 = por %p52, %p53
      %p55 = scmp.ne.s32.totalorder %s41, %s42
      %p56 = scmp.eq.s32.totalorder %s34, 1
      %p57 = por %p55, %p56
      %p59 = scmp.ne.s32.totalorder %s42, %s58
      %p60 = scmp.eq.s32.totalorder %s34, 0
      %p61 = por %p59, %p60
      %s62 = ssub.s32 %s28, %s35
      %p63 = scmp.eq.s32.totalorder %s62, 0
      %s65 = sadd.s32 %s64, 1
      %s66 = scalar_select %p63, %s64, %s65
      %p69 = pneg %p63
      %p70 = scmp.eq.s32.totalorder %s28, 1
      %p71 = por %p69, %p70
      %p72 = scmp.ne.s32.totalorder %s64, %s67
      %p73 = scmp.eq.s32.totalorder %s28, 0
      %p74 = por %p72, %p73
      %p75 = scmp.ne.s32.totalorder %s64, %s67
      %p76 = scmp.eq.s32.totalorder %s33, 1
      %p77 = por %p75, %p76
      %p78 = scmp.ne.s32.totalorder %s67, %s68
      %p79 = scmp.eq.s32.totalorder %s33, 0
      %p80 = por %p78, %p79
      %p81 = scmp.ne.s32.totalorder %s67, %s68
      %p82 = scmp.eq.s32.totalorder %s34, 1
      %p83 = por %p81, %p82
      %p85 = scmp.ne.s32.totalorder %s68, %s84
      %p86 = scmp.eq.s32.totalorder %s34, 0
      %p87 = por %p85, %p86
      %s89 = sadd.s32 %s88, 1
      %p92 = scmp.eq.s32.totalorder %s28, 1
      %p93 = scmp.ne.s32.totalorder %s88, %s90
      %p94 = scmp.eq.s32.totalorder %s28, 0
      %p95 = por %p93, %p94
      %p96 = scmp.ne.s32.totalorder %s88, %s90
      %p97 = scmp.eq.s32.totalorder %s33, 1
      %p98 = por %p96, %p97
      %p99 = scmp.ne.s32.totalorder %s90, %s91
      %p100 = scmp.eq.s32.totalorder %s33, 0
      %p101 = por %p99, %p100
      %p102 = scmp.ne.s32.totalorder %s90, %s91
      %p103 = scmp.eq.s32.totalorder %s34, 1
      %p104 = por %p102, %p103
      %p106 = scmp.ne.s32.totalorder %s91, %s105
      %p107 = scmp.eq.s32.totalorder %s34, 0
      %p108 = por %p106, %p107
      %s110 = sadd.s32 %s109, 1
      %p113 = scmp.eq.s32.totalorder %s28, 1
      %p114 = scmp.ne.s32.totalorder %s109, %s111
      %p115 = scmp.eq.s32.totalorder %s28, 0
      %p116 = por %p114, %p115
      %p117 = scmp.ne.s32.totalorder %s109, %s111
      %p118 = scmp.eq.s32.totalorder %s33, 1
      %p119 = por %p117, %p118
      %p120 = scmp.ne.s32.totalorder %s111, %s112
      %p121 = scmp.eq.s32.totalorder %s33, 0
      %p122 = por %p120, %p121
      %p123 = scmp.ne.s32.totalorder %s111, %s112
      %p124 = scmp.eq.s32.totalorder %s34, 1
      %p125 = por %p123, %p124
      %p127 = scmp.ne.s32.totalorder %s112, %s126
      %p128 = scmp.eq.s32.totalorder %s34, 0
      %p129 = por %p127, %p128
      %s131 = sadd.s32 %s130, 1
      %p134 = scmp.eq.s32.totalorder %s28, 1
      %p135 = scmp.ne.s32.totalorder %s130, %s132
      %p136 = scmp.eq.s32.totalorder %s28, 0
      %p137 = por %p135, %p136
      %p138 = scmp.ne.s32.totalorder %s130, %s132
      %p139 = scmp.eq.s32.totalorder %s33, 1
      %p140 = por %p138, %p139
      %p141 = scmp.ne.s32.totalorder %s132, %s133
      %p142 = scmp.eq.s32.totalorder %s33, 0
      %p143 = por %p141, %p142
      %p144 = scmp.ne.s32.totalorder %s132, %s133
      %p145 = scmp.eq.s32.totalorder %s34, 1
      %p146 = por %p144, %p145
      %p148 = scmp.ne.s32.totalorder %s133, %s147
      %p149 = scmp.eq.s32.totalorder %s34, 0
      %p150 = por %p148, %p149
      %s152 = sadd.s32 %s151, 1
      %p155 = scmp.eq.s32.totalorder %s28, 1
      %p156 = scmp.ne.s32.totalorder %s151, %s153
      %p157 = scmp.eq.s32.totalorder %s28, 0
      %p158 = por %p156, %p157
      %p159 = scmp.ne.s32.totalorder %s151, %s153
      %p160 = scmp.eq.s32.totalorder %s33, 1
      %p161 = por %p159, %p160
      %p162 = scmp.ne.s32.totalorder %s153, %s154
      %p163 = scmp.eq.s32.totalorder %s33, 0
      %p164 = por %p162, %p163
      %p165 = scmp.ne.s32.totalorder %s153, %s154
      %p166 = scmp.eq.s32.totalorder %s34, 1
      %p167 = por %p165, %p166
      %p169 = scmp.ne.s32.totalorder %s154, %s168
      %p170 = scmp.eq.s32.totalorder %s34, 0
      %p171 = por %p169, %p170
      %s173 = sadd.s32 %s172, 1
      %p176 = scmp.eq.s32.totalorder %s28, 1
      %p177 = scmp.ne.s32.totalorder %s172, %s174
      %p178 = scmp.eq.s32.totalorder %s28, 0
      %p179 = por %p177, %p178
      %p180 = scmp.ne.s32.totalorder %s172, %s174
      %p181 = scmp.eq.s32.totalorder %s33, 1
      %p182 = por %p180, %p181
      %p183 = scmp.ne.s32.totalorder %s174, %s175
      %p184 = scmp.eq.s32.totalorder %s33, 0
      %p185 = por %p183, %p184
      %p186 = scmp.ne.s32.totalorder %s174, %s175
      %p187 = scmp.eq.s32.totalorder %s34, 1
      %p188 = por %p186, %p187
      %p190 = scmp.ne.s32.totalorder %s175, %s189
      %p191 = scmp.eq.s32.totalorder %s34, 0
      %p192 = por %p190, %p191
      %s194 = sadd.s32 %s193, 1
      %p197 = scmp.eq.s32.totalorder %s28, 1
      %p198 = scmp.ne.s32.totalorder %s193, %s195
      %p199 = scmp.eq.s32.totalorder %s28, 0
      %p200 = por %p198, %p199
      %p201 = scmp.ne.s32.totalorder %s193, %s195
      %p202 = scmp.eq.s32.totalorder %s33, 1
      %p203 = por %p201, %p202
      %p204 = scmp.ne.s32.totalorder %s195, %s196
      %p205 = scmp.eq.s32.totalorder %s33, 0
      %p206 = por %p204, %p205
      %p207 = scmp.ne.s32.totalorder %s195, %s196
      %p208 = scmp.eq.s32.totalorder %s34, 1
      %p209 = por %p207, %p208
      %p211 = scmp.ne.s32.totalorder %s196, %s210
      %p212 = scmp.eq.s32.totalorder %s34, 0
      %p213 = por %p211, %p212
      %s215 = sadd.s32 %s214, 1
      %p218 = scmp.eq.s32.totalorder %s28, 1
      %p219 = scmp.ne.s32.totalorder %s214, %s216
      %p220 = scmp.eq.s32.totalorder %s28, 0
      %p221 = por %p219, %p220
      %p222 = scmp.ne.s32.totalorder %s214, %s216
      %p223 = scmp.eq.s32.totalorder %s33, 1
      %p224 = por %p222, %p223
      %p225 = scmp.ne.s32.totalorder %s216, %s217
      %p226 = scmp.eq.s32.totalorder %s33, 0
      %p227 = por %p225, %p226
      %p228 = scmp.ne.s32.totalorder %s216, %s217
      %p229 = scmp.eq.s32.totalorder %s34, 1
      %p230 = por %p228, %p229
      %p232 = scmp.ne.s32.totalorder %s217, %s231
      %p233 = scmp.eq.s32.totalorder %s34, 0
      %p234 = por %p232, %p233
      %s236 = sadd.s32 %s235, 1
      %p239 = scmp.eq.s32.totalorder %s28, 1
      %p240 = scmp.ne.s32.totalorder %s235, %s237
      %p241 = scmp.eq.s32.totalorder %s28, 0
      %p242 = por %p240, %p241
      %p243 = scmp.ne.s32.totalorder %s235, %s237
      %p244 = scmp.eq.s32.totalorder %s33, 1
      %p245 = por %p243, %p244
      %p246 = scmp.ne.s32.totalorder %s237, %s238
      %p247 = scmp.eq.s32.totalorder %s33, 0
      %p248 = por %p246, %p247
      %p249 = scmp.ne.s32.totalorder %s237, %s238
      %p250 = scmp.eq.s32.totalorder %s34, 1
      %p251 = por %p249, %p250
      %p253 = scmp.ne.s32.totalorder %s238, %s252
      %p254 = scmp.eq.s32.totalorder %s34, 0
      %p255 = por %p253, %p254
      %s257 = sadd.s32 %s256, 1
      %p260 = scmp.eq.s32.totalorder %s28, 1
      %p261 = scmp.ne.s32.totalorder %s256, %s258
      %p262 = scmp.eq.s32.totalorder %s28, 0
      %p263 = por %p261, %p262
      %p264 = scmp.ne.s32.totalorder %s256, %s258
      %p265 = scmp.eq.s32.totalorder %s33, 1
      %p266 = por %p264, %p265
      %p267 = scmp.ne.s32.totalorder %s258, %s259
      %p268 = scmp.eq.s32.totalorder %s33, 0
      %p269 = por %p267, %p268
      %p270 = scmp.ne.s32.totalorder %s258, %s259
      %p271 = scmp.eq.s32.totalorder %s34, 1
      %p272 = por %p270, %p271
      %p274 = scmp.ne.s32.totalorder %s259, %s273
      %p275 = scmp.eq.s32.totalorder %s34, 0
      %p276 = por %p274, %p275
      %s278 = sadd.s32 %s277, 1
      %p281 = scmp.eq.s32.totalorder %s28, 1
      %p282 = scmp.ne.s32.totalorder %s277, %s279
      %p283 = scmp.eq.s32.totalorder %s28, 0
      %p284 = por %p282, %p283
      %p285 = scmp.ne.s32.totalorder %s277, %s279
      %p286 = scmp.eq.s32.totalorder %s33, 1
      %p287 = por %p285, %p286
      %p288 = scmp.ne.s32.totalorder %s279, %s280
      %p289 = scmp.eq.s32.totalorder %s33, 0
      %p290 = por %p288, %p289
      %p291 = scmp.ne.s32.totalorder %s279, %s280
      %p292 = scmp.eq.s32.totalorder %s34, 1
      %p293 = por %p291, %p292
      %p295 = scmp.ne.s32.totalorder %s280, %s294
      %p296 = scmp.eq.s32.totalorder %s34, 0
      %p297 = por %p295, %p296
      %s298 = ssub.s32 %s28, %s35
      %p299 = scmp.eq.s32.totalorder %s298, 0
      %s301 = sadd.s32 %s300, 1
      %s302 = scalar_select %p299, %s300, %s301
      %p305 = pneg %p299
      %p306 = scmp.eq.s32.totalorder %s28, 1
      %p307 = por %p305, %p306
      %p308 = scmp.ne.s32.totalorder %s300, %s303
      %p309 = scmp.eq.s32.totalorder %s28, 0
      %p310 = por %p308, %p309
      %p311 = scmp.ne.s32.totalorder %s300, %s303
      %p312 = scmp.eq.s32.totalorder %s33, 1
      %p313 = por %p311, %p312
      %p314 = scmp.ne.s32.totalorder %s303, %s304
      %p315 = scmp.eq.s32.totalorder %s33, 0
      %p316 = por %p314, %p315
      %p317 = scmp.ne.s32.totalorder %s303, %s304
      %p318 = scmp.eq.s32.totalorder %s34, 1
      %p319 = por %p317, %p318
      %p321 = scmp.ne.s32.totalorder %s304, %s320
      %p322 = scmp.eq.s32.totalorder %s34, 0
      %p323 = por %p321, %p322
      %p324 = scmp.le.s32.totalorder 1, %s28
      %p325 = scmp.lt.s32.totalorder %s28, 3
      %p326 = pnand %p324, %p325
      %p327 = pneg %p326
      // Predicated region
      $region9: #{tpu_custom_call.1} parent=5 // pred_check
        _
      $region10: #{tpu_custom_call.1} parent=5 // pred_check_branch
        %329 = sbr.rel (%p326) target = $region12
      $region11: #{tpu_custom_call.1} parent=5 // pred_region
        %s330 = ssub.s32 %s28, 1
        // Predicated region
        $region13: #{tpu_custom_call.1} parent=11 // pred_check
          %p331 = pneg %p101
        $region14: #{tpu_custom_call.1} parent=11 // pred_check_branch
          %333 = sbr.rel (%p331) target = $region16
        $region15: #{tpu_custom_call.1} parent=11 // pred_region
          %s335 = ssub.s32 8192, 8192
          %336 = vsyncadd [#allocation8], %s335
          %s337 = sshll.u32 [#allocation7], 4
          %s338 = int_to_ptr.vmem [resolvable:$true] %s337
          %343 = dma.hbm_to_vmem [thread:$0]  %s2, 8192, %s338, [#allocation8], 256, 256, 16
        $region16: #{tpu_custom_call.1} parent=11 // pred_fallthru
          _
        // Predicated region
        $region17: #{tpu_custom_call.1} parent=11 // pred_check
          %p344 = pneg %p122
        $region18: #{tpu_custom_call.1} parent=11 // pred_check_branch
          %346 = sbr.rel (%p344) target = $region20
        $region19: #{tpu_custom_call.1} parent=11 // pred_region
          _
        $region20: #{tpu_custom_call.1} parent=11 // pred_fallthru
          _
        // Predicated region
        $region21: #{tpu_custom_call.1} parent=11 // pred_check
          %p347 = pneg %p143
        $region22: #{tpu_custom_call.1} parent=11 // pred_check_branch
          %349 = sbr.rel (%p347) target = $region24
        $region23: #{tpu_custom_call.1} parent=11 // pred_region
          %s351 = ssub.s32 8192, 8192
          %352 = vsyncadd [#allocation8], %s351
          %s353 = sshll.u32 [#allocation9], 4
          %s354 = int_to_ptr.vmem [resolvable:$true] %s353
          %359 = dma.hbm_to_vmem [thread:$0]  %s4, 8192, %s354, [#allocation8], 256, 256, 16
        $region24: #{tpu_custom_call.1} parent=11 // pred_fallthru
          _
        // Predicated region
        $region25: #{tpu_custom_call.1} parent=11 // pred_check
          %p360 = pneg %p164
        $region26: #{tpu_custom_call.1} parent=11 // pred_check_branch
          %362 = sbr.rel (%p360) target = $region28
        $region27: #{tpu_custom_call.1} parent=11 // pred_region
          _
        $region28: #{tpu_custom_call.1} parent=11 // pred_fallthru
          _
        // Predicated region
        $region29: #{tpu_custom_call.1} parent=11 // pred_check
          %p363 = pneg %p185
        $region30: #{tpu_custom_call.1} parent=11 // pred_check_branch
          %365 = sbr.rel (%p363) target = $region32
        $region31: #{tpu_custom_call.1} parent=11 // pred_region
          %s367 = ssub.s32 8192, 8192
          %368 = vsyncadd [#allocation11], %s367
          %s369 = sshll.u32 [#allocation10], 4
          %s370 = int_to_ptr.vmem [resolvable:$true] %s369
          %375 = dma.hbm_to_vmem [thread:$0]  %s6, 8192, %s370, [#allocation11], 256, 256, 16
        $region32: #{tpu_custom_call.1} parent=11 // pred_fallthru
          _
        // Predicated region
        $region33: #{tpu_custom_call.1} parent=11 // pred_check
          %p376 = pneg %p206
        $region34: #{tpu_custom_call.1} parent=11 // pred_check_branch
          %378 = sbr.rel (%p376) target = $region36
        $region35: #{tpu_custom_call.1} parent=11 // pred_region
          _
        $region36: #{tpu_custom_call.1} parent=11 // pred_fallthru
          _
        // Predicated region
        $region37: #{tpu_custom_call.1} parent=11 // pred_check
          %p379 = pneg %p227
        $region38: #{tpu_custom_call.1} parent=11 // pred_check_branch
          %381 = sbr.rel (%p379) target = $region40
        $region39: #{tpu_custom_call.1} parent=11 // pred_region
          %s383 = ssub.s32 8192, 8192
          %384 = vsyncadd [#allocation11], %s383
          %s385 = sshll.u32 [#allocation12], 4
          %s386 = int_to_ptr.vmem [resolvable:$true] %s385
          %391 = dma.hbm_to_vmem [thread:$0]  %s8, 8192, %s386, [#allocation11], 256, 256, 16
        $region40: #{tpu_custom_call.1} parent=11 // pred_fallthru
          _
        // Predicated region
        $region41: #{tpu_custom_call.1} parent=11 // pred_check
          %p392 = pneg %p248
        $region42: #{tpu_custom_call.1} parent=11 // pred_check_branch
          %394 = sbr.rel (%p392) target = $region44
        $region43: #{tpu_custom_call.1} parent=11 // pred_region
          _
        $region44: #{tpu_custom_call.1} parent=11 // pred_fallthru
          _
        // Predicated region
        $region45: #{tpu_custom_call.1} parent=11 // pred_check
          %p395 = pneg %p269
        $region46: #{tpu_custom_call.1} parent=11 // pred_check_branch
          %397 = sbr.rel (%p395) target = $region48
        $region47: #{tpu_custom_call.1} parent=11 // pred_region
          _
        $region48: #{tpu_custom_call.1} parent=11 // pred_fallthru
          _
        // Predicated region
        $region49: #{tpu_custom_call.1} parent=11 // pred_check
          %p398 = pneg %p290
        $region50: #{tpu_custom_call.1} parent=11 // pred_check_branch
          %400 = sbr.rel (%p398) target = $region52
        $region51: #{tpu_custom_call.1} parent=11 // pred_region
          _
        $region52: #{tpu_custom_call.1} parent=11 // pred_fallthru
          _
      $region12: #{tpu_custom_call.1} parent=5 // pred_fallthru
        _
      %p401 = scmp.lt.s32.totalorder %s28, 2
      // Predicated region
      $region53: #{tpu_custom_call.1} parent=5 // pred_check
        %p402 = pneg %p401
      $region54: #{tpu_custom_call.1} parent=5 // pred_check_branch
        %404 = sbr.rel (%p402) target = $region56
      $region55: #{tpu_custom_call.1} parent=5 // pred_region
        // Predicated region
        $region57: #{tpu_custom_call.1} parent=55 // pred_check
          %p405 = pneg %p48
        $region58: #{tpu_custom_call.1} parent=55 // pred_check_branch
          %407 = sbr.rel (%p405) target = $region60
        $region59: #{tpu_custom_call.1} parent=55 // pred_region
          %s408 = sand.u32 %s38, 1
          %s409 = scalar_lea.sflag [#allocation5], %s408
          %s410 = sand.u32 %s38, 1
          %s411 = smul.addr %s410, 256
          %s412 = scalar_lea.vmem [#allocation4], %s411
          %s414 = ssub.s32 4096, 4096
          %415 = vsyncadd %s409, %s414
          %s416 = smul.addr %s28, 32
          %s417 = smul.addr %s416, 128
          %s418 = scalar_lea.hbm %s0, %s417
          %s419 = sshll.u32 %s412, 4
          %s420 = int_to_ptr.vmem [resolvable:$true] %s419
          %425 = dma.hbm_to_vmem [thread:$0]  %s418, 4096, %s420, %s409, 256, 256, 16
        $region60: #{tpu_custom_call.1} parent=55 // pred_fallthru
          _
        // Predicated region
        $region61: #{tpu_custom_call.1} parent=55 // pred_check
          %p426 = pneg %p74
        $region62: #{tpu_custom_call.1} parent=55 // pred_check_branch
          %428 = sbr.rel (%p426) target = $region64
        $region63: #{tpu_custom_call.1} parent=55 // pred_region
          %p429 = scmp.lt.s32.totalorder %s28, 1
          %s430 = scalar_select %p429, %s28, 1
          %s431 = scalar_lea.vmem %s1, %s430
        $region64: #{tpu_custom_call.1} parent=55 // pred_fallthru
          _
      $region56: #{tpu_custom_call.1} parent=5 // pred_fallthru
        _
      %p432 = scmp.le.s32.totalorder 1, %s28
      %p433 = scmp.lt.s32.totalorder %s28, 3
      %p434 = pnand %p432, %p433
      %p435 = pneg %p434
      // Predicated region
      $region65: #{tpu_custom_call.1} parent=5 // pred_check
        _
      $region66: #{tpu_custom_call.1} parent=5 // pred_check_branch
        %437 = sbr.rel (%p434) target = $region68
      $region67: #{tpu_custom_call.1} parent=5 // pred_region
        %s438 = ssub.s32 %s28, 1
        %s439 = sand.u32 %s41, 1
        %s440 = scalar_lea.sflag [#allocation5], %s439
        %s441 = sand.u32 %s41, 1
        %s442 = smul.addr %s441, 256
        %s443 = scalar_lea.vmem [#allocation4], %s442
        // Predicated region
        $region69: #{tpu_custom_call.1} parent=67 // pred_check
          %p444 = pneg %p54
        $region70: #{tpu_custom_call.1} parent=67 // pred_check_branch
          %446 = sbr.rel (%p444) target = $region72
        $region71: #{tpu_custom_call.1} parent=67 // pred_region
          %447 = dma.done %s440, 4096
        $region72: #{tpu_custom_call.1} parent=67 // pred_fallthru
          _
        // Predicated region
        $region73: #{tpu_custom_call.1} parent=67 // pred_check
          %p448 = pneg %p101
        $region74: #{tpu_custom_call.1} parent=67 // pred_check_branch
          %450 = sbr.rel (%p448) target = $region76
        $region75: #{tpu_custom_call.1} parent=67 // pred_region
          %451 = dma.done [#allocation8], 8192
        $region76: #{tpu_custom_call.1} parent=67 // pred_fallthru
          _
        // Predicated region
        $region77: #{tpu_custom_call.1} parent=67 // pred_check
          %p452 = pneg %p143
        $region78: #{tpu_custom_call.1} parent=67 // pred_check_branch
          %454 = sbr.rel (%p452) target = $region80
        $region79: #{tpu_custom_call.1} parent=67 // pred_region
          %455 = dma.done [#allocation8], 8192
        $region80: #{tpu_custom_call.1} parent=67 // pred_fallthru
          _
        // Predicated region
        $region81: #{tpu_custom_call.1} parent=67 // pred_check
          %p456 = pneg %p185
        $region82: #{tpu_custom_call.1} parent=67 // pred_check_branch
          %458 = sbr.rel (%p456) target = $region84
        $region83: #{tpu_custom_call.1} parent=67 // pred_region
          %459 = dma.done [#allocation11], 8192
        $region84: #{tpu_custom_call.1} parent=67 // pred_fallthru
          _
        // Predicated region
        $region85: #{tpu_custom_call.1} parent=67 // pred_check
          %p460 = pneg %p227
        $region86: #{tpu_custom_call.1} parent=67 // pred_check_branch
          %462 = sbr.rel (%p460) target = $region88
        $region87: #{tpu_custom_call.1} parent=67 // pred_region
          %463 = dma.done [#allocation11], 8192
        $region88: #{tpu_custom_call.1} parent=67 // pred_fallthru
          _
        %s464 = sand.u32 %s41, 1
        %s465 = scalar_lea.sflag [#allocation5], %s464
        %s466 = sand.u32 %s41, 1
        %s467 = smul.addr %s466, 256
        %s468 = scalar_lea.vmem [#allocation4], %s467
        %p469 = pneg %p54
        %p470 = pneg %p51
        %p471 = scmp.lt.s32.totalorder %s33, 1
        %s472 = scalar_select %p471, %s33, 1
        %s473 = scalar_lea.vmem %s1, %s472
        %p474 = pneg %p80
        %p475 = pneg %p77
        %p476 = pneg %p101
        %p477 = pneg %p98
        %p478 = pneg %p122
        %p479 = pneg %p119
        %p480 = pneg %p143
        %p481 = pneg %p140
        %p482 = pneg %p164
        %p483 = pneg %p161
        %p484 = pneg %p185
        %p485 = pneg %p182
        %p486 = pneg %p206
        %p487 = pneg %p203
        %p488 = pneg %p227
        %p489 = pneg %p224
        %p490 = pneg %p248
        %p491 = pneg %p245
        %p492 = pneg %p269
        %p493 = pneg %p266
        %p494 = pneg %p290
        %p495 = pneg %p287
        %p496 = pneg %p316
        %p497 = pneg %p313
        %s498 = sand.u32 %s303, 1
        %s499 = scalar_lea.sflag [#allocation6], %s498
        %s500 = sand.u32 %s303, 1
        %s501 = smul.addr %s500, 256
        %s502 = scalar_lea.vmem [#allocation13], %s501
        %p503 = scmp.lt.s32.totalorder %s33, 1
        %s504 = scalar_select %p503, %s33, 1
        %s505 = scalar_lea.vmem %s1, %s504
        %v506 = vld [vmem:[%s443] sm:$0xff]
        %v507 = vld [vmem:[%s443 + $0x8] sm:$0xff]
        %v508 = vld [vmem:[%s443 + $0x10] sm:$0xff]
        %v509 = vld [vmem:[%s443 + $0x18] sm:$0xff]
        %v510 = vld [vmem:[%s443 + $0x20] sm:$0xff]
        %v511 = vld [vmem:[%s443 + $0x28] sm:$0xff]
        %v512 = vld [vmem:[%s443 + $0x30] sm:$0xff]
        %v513 = vld [vmem:[%s443 + $0x38] sm:$0xff]
        %v514 = vld [vmem:[%s443 + $0x40] sm:$0xff]
        %v515 = vld [vmem:[%s443 + $0x48] sm:$0xff]
        %v516 = vld [vmem:[%s443 + $0x50] sm:$0xff]
        %v517 = vld [vmem:[%s443 + $0x58] sm:$0xff]
        %v518 = vld [vmem:[%s443 + $0x60] sm:$0xff]
        %v519 = vld [vmem:[%s443 + $0x68] sm:$0xff]
        %v520 = vld [vmem:[%s443 + $0x70] sm:$0xff]
        %v521 = vld [vmem:[%s443 + $0x78] sm:$0xff]
        %v522 = vld [vmem:[%s443 + $0x80] sm:$0xff]
        %v523 = vld [vmem:[%s443 + $0x88] sm:$0xff]
        %v524 = vld [vmem:[%s443 + $0x90] sm:$0xff]
        %v525 = vld [vmem:[%s443 + $0x98] sm:$0xff]
        %v526 = vld [vmem:[%s443 + $0xa0] sm:$0xff]
        %v527 = vld [vmem:[%s443 + $0xa8] sm:$0xff]
        %v528 = vld [vmem:[%s443 + $0xb0] sm:$0xff]
        %v529 = vld [vmem:[%s443 + $0xb8] sm:$0xff]
        %v530 = vld [vmem:[%s443 + $0xc0] sm:$0xff]
        %v531 = vld [vmem:[%s443 + $0xc8] sm:$0xff]
        %v532 = vld [vmem:[%s443 + $0xd0] sm:$0xff]
        %v533 = vld [vmem:[%s443 + $0xd8] sm:$0xff]
        %v534 = vld [vmem:[%s443 + $0xe0] sm:$0xff]
        %v535 = vld [vmem:[%s443 + $0xe8] sm:$0xff]
        %v536 = vld [vmem:[%s443 + $0xf0] sm:$0xff]
        %v537 = vld [vmem:[%s443 + $0xf8] sm:$0xff]
        %s538 = sld [smem:[#allocation2]]
        %s539 = sld [smem:[#allocation3]]
        %v540 = vadd.f32 %v506, %v507
        %541 = vadd.xlane.f32.xlu0 %v540
        %v542 = vpop.xlane.xlu0 %541
        %v543 = vadd.f32 %v508, %v509
        %544 = vadd.xlane.f32.xlu0 %v543
        %v545 = vpop.xlane.xlu0 %544
        %v546 = vadd.f32 %v510, %v511
        %547 = vadd.xlane.f32.xlu0 %v546
        %v548 = vpop.xlane.xlu0 %547
        %v549 = vadd.f32 %v512, %v513
        %550 = vadd.xlane.f32.xlu0 %v549
        %v551 = vpop.xlane.xlu0 %550
        %v552 = vadd.f32 %v514, %v515
        %553 = vadd.xlane.f32.xlu0 %v552
        %v554 = vpop.xlane.xlu0 %553
        %v555 = vadd.f32 %v516, %v517
        %556 = vadd.xlane.f32.xlu0 %v555
        %v557 = vpop.xlane.xlu0 %556
        %v558 = vadd.f32 %v518, %v519
        %559 = vadd.xlane.f32.xlu0 %v558
        %v560 = vpop.xlane.xlu0 %559
        %v561 = vadd.f32 %v520, %v521
        %562 = vadd.xlane.f32.xlu0 %v561
        %v563 = vpop.xlane.xlu0 %562
        %v564 = vadd.f32 %v522, %v523
        %565 = vadd.xlane.f32.xlu0 %v564
        %v566 = vpop.xlane.xlu0 %565
        %v567 = vadd.f32 %v524, %v525
        %568 = vadd.xlane.f32.xlu0 %v567
        %v569 = vpop.xlane.xlu0 %568
        %v570 = vadd.f32 %v526, %v527
        %571 = vadd.xlane.f32.xlu0 %v570
        %v572 = vpop.xlane.xlu0 %571
        %v573 = vadd.f32 %v528, %v529
        %574 = vadd.xlane.f32.xlu0 %v573
        %v575 = vpop.xlane.xlu0 %574
        %v576 = vadd.f32 %v530, %v531
        %577 = vadd.xlane.f32.xlu0 %v576
        %v578 = vpop.xlane.xlu0 %577
        %v579 = vadd.f32 %v532, %v533
        %580 = vadd.xlane.f32.xlu0 %v579
        %v581 = vpop.xlane.xlu0 %580
        %v582 = vadd.f32 %v534, %v535
        %583 = vadd.xlane.f32.xlu0 %v582
        %v584 = vpop.xlane.xlu0 %583
        %v585 = vadd.f32 %v536, %v537
        %586 = vadd.xlane.f32.xlu0 %v585
        %v587 = vpop.xlane.xlu0 %586
        %v588 = vrcp.pop 256.0
        %v589 = vmul.f32 %v542, %v588
        %v590 = vmul.f32 %v545, %v588
        %v591 = vmul.f32 %v548, %v588
        %v592 = vmul.f32 %v551, %v588
        %v593 = vmul.f32 %v554, %v588
        %v594 = vmul.f32 %v557, %v588
        %v595 = vmul.f32 %v560, %v588
        %v596 = vmul.f32 %v563, %v588
        %v597 = vmul.f32 %v566, %v588
        %v598 = vmul.f32 %v569, %v588
        %v599 = vmul.f32 %v572, %v588
        %v600 = vmul.f32 %v575, %v588
        %v601 = vmul.f32 %v578, %v588
        %v602 = vmul.f32 %v581, %v588
        %v603 = vmul.f32 %v584, %v588
        %v604 = vmul.f32 %v587, %v588
        %v605 = vsub.f32 %v506, %v589
        %v606 = vsub.f32 %v507, %v589
        %v607 = vsub.f32 %v508, %v590
        %v608 = vsub.f32 %v509, %v590
        %v609 = vsub.f32 %v510, %v591
        %v610 = vsub.f32 %v511, %v591
        %v611 = vsub.f32 %v512, %v592
        %v612 = vsub.f32 %v513, %v592
        %v613 = vsub.f32 %v514, %v593
        %v614 = vsub.f32 %v515, %v593
        %v615 = vsub.f32 %v516, %v594
        %v616 = vsub.f32 %v517, %v594
        %v617 = vsub.f32 %v518, %v595
        %v618 = vsub.f32 %v519, %v595
        %v619 = vsub.f32 %v520, %v596
        %v620 = vsub.f32 %v521, %v596
        %v621 = vsub.f32 %v522, %v597
        %v622 = vsub.f32 %v523, %v597
        %v623 = vsub.f32 %v524, %v598
        %v624 = vsub.f32 %v525, %v598
        %v625 = vsub.f32 %v526, %v599
        %v626 = vsub.f32 %v527, %v599
        %v627 = vsub.f32 %v528, %v600
        %v628 = vsub.f32 %v529, %v600
        %v629 = vsub.f32 %v530, %v601
        %v630 = vsub.f32 %v531, %v601
        %v631 = vsub.f32 %v532, %v602
        %v632 = vsub.f32 %v533, %v602
        %v633 = vsub.f32 %v534, %v603
        %v634 = vsub.f32 %v535, %v603
        %v635 = vsub.f32 %v536, %v604
        %v636 = vsub.f32 %v537, %v604
        %v637 = vmul.f32 %v605, %v605
        %v638 = vmul.f32 %v606, %v606
        %v639 = vmul.f32 %v607, %v607
        %v640 = vmul.f32 %v608, %v608
        %v641 = vmul.f32 %v609, %v609
        %v642 = vmul.f32 %v610, %v610
        %v643 = vmul.f32 %v611, %v611
        %v644 = vmul.f32 %v612, %v612
        %v645 = vmul.f32 %v613, %v613
        %v646 = vmul.f32 %v614, %v614
        %v647 = vmul.f32 %v615, %v615
        %v648 = vmul.f32 %v616, %v616
        %v649 = vmul.f32 %v617, %v617
        %v650 = vmul.f32 %v618, %v618
        %v651 = vmul.f32 %v619, %v619
        %v652 = vmul.f32 %v620, %v620
        %v653 = vmul.f32 %v621, %v621
        %v654 = vmul.f32 %v622, %v622
        %v655 = vmul.f32 %v623, %v623
        %v656 = vmul.f32 %v624, %v624
        %v657 = vmul.f32 %v625, %v625
        %v658 = vmul.f32 %v626, %v626
        %v659 = vmul.f32 %v627, %v627
        %v660 = vmul.f32 %v628, %v628
        %v661 = vmul.f32 %v629, %v629
        %v662 = vmul.f32 %v630, %v630
        %v663 = vmul.f32 %v631, %v631
        %v664 = vmul.f32 %v632, %v632
        %v665 = vmul.f32 %v633, %v633
        %v666 = vmul.f32 %v634, %v634
        %v667 = vmul.f32 %v635, %v635
        %v668 = vmul.f32 %v636, %v636
        %v669 = vadd.f32 %v637, %v638
        %670 = vadd.xlane.f32.xlu0 %v669
        %v671 = vpop.xlane.xlu0 %670
        %v672 = vadd.f32 %v639, %v640
        %673 = vadd.xlane.f32.xlu0 %v672
        %v674 = vpop.xlane.xlu0 %673
        %v675 = vadd.f32 %v641, %v642
        %676 = vadd.xlane.f32.xlu0 %v675
        %v677 = vpop.xlane.xlu0 %676
        %v678 = vadd.f32 %v643, %v644
        %679 = vadd.xlane.f32.xlu0 %v678
        %v680 = vpop.xlane.xlu0 %679
        %v681 = vadd.f32 %v645, %v646
        %682 = vadd.xlane.f32.xlu0 %v681
        %v683 = vpop.xlane.xlu0 %682
        %v684 = vadd.f32 %v647, %v648
        %685 = vadd.xlane.f32.xlu0 %v684
        %v686 = vpop.xlane.xlu0 %685
        %v687 = vadd.f32 %v649, %v650
        %688 = vadd.xlane.f32.xlu0 %v687
        %v689 = vpop.xlane.xlu0 %688
        %v690 = vadd.f32 %v651, %v652
        %691 = vadd.xlane.f32.xlu0 %v690
        %v692 = vpop.xlane.xlu0 %691
        %v693 = vadd.f32 %v653, %v654
        %694 = vadd.xlane.f32.xlu0 %v693
        %v695 = vpop.xlane.xlu0 %694
        %v696 = vadd.f32 %v655, %v656
        %697 = vadd.xlane.f32.xlu0 %v696
        %v698 = vpop.xlane.xlu0 %697
        %v699 = vadd.f32 %v657, %v658
        %700 = vadd.xlane.f32.xlu0 %v699
        %v701 = vpop.xlane.xlu0 %700
        %v702 = vadd.f32 %v659, %v660
        %703 = vadd.xlane.f32.xlu0 %v702
        %v704 = vpop.xlane.xlu0 %703
        %v705 = vadd.f32 %v661, %v662
        %706 = vadd.xlane.f32.xlu0 %v705
        %v707 = vpop.xlane.xlu0 %706
        %v708 = vadd.f32 %v663, %v664
        %709 = vadd.xlane.f32.xlu0 %v708
        %v710 = vpop.xlane.xlu0 %709
        %v711 = vadd.f32 %v665, %v666
        %712 = vadd.xlane.f32.xlu0 %v711
        %v713 = vpop.xlane.xlu0 %712
        %v714 = vadd.f32 %v667, %v668
        %715 = vadd.xlane.f32.xlu0 %v714
        %v716 = vpop.xlane.xlu0 %715
        %v717 = vrcp.pop 255.0
        %v718 = vmul.f32 %v671, %v717
        %v719 = vmul.f32 %v674, %v717
        %v720 = vmul.f32 %v677, %v717
        %v721 = vmul.f32 %v680, %v717
        %v722 = vmul.f32 %v683, %v717
        %v723 = vmul.f32 %v686, %v717
        %v724 = vmul.f32 %v689, %v717
        %v725 = vmul.f32 %v692, %v717
        %v726 = vmul.f32 %v695, %v717
        %v727 = vmul.f32 %v698, %v717
        %v728 = vmul.f32 %v701, %v717
        %v729 = vmul.f32 %v704, %v717
        %v730 = vmul.f32 %v707, %v717
        %v731 = vmul.f32 %v710, %v717
        %v732 = vmul.f32 %v713, %v717
        %v733 = vmul.f32 %v716, %v717
        %v734 = vstv %s538
        %v735 = vmul.f32 %v734, %v605
        %v736 = vmul.f32 %v734, %v606
        %v737 = vmul.f32 %v734, %v607
        %v738 = vmul.f32 %v734, %v608
        %v739 = vmul.f32 %v734, %v609
        %v740 = vmul.f32 %v734, %v610
        %v741 = vmul.f32 %v734, %v611
        %v742 = vmul.f32 %v734, %v612
        %v743 = vmul.f32 %v734, %v613
        %v744 = vmul.f32 %v734, %v614
        %v745 = vmul.f32 %v734, %v615
        %v746 = vmul.f32 %v734, %v616
        %v747 = vmul.f32 %v734, %v617
        %v748 = vmul.f32 %v734, %v618
        %v749 = vmul.f32 %v734, %v619
        %v750 = vmul.f32 %v734, %v620
        %v751 = vmul.f32 %v734, %v621
        %v752 = vmul.f32 %v734, %v622
        %v753 = vmul.f32 %v734, %v623
        %v754 = vmul.f32 %v734, %v624
        %v755 = vmul.f32 %v734, %v625
        %v756 = vmul.f32 %v734, %v626
        %v757 = vmul.f32 %v734, %v627
        %v758 = vmul.f32 %v734, %v628
        %v759 = vmul.f32 %v734, %v629
        %v760 = vmul.f32 %v734, %v630
        %v761 = vmul.f32 %v734, %v631
        %v762 = vmul.f32 %v734, %v632
        %v763 = vmul.f32 %v734, %v633
        %v764 = vmul.f32 %v734, %v634
        %v765 = vmul.f32 %v734, %v635
        %v766 = vmul.f32 %v734, %v636
        %v767 = vrsqrt.pop %v718
        %v768 = vmul.f32 %v718, %v767
        %vm769 = vcmp.eq.f32.partialorder %v718, inf
        %v770 = vsel %vm769, %v718, %v768
        %vm771 = vcmp.eq.f32.partialorder %v718, 0.0
        %v772 = vand.u32 %v718, 2147483648
        %v773 = vsel %vm771, %v772, %v770
        %v774 = vrsqrt.pop %v719
        %v775 = vmul.f32 %v719, %v774
        %vm776 = vcmp.eq.f32.partialorder %v719, inf
        %v777 = vsel %vm776, %v719, %v775
        %vm778 = vcmp.eq.f32.partialorder %v719, 0.0
        %v779 = vand.u32 %v719, 2147483648
        %v780 = vsel %vm778, %v779, %v777
        %v781 = vrsqrt.pop %v720
        %v782 = vmul.f32 %v720, %v781
        %vm783 = vcmp.eq.f32.partialorder %v720, inf
        %v784 = vsel %vm783, %v720, %v782
        %vm785 = vcmp.eq.f32.partialorder %v720, 0.0
        %v786 = vand.u32 %v720, 2147483648
        %v787 = vsel %vm785, %v786, %v784
        %v788 = vrsqrt.pop %v721
        %v789 = vmul.f32 %v721, %v788
        %vm790 = vcmp.eq.f32.partialorder %v721, inf
        %v791 = vsel %vm790, %v721, %v789
        %vm792 = vcmp.eq.f32.partialorder %v721, 0.0
        %v793 = vand.u32 %v721, 2147483648
        %v794 = vsel %vm792, %v793, %v791
        %v795 = vrsqrt.pop %v722
        %v796 = vmul.f32 %v722, %v795
        %vm797 = vcmp.eq.f32.partialorder %v722, inf
        %v798 = vsel %vm797, %v722, %v796
        %vm799 = vcmp.eq.f32.partialorder %v722, 0.0
        %v800 = vand.u32 %v722, 2147483648
        %v801 = vsel %vm799, %v800, %v798
        %v802 = vrsqrt.pop %v723
        %v803 = vmul.f32 %v723, %v802
        %vm804 = vcmp.eq.f32.partialorder %v723, inf
        %v805 = vsel %vm804, %v723, %v803
        %vm806 = vcmp.eq.f32.partialorder %v723, 0.0
        %v807 = vand.u32 %v723, 2147483648
        %v808 = vsel %vm806, %v807, %v805
        %v809 = vrsqrt.pop %v724
        %v810 = vmul.f32 %v724, %v809
        %vm811 = vcmp.eq.f32.partialorder %v724, inf
        %v812 = vsel %vm811, %v724, %v810
        %vm813 = vcmp.eq.f32.partialorder %v724, 0.0
        %v814 = vand.u32 %v724, 2147483648
        %v815 = vsel %vm813, %v814, %v812
        %v816 = vrsqrt.pop %v725
        %v817 = vmul.f32 %v725, %v816
        %vm818 = vcmp.eq.f32.partialorder %v725, inf
        %v819 = vsel %vm818, %v725, %v817
        %vm820 = vcmp.eq.f32.partialorder %v725, 0.0
        %v821 = vand.u32 %v725, 2147483648
        %v822 = vsel %vm820, %v821, %v819
        %v823 = vrsqrt.pop %v726
        %v824 = vmul.f32 %v726, %v823
        %vm825 = vcmp.eq.f32.partialorder %v726, inf
        %v826 = vsel %vm825, %v726, %v824
        %vm827 = vcmp.eq.f32.partialorder %v726, 0.0
        %v828 = vand.u32 %v726, 2147483648
        %v829 = vsel %vm827, %v828, %v826
        %v830 = vrsqrt.pop %v727
        %v831 = vmul.f32 %v727, %v830
        %vm832 = vcmp.eq.f32.partialorder %v727, inf
        %v833 = vsel %vm832, %v727, %v831
        %vm834 = vcmp.eq.f32.partialorder %v727, 0.0
        %v835 = vand.u32 %v727, 2147483648
        %v836 = vsel %vm834, %v835, %v833
        %v837 = vrsqrt.pop %v728
        %v838 = vmul.f32 %v728, %v837
        %vm839 = vcmp.eq.f32.partialorder %v728, inf
        %v840 = vsel %vm839, %v728, %v838
        %vm841 = vcmp.eq.f32.partialorder %v728, 0.0
        %v842 = vand.u32 %v728, 2147483648
        %v843 = vsel %vm841, %v842, %v840
        %v844 = vrsqrt.pop %v729
        %v845 = vmul.f32 %v729, %v844
        %vm846 = vcmp.eq.f32.partialorder %v729, inf
        %v847 = vsel %vm846, %v729, %v845
        %vm848 = vcmp.eq.f32.partialorder %v729, 0.0
        %v849 = vand.u32 %v729, 2147483648
        %v850 = vsel %vm848, %v849, %v847
        %v851 = vrsqrt.pop %v730
        %v852 = vmul.f32 %v730, %v851
        %vm853 = vcmp.eq.f32.partialorder %v730, inf
        %v854 = vsel %vm853, %v730, %v852
        %vm855 = vcmp.eq.f32.partialorder %v730, 0.0
        %v856 = vand.u32 %v730, 2147483648
        %v857 = vsel %vm855, %v856, %v854
        %v858 = vrsqrt.pop %v731
        %v859 = vmul.f32 %v731, %v858
        %vm860 = vcmp.eq.f32.partialorder %v731, inf
        %v861 = vsel %vm860, %v731, %v859
        %vm862 = vcmp.eq.f32.partialorder %v731, 0.0
        %v863 = vand.u32 %v731, 2147483648
        %v864 = vsel %vm862, %v863, %v861
        %v865 = vrsqrt.pop %v732
        %v866 = vmul.f32 %v732, %v865
        %vm867 = vcmp.eq.f32.partialorder %v732, inf
        %v868 = vsel %vm867, %v732, %v866
        %vm869 = vcmp.eq.f32.partialorder %v732, 0.0
        %v870 = vand.u32 %v732, 2147483648
        %v871 = vsel %vm869, %v870, %v868
        %v872 = vrsqrt.pop %v733
        %v873 = vmul.f32 %v733, %v872
        %vm874 = vcmp.eq.f32.partialorder %v733, inf
        %v875 = vsel %vm874, %v733, %v873
        %vm876 = vcmp.eq.f32.partialorder %v733, 0.0
        %v877 = vand.u32 %v733, 2147483648
        %v878 = vsel %vm876, %v877, %v875
        %v879 = vadd.f32 %v773, 1e-06
        %v880 = vadd.f32 %v780, 1e-06
        %v881 = vadd.f32 %v787, 1e-06
        %v882 = vadd.f32 %v794, 1e-06
        %v883 = vadd.f32 %v801, 1e-06
        %v884 = vadd.f32 %v808, 1e-06
        %v885 = vadd.f32 %v815, 1e-06
        %v886 = vadd.f32 %v822, 1e-06
        %v887 = vadd.f32 %v829, 1e-06
        %v888 = vadd.f32 %v836, 1e-06
        %v889 = vadd.f32 %v843, 1e-06
        %v890 = vadd.f32 %v850, 1e-06
        %v891 = vadd.f32 %v857, 1e-06
        %v892 = vadd.f32 %v864, 1e-06
        %v893 = vadd.f32 %v871, 1e-06
        %v894 = vadd.f32 %v878, 1e-06
        %v895 = vrcp.pop %v879
        %v896 = vmul.f32 %v735, %v895
        %v897 = vmul.f32 %v736, %v895
        %v898 = vrcp.pop %v880
        %v899 = vmul.f32 %v737, %v898
        %v900 = vmul.f32 %v738, %v898
        %v901 = vrcp.pop %v881
        %v902 = vmul.f32 %v739, %v901
        %v903 = vmul.f32 %v740, %v901
        %v904 = vrcp.pop %v882
        %v905 = vmul.f32 %v741, %v904
        %v906 = vmul.f32 %v742, %v904
        %v907 = vrcp.pop %v883
        %v908 = vmul.f32 %v743, %v907
        %v909 = vmul.f32 %v744, %v907
        %v910 = vrcp.pop %v884
        %v911 = vmul.f32 %v745, %v910
        %v912 = vmul.f32 %v746, %v910
        %v913 = vrcp.pop %v885
        %v914 = vmul.f32 %v747, %v913
        %v915 = vmul.f32 %v748, %v913
        %v916 = vrcp.pop %v886
        %v917 = vmul.f32 %v749, %v916
        %v918 = vmul.f32 %v750, %v916
        %v919 = vrcp.pop %v887
        %v920 = vmul.f32 %v751, %v919
        %v921 = vmul.f32 %v752, %v919
        %v922 = vrcp.pop %v888
        %v923 = vmul.f32 %v753, %v922
        %v924 = vmul.f32 %v754, %v922
        %v925 = vrcp.pop %v889
        %v926 = vmul.f32 %v755, %v925
        %v927 = vmul.f32 %v756, %v925
        %v928 = vrcp.pop %v890
        %v929 = vmul.f32 %v757, %v928
        %v930 = vmul.f32 %v758, %v928
        %v931 = vrcp.pop %v891
        %v932 = vmul.f32 %v759, %v931
        %v933 = vmul.f32 %v760, %v931
        %v934 = vrcp.pop %v892
        %v935 = vmul.f32 %v761, %v934
        %v936 = vmul.f32 %v762, %v934
        %v937 = vrcp.pop %v893
        %v938 = vmul.f32 %v763, %v937
        %v939 = vmul.f32 %v764, %v937
        %v940 = vrcp.pop %v894
        %v941 = vmul.f32 %v765, %v940
        %v942 = vmul.f32 %v766, %v940
        %v943 = vstv %s539
        %v944 = vadd.f32 %v896, %v943
        %v945 = vadd.f32 %v897, %v943
        %v946 = vadd.f32 %v899, %v943
        %v947 = vadd.f32 %v900, %v943
        %v948 = vadd.f32 %v902, %v943
        %v949 = vadd.f32 %v903, %v943
        %v950 = vadd.f32 %v905, %v943
        %v951 = vadd.f32 %v906, %v943
        %v952 = vadd.f32 %v908, %v943
        %v953 = vadd.f32 %v909, %v943
        %v954 = vadd.f32 %v911, %v943
        %v955 = vadd.f32 %v912, %v943
        %v956 = vadd.f32 %v914, %v943
        %v957 = vadd.f32 %v915, %v943
        %v958 = vadd.f32 %v917, %v943
        %v959 = vadd.f32 %v918, %v943
        %v960 = vadd.f32 %v920, %v943
        %v961 = vadd.f32 %v921, %v943
        %v962 = vadd.f32 %v923, %v943
        %v963 = vadd.f32 %v924, %v943
        %v964 = vadd.f32 %v926, %v943
        %v965 = vadd.f32 %v927, %v943
        %v966 = vadd.f32 %v929, %v943
        %v967 = vadd.f32 %v930, %v943
        %v968 = vadd.f32 %v932, %v943
        %v969 = vadd.f32 %v933, %v943
        %v970 = vadd.f32 %v935, %v943
        %v971 = vadd.f32 %v936, %v943
        %v972 = vadd.f32 %v938, %v943
        %v973 = vadd.f32 %v939, %v943
        %v974 = vadd.f32 %v941, %v943
        %v975 = vadd.f32 %v942, %v943
        %v976 = vld [vmem:[#allocation7] sm:$0xff]
        %v977 = vld [vmem:[#allocation7 + $0x8] sm:$0xff]
        %v978 = vld [vmem:[#allocation7 + $0x10] sm:$0xff]
        %v979 = vld [vmem:[#allocation7 + $0x18] sm:$0xff]
        %v980 = vld [vmem:[#allocation7 + $0x20] sm:$0xff]
        %v981 = vld [vmem:[#allocation7 + $0x28] sm:$0xff]
        %v982 = vld [vmem:[#allocation7 + $0x30] sm:$0xff]
        %v983 = vld [vmem:[#allocation7 + $0x38] sm:$0xff]
        %v984 = vld [vmem:[#allocation7 + $0x40] sm:$0xff]
        %v985 = vld [vmem:[#allocation7 + $0x48] sm:$0xff]
        %v986 = vld [vmem:[#allocation7 + $0x50] sm:$0xff]
        %v987 = vld [vmem:[#allocation7 + $0x58] sm:$0xff]
        %v988 = vld [vmem:[#allocation7 + $0x60] sm:$0xff]
        %v989 = vld [vmem:[#allocation7 + $0x68] sm:$0xff]
        %v990 = vld [vmem:[#allocation7 + $0x70] sm:$0xff]
        %v991 = vld [vmem:[#allocation7 + $0x78] sm:$0xff]
        %v992 = vld [vmem:[#allocation7 + $0x80] sm:$0xff]
        %v993 = vld [vmem:[#allocation7 + $0x88] sm:$0xff]
        %v994 = vld [vmem:[#allocation7 + $0x90] sm:$0xff]
        %v995 = vld [vmem:[#allocation7 + $0x98] sm:$0xff]
        %v996 = vld [vmem:[#allocation7 + $0xa0] sm:$0xff]
        %v997 = vld [vmem:[#allocation7 + $0xa8] sm:$0xff]
        %v998 = vld [vmem:[#allocation7 + $0xb0] sm:$0xff]
        %v999 = vld [vmem:[#allocation7 + $0xb8] sm:$0xff]
        %v1000 = vld [vmem:[#allocation7 + $0xc0] sm:$0xff]
        %v1001 = vld [vmem:[#allocation7 + $0xc8] sm:$0xff]
        %v1002 = vld [vmem:[#allocation7 + $0xd0] sm:$0xff]
        %v1003 = vld [vmem:[#allocation7 + $0xd8] sm:$0xff]
        %v1004 = vld [vmem:[#allocation7 + $0xe0] sm:$0xff]
        %v1005 = vld [vmem:[#allocation7 + $0xe8] sm:$0xff]
        %v1006 = vld [vmem:[#allocation7 + $0xf0] sm:$0xff]
        %v1007 = vld [vmem:[#allocation7 + $0xf8] sm:$0xff]
        %v1008 = vld [vmem:[#allocation7 + $0x100] sm:$0xff]
        %v1009 = vld [vmem:[#allocation7 + $0x108] sm:$0xff]
        %v1010 = vld [vmem:[#allocation7 + $0x110] sm:$0xff]
        %v1011 = vld [vmem:[#allocation7 + $0x118] sm:$0xff]
        %v1012 = vld [vmem:[#allocation7 + $0x120] sm:$0xff]
        %v1013 = vld [vmem:[#allocation7 + $0x128] sm:$0xff]
        %v1014 = vld [vmem:[#allocation7 + $0x130] sm:$0xff]
        %v1015 = vld [vmem:[#allocation7 + $0x138] sm:$0xff]
        %v1016 = vld [vmem:[#allocation7 + $0x140] sm:$0xff]
        %v1017 = vld [vmem:[#allocation7 + $0x148] sm:$0xff]
        %v1018 = vld [vmem:[#allocation7 + $0x150] sm:$0xff]
        %v1019 = vld [vmem:[#allocation7 + $0x158] sm:$0xff]
        %v1020 = vld [vmem:[#allocation7 + $0x160] sm:$0xff]
        %v1021 = vld [vmem:[#allocation7 + $0x168] sm:$0xff]
        %v1022 = vld [vmem:[#allocation7 + $0x170] sm:$0xff]
        %v1023 = vld [vmem:[#allocation7 + $0x178] sm:$0xff]
        %v1024 = vld [vmem:[#allocation7 + $0x180] sm:$0xff]
        %v1025 = vld [vmem:[#allocation7 + $0x188] sm:$0xff]
        %v1026 = vld [vmem:[#allocation7 + $0x190] sm:$0xff]
        %v1027 = vld [vmem:[#allocation7 + $0x198] sm:$0xff]
        %v1028 = vld [vmem:[#allocation7 + $0x1a0] sm:$0xff]
        %v1029 = vld [vmem:[#allocation7 + $0x1a8] sm:$0xff]
        %v1030 = vld [vmem:[#allocation7 + $0x1b0] sm:$0xff]
        %v1031 = vld [vmem:[#allocation7 + $0x1b8] sm:$0xff]
        %v1032 = vld [vmem:[#allocation7 + $0x1c0] sm:$0xff]
        %v1033 = vld [vmem:[#allocation7 + $0x1c8] sm:$0xff]
        %v1034 = vld [vmem:[#allocation7 + $0x1d0] sm:$0xff]
        %v1035 = vld [vmem:[#allocation7 + $0x1d8] sm:$0xff]
        %v1036 = vld [vmem:[#allocation7 + $0x1e0] sm:$0xff]
        %v1037 = vld [vmem:[#allocation7 + $0x1e8] sm:$0xff]
        %v1038 = vld [vmem:[#allocation7 + $0x1f0] sm:$0xff]
        %v1039 = vld [vmem:[#allocation7 + $0x1f8] sm:$0xff]
        %v1040 = vld [vmem:[%s3] sm:$0x3]
        %v1042 = vlaneseq
        %v1043 = vshrl.u32 %v1042, 7
        %v1044 = vsub.s32 0, %v1043
        %v1045 = vrot.slane %v1040, %v1044
        %v1046 = vlaneseq
        %v1047 = vshrl.u32 %v1046, 7
        %v1048 = vsub.s32 1, %v1047
        %v1049 = vrot.slane %v1040, %v1048
        %1052 = vmatprep.subr.mxu0 %v977
        %1053 = vmatpush1.msra.mxu0 %v976
        %1054 = vmatprep.subr.mxu0 %v979
        %1055 = vmatpush1.msra.mxu0 %v978
        %1056 = vmatprep.subr.mxu0 %v981
        %1057 = vmatpush1.msra.mxu0 %v980
        %1058 = vmatprep.subr.mxu0 %v983
        %1059 = vmatpush1.msra.mxu0 %v982
        %1060 = vmatprep.subr.mxu0 %v985
        %1061 = vmatpush1.msra.mxu0 %v984
        %1062 = vmatprep.subr.mxu0 %v987
        %1063 = vmatpush1.msra.mxu0 %v986
        %1064 = vmatprep.subr.mxu0 %v989
        %1065 = vmatpush1.msra.mxu0 %v988
        %1066 = vmatprep.subr.mxu0 %v991
        %1067 = vmatpush1.msra.mxu0 %v990
        %1068 = vmatprep.subr.mxu0 %v993
        %1069 = vmatpush1.msra.mxu0 %v992
        %1070 = vmatprep.subr.mxu0 %v995
        %1071 = vmatpush1.msra.mxu0 %v994
        %1072 = vmatprep.subr.mxu0 %v997
        %1073 = vmatpush1.msra.mxu0 %v996
        %1074 = vmatprep.subr.mxu0 %v999
        %1075 = vmatpush1.msra.mxu0 %v998
        %1076 = vmatprep.subr.mxu0 %v1001
        %1077 = vmatpush1.msra.mxu0 %v1000
        %1078 = vmatprep.subr.mxu0 %v1003
        %1079 = vmatpush1.msra.mxu0 %v1002
        %1080 = vmatprep.subr.mxu0 %v1005
        %1081 = vmatpush1.msra.mxu0 %v1004
        %1082 = vmatprep.subr.mxu0 %v1007
        %1083 = vmatpush1.msra.mxu0 %v1006
        %1084 = vmatprep.subr.mxu0 %v1009
        %1085 = vmatpush1.msra.mxu0 %v1008
        %1086 = vmatprep.subr.mxu0 %v1011
        %1087 = vmatpush1.msra.mxu0 %v1010
        %1088 = vmatprep.subr.mxu0 %v1013
        %1089 = vmatpush1.msra.mxu0 %v1012
        %1090 = vmatprep.subr.mxu0 %v1015
        %1091 = vmatpush1.msra.mxu0 %v1014
        %1092 = vmatprep.subr.mxu0 %v1017
        %1093 = vmatpush1.msra.mxu0 %v1016
        %1094 = vmatprep.subr.mxu0 %v1019
        %1095 = vmatpush1.msra.mxu0 %v1018
        %1096 = vmatprep.subr.mxu0 %v1021
        %1097 = vmatpush1.msra.mxu0 %v1020
        %1098 = vmatprep.subr.mxu0 %v1023
        %1099 = vmatpush1.msra.mxu0 %v1022
        %1100 = vmatprep.subr.mxu0 %v1025
        %1101 = vmatpush1.msra.mxu0 %v1024
        %1102 = vmatprep.subr.mxu0 %v1027
        %1103 = vmatpush1.msra.mxu0 %v1026
        %1104 = vmatprep.subr.mxu0 %v1029
        %1105 = vmatpush1.msra.mxu0 %v1028
        %1106 = vmatprep.subr.mxu0 %v1031
        %1107 = vmatpush1.msra.mxu0 %v1030
        %1108 = vmatprep.subr.mxu0 %v1033
        %1109 = vmatpush1.msra.mxu0 %v1032
        %1110 = vmatprep.subr.mxu0 %v1035
        %1111 = vmatpush1.msra.mxu0 %v1034
        %1112 = vmatprep.subr.mxu0 %v1037
        %1113 = vmatpush1.msra.mxu0 %v1036
        %1114 = vmatprep.subr.mxu0 %v1039
        %1115 = vmatpush1.msra.mxu0 %v1038
        %1116 = vmatprep.mubr.f32.mxu0 %v945
        %1117 = vmatmul.mubr.f32.gmra.mrb[0].mxu0 %v944
        %v1118 = vpop.f32.mrb[0].mxu0
        %v1119 = vadd.f32 %v1045, %v1118
        %v1120 = vpop.f32.mrb[0].mxu0
        %v1121 = vadd.f32 %v1049, %v1120
        %1122 = vmatprep.mubr.f32.mxu0 %v947
        %1123 = vmatmul.mubr.f32.gmra.mrb[0].mxu0 %v946
        %v1124 = vpop.f32.mrb[0].mxu0
        %v1125 = vadd.f32 %v1045, %v1124
        %v1126 = vpop.f32.mrb[0].mxu0
        %v1127 = vadd.f32 %v1049, %v1126
        %1128 = vmatprep.mubr.f32.mxu0 %v949
        %1129 = vmatmul.mubr.f32.gmra.mrb[0].mxu0 %v948
        %v1130 = vpop.f32.mrb[0].mxu0
        %v1131 = vadd.f32 %v1045, %v1130
        %v1132 = vpop.f32.mrb[0].mxu0
        %v1133 = vadd.f32 %v1049, %v1132
        %1134 = vmatprep.mubr.f32.mxu0 %v951
        %1135 = vmatmul.mubr.f32.gmra.mrb[0].mxu0 %v950
        %v1136 = vpop.f32.mrb[0].mxu0
        %v1137 = vadd.f32 %v1045, %v1136
        %v1138 = vpop.f32.mrb[0].mxu0
        %v1139 = vadd.f32 %v1049, %v1138
        %1140 = vmatprep.mubr.f32.mxu0 %v953
        %1141 = vmatmul.mubr.f32.gmra.mrb[0].mxu0 %v952
        %v1142 = vpop.f32.mrb[0].mxu0
        %v1143 = vadd.f32 %v1045, %v1142
        %v1144 = vpop.f32.mrb[0].mxu0
        %v1145 = vadd.f32 %v1049, %v1144
        %1146 = vmatprep.mubr.f32.mxu0 %v955
        %1147 = vmatmul.mubr.f32.gmra.mrb[0].mxu0 %v954
        %v1148 = vpop.f32.mrb[0].mxu0
        %v1149 = vadd.f32 %v1045, %v1148
        %v1150 = vpop.f32.mrb[0].mxu0
        %v1151 = vadd.f32 %v1049, %v1150
        %1152 = vmatprep.mubr.f32.mxu0 %v957
        %1153 = vmatmul.mubr.f32.gmra.mrb[0].mxu0 %v956
        %v1154 = vpop.f32.mrb[0].mxu0
        %v1155 = vadd.f32 %v1045, %v1154
        %v1156 = vpop.f32.mrb[0].mxu0
        %v1157 = vadd.f32 %v1049, %v1156
        %1158 = vmatprep.mubr.f32.mxu0 %v959
        %1159 = vmatmul.mubr.f32.gmra.mrb[0].mxu0 %v958
        %v1160 = vpop.f32.mrb[0].mxu0
        %v1161 = vadd.f32 %v1045, %v1160
        %v1162 = vpop.f32.mrb[0].mxu0
        %v1163 = vadd.f32 %v1049, %v1162
        %1164 = vmatprep.mubr.f32.mxu0 %v961
        %1165 = vmatmul.mubr.f32.gmra.mrb[0].mxu0 %v960
        %v1166 = vpop.f32.mrb[0].mxu0
        %v1167 = vadd.f32 %v1045, %v1166
        %v1168 = vpop.f32.mrb[0].mxu0
        %v1169 = vadd.f32 %v1049, %v1168
        %1170 = vmatprep.mubr.f32.mxu0 %v963
        %1171 = vmatmul.mubr.f32.gmra.mrb[0].mxu0 %v962
        %v1172 = vpop.f32.mrb[0].mxu0
        %v1173 = vadd.f32 %v1045, %v1172
        %v1174 = vpop.f32.mrb[0].mxu0
        %v1175 = vadd.f32 %v1049, %v1174
        %1176 = vmatprep.mubr.f32.mxu0 %v965
        %1177 = vmatmul.mubr.f32.gmra.mrb[0].mxu0 %v964
        %v1178 = vpop.f32.mrb[0].mxu0
        %v1179 = vadd.f32 %v1045, %v1178
        %v1180 = vpop.f32.mrb[0].mxu0
        %v1181 = vadd.f32 %v1049, %v1180
        %1182 = vmatprep.mubr.f32.mxu0 %v967
        %1183 = vmatmul.mubr.f32.gmra.mrb[0].mxu0 %v966
        %v1184 = vpop.f32.mrb[0].mxu0
        %v1185 = vadd.f32 %v1045, %v1184
        %v1186 = vpop.f32.mrb[0].mxu0
        %v1187 = vadd.f32 %v1049, %v1186
        %1188 = vmatprep.mubr.f32.mxu0 %v969
        %1189 = vmatmul.mubr.f32.gmra.mrb[0].mxu0 %v968
        %v1190 = vpop.f32.mrb[0].mxu0
        %v1191 = vadd.f32 %v1045, %v1190
        %v1192 = vpop.f32.mrb[0].mxu0
        %v1193 = vadd.f32 %v1049, %v1192
        %1194 = vmatprep.mubr.f32.mxu0 %v971
        %1195 = vmatmul.mubr.f32.gmra.mrb[0].mxu0 %v970
        %v1196 = vpop.f32.mrb[0].mxu0
        %v1197 = vadd.f32 %v1045, %v1196
        %v1198 = vpop.f32.mrb[0].mxu0
        %v1199 = vadd.f32 %v1049, %v1198
        %1200 = vmatprep.mubr.f32.mxu0 %v973
        %1201 = vmatmul.mubr.f32.gmra.mrb[0].mxu0 %v972
        %v1202 = vpop.f32.mrb[0].mxu0
        %v1203 = vadd.f32 %v1045, %v1202
        %v1204 = vpop.f32.mrb[0].mxu0
        %v1205 = vadd.f32 %v1049, %v1204
        %1206 = vmatprep.mubr.f32.mxu0 %v975
        %1207 = vmatmul.mubr.f32.gmra.mrb[0].mxu0 %v974
        %v1208 = vpop.f32.mrb[0].mxu0
        %v1209 = vadd.f32 %v1045, %v1208
        %v1210 = vpop.f32.mrb[0].mxu0
        %v1211 = vadd.f32 %v1049, %v1210
        %1212 = vdwg.mxu0
        %v1213 = vld [vmem:[#allocation9] sm:$0xff]
        %v1214 = vld [vmem:[#allocation9 + $0x8] sm:$0xff]
        %v1215 = vld [vmem:[#allocation9 + $0x10] sm:$0xff]
        %v1216 = vld [vmem:[#allocation9 + $0x18] sm:$0xff]
        %v1217 = vld [vmem:[#allocation9 + $0x20] sm:$0xff]
        %v1218 = vld [vmem:[#allocation9 + $0x28] sm:$0xff]
        %v1219 = vld [vmem:[#allocation9 + $0x30] sm:$0xff]
        %v1220 = vld [vmem:[#allocation9 + $0x38] sm:$0xff]
        %v1221 = vld [vmem:[#allocation9 + $0x40] sm:$0xff]
        %v1222 = vld [vmem:[#allocation9 + $0x48] sm:$0xff]
        %v1223 = vld [vmem:[#allocation9 + $0x50] sm:$0xff]
        %v1224 = vld [vmem:[#allocation9 + $0x58] sm:$0xff]
        %v1225 = vld [vmem:[#allocation9 + $0x60] sm:$0xff]
        %v1226 = vld [vmem:[#allocation9 + $0x68] sm:$0xff]
        %v1227 = vld [vmem:[#allocation9 + $0x70] sm:$0xff]
        %v1228 = vld [vmem:[#allocation9 + $0x78] sm:$0xff]
        %v1229 = vld [vmem:[#allocation9 + $0x80] sm:$0xff]
        %v1230 = vld [vmem:[#allocation9 + $0x88] sm:$0xff]
        %v1231 = vld [vmem:[#allocation9 + $0x90] sm:$0xff]
        %v1232 = vld [vmem:[#allocation9 + $0x98] sm:$0xff]
        %v1233 = vld [vmem:[#allocation9 + $0xa0] sm:$0xff]
        %v1234 = vld [vmem:[#allocation9 + $0xa8] sm:$0xff]
        %v1235 = vld [vmem:[#allocation9 + $0xb0] sm:$0xff]
        %v1236 = vld [vmem:[#allocation9 + $0xb8] sm:$0xff]
        %v1237 = vld [vmem:[#allocation9 + $0xc0] sm:$0xff]
        %v1238 = vld [vmem:[#allocation9 + $0xc8] sm:$0xff]
        %v1239 = vld [vmem:[#allocation9 + $0xd0] sm:$0xff]
        %v1240 = vld [vmem:[#allocation9 + $0xd8] sm:$0xff]
        %v1241 = vld [vmem:[#allocation9 + $0xe0] sm:$0xff]
        %v1242 = vld [vmem:[#allocation9 + $0xe8] sm:$0xff]
        %v1243 = vld [vmem:[#allocation9 + $0xf0] sm:$0xff]
        %v1244 = vld [vmem:[#allocation9 + $0xf8] sm:$0xff]
        %v1245 = vld [vmem:[#allocation9 + $0x100] sm:$0xff]
        %v1246 = vld [vmem:[#allocation9 + $0x108] sm:$0xff]
        %v1247 = vld [vmem:[#allocation9 + $0x110] sm:$0xff]
        %v1248 = vld [vmem:[#allocation9 + $0x118] sm:$0xff]
        %v1249 = vld [vmem:[#allocation9 + $0x120] sm:$0xff]
        %v1250 = vld [vmem:[#allocation9 + $0x128] sm:$0xff]
        %v1251 = vld [vmem:[#allocation9 + $0x130] sm:$0xff]
        %v1252 = vld [vmem:[#allocation9 + $0x138] sm:$0xff]
        %v1253 = vld [vmem:[#allocation9 + $0x140] sm:$0xff]
        %v1254 = vld [vmem:[#allocation9 + $0x148] sm:$0xff]
        %v1255 = vld [vmem:[#allocation9 + $0x150] sm:$0xff]
        %v1256 = vld [vmem:[#allocation9 + $0x158] sm:$0xff]
        %v1257 = vld [vmem:[#allocation9 + $0x160] sm:$0xff]
        %v1258 = vld [vmem:[#allocation9 + $0x168] sm:$0xff]
        %v1259 = vld [vmem:[#allocation9 + $0x170] sm:$0xff]
        %v1260 = vld [vmem:[#allocation9 + $0x178] sm:$0xff]
        %v1261 = vld [vmem:[#allocation9 + $0x180] sm:$0xff]
        %v1262 = vld [vmem:[#allocation9 + $0x188] sm:$0xff]
        %v1263 = vld [vmem:[#allocation9 + $0x190] sm:$0xff]
        %v1264 = vld [vmem:[#allocation9 + $0x198] sm:$0xff]
        %v1265 = vld [vmem:[#allocation9 + $0x1a0] sm:$0xff]
        %v1266 = vld [vmem:[#allocation9 + $0x1a8] sm:$0xff]
        %v1267 = vld [vmem:[#allocation9 + $0x1b0] sm:$0xff]
        %v1268 = vld [vmem:[#allocation9 + $0x1b8] sm:$0xff]
        %v1269 = vld [vmem:[#allocation9 + $0x1c0] sm:$0xff]
        %v1270 = vld [vmem:[#allocation9 + $0x1c8] sm:$0xff]
        %v1271 = vld [vmem:[#allocation9 + $0x1d0] sm:$0xff]
        %v1272 = vld [vmem:[#allocation9 + $0x1d8] sm:$0xff]
        %v1273 = vld [vmem:[#allocation9 + $0x1e0] sm:$0xff]
        %v1274 = vld [vmem:[#allocation9 + $0x1e8] sm:$0xff]
        %v1275 = vld [vmem:[#allocation9 + $0x1f0] sm:$0xff]
        %v1276 = vld [vmem:[#allocation9 + $0x1f8] sm:$0xff]
        %v1277 = vld [vmem:[%s5] sm:$0x3]
        %v1279 = vlaneseq
        %v1280 = vshrl.u32 %v1279, 7
        %v1281 = vsub.s32 0, %v1280
        %v1282 = vrot.slane %v1277, %v1281
        %v1283 = vlaneseq
        %v1284 = vshrl.u32 %v1283, 7
        %v1285 = vsub.s32 1, %v1284
        %v1286 = vrot.slane %v1277, %v1285
        %1289 = vmatprep.subr.mxu0 %v1214
        %1290 = vmatpush1.msra.mxu0 %v1213
        %1291 = vmatprep.subr.mxu0 %v1216
        %1292 = vmatpush1.msra.mxu0 %v1215
        %1293 = vmatprep.subr.mxu0 %v1218
        %1294 = vmatpush1.msra.mxu0 %v1217
        %1295 = vmatprep.subr.mxu0 %v1220
        %1296 = vmatpush1.msra.mxu0 %v1219
        %1297 = vmatprep.subr.mxu0 %v1222
        %1298 = vmatpush1.msra.mxu0 %v1221
        %1299 = vmatprep.subr.mxu0 %v1224
        %1300 = vmatpush1.msra.mxu0 %v1223
        %1301 = vmatprep.subr.mxu0 %v1226
        %1302 = vmatpush1.msra.mxu0 %v1225
        %1303 = vmatprep.subr.mxu0 %v1228
        %1304 = vmatpush1.msra.mxu0 %v1227
        %1305 = vmatprep.subr.mxu0 %v1230
        %1306 = vmatpush1.msra.mxu0 %v1229
        %1307 = vmatprep.subr.mxu0 %v1232
        %1308 = vmatpush1.msra.mxu0 %v1231
        %1309 = vmatprep.subr.mxu0 %v1234
        %1310 = vmatpush1.msra.mxu0 %v1233
        %1311 = vmatprep.subr.mxu0 %v1236
        %1312 = vmatpush1.msra.mxu0 %v1235
        %1313 = vmatprep.subr.mxu0 %v1238
        %1314 = vmatpush1.msra.mxu0 %v1237
        %1315 = vmatprep.subr.mxu0 %v1240
        %1316 = vmatpush1.msra.mxu0 %v1239
        %1317 = vmatprep.subr.mxu0 %v1242
        %1318 = vmatpush1.msra.mxu0 %v1241
        %1319 = vmatprep.subr.mxu0 %v1244
        %1320 = vmatpush1.msra.mxu0 %v1243
        %1321 = vmatprep.subr.mxu0 %v1246
        %1322 = vmatpush1.msra.mxu0 %v1245
        %1323 = vmatprep.subr.mxu0 %v1248
        %1324 = vmatpush1.msra.mxu0 %v1247
        %1325 = vmatprep.subr.mxu0 %v1250
        %1326 = vmatpush1.msra.mxu0 %v1249
        %1327 = vmatprep.subr.mxu0 %v1252
        %1328 = vmatpush1.msra.mxu0 %v1251
        %1329 = vmatprep.subr.mxu0 %v1254
        %1330 = vmatpush1.msra.mxu0 %v1253
        %1331 = vmatprep.subr.mxu0 %v1256
        %1332 = vmatpush1.msra.mxu0 %v1255
        %1333 = vmatprep.subr.mxu0 %v1258
        %1334 = vmatpush1.msra.mxu0 %v1257
        %1335 = vmatprep.subr.mxu0 %v1260
        %1336 = vmatpush1.msra.mxu0 %v1259
        %1337 = vmatprep.subr.mxu0 %v1262
        %1338 = vmatpush1.msra.mxu0 %v1261
        %1339 = vmatprep.subr.mxu0 %v1264
        %1340 = vmatpush1.msra.mxu0 %v1263
        %1341 = vmatprep.subr.mxu0 %v1266
        %1342 = vmatpush1.msra.mxu0 %v1265
        %1343 = vmatprep.subr.mxu0 %v1268
        %1344 = vmatpush1.msra.mxu0 %v1267
        %1345 = vmatprep.subr.mxu0 %v1270
        %1346 = vmatpush1.msra.mxu0 %v1269
        %1347 = vmatprep.subr.mxu0 %v1272
        %1348 = vmatpush1.msra.mxu0 %v1271
        %1349 = vmatprep.subr.mxu0 %v1274
        %1350 = vmatpush1.msra.mxu0 %v1273
        %1351 = vmatprep.subr.mxu0 %v1276
        %1352 = vmatpush1.msra.mxu0 %v1275
        %1353 = vmatprep.mubr.f32.mxu0 %v945
        %1354 = vmatmul.mubr.f32.gmra.mrb[0].mxu0 %v944
        %v1355 = vpop.f32.mrb[0].mxu0
        %v1356 = vadd.f32 %v1282, %v1355
        %v1357 = vpop.f32.mrb[0].mxu0
        %v1358 = vadd.f32 %v1286, %v1357
        %1359 = vmatprep.mubr.f32.mxu0 %v947
        %1360 = vmatmul.mubr.f32.gmra.mrb[0].mxu0 %v946
        %v1361 = vpop.f32.mrb[0].mxu0
        %v1362 = vadd.f32 %v1282, %v1361
        %v1363 = vpop.f32.mrb[0].mxu0
        %v1364 = vadd.f32 %v1286, %v1363
        %1365 = vmatprep.mubr.f32.mxu0 %v949
        %1366 = vmatmul.mubr.f32.gmra.mrb[0].mxu0 %v948
        %v1367 = vpop.f32.mrb[0].mxu0
        %v1368 = vadd.f32 %v1282, %v1367
        %v1369 = vpop.f32.mrb[0].mxu0
        %v1370 = vadd.f32 %v1286, %v1369
        %1371 = vmatprep.mubr.f32.mxu0 %v951
        %1372 = vmatmul.mubr.f32.gmra.mrb[0].mxu0 %v950
        %v1373 = vpop.f32.mrb[0].mxu0
        %v1374 = vadd.f32 %v1282, %v1373
        %v1375 = vpop.f32.mrb[0].mxu0
        %v1376 = vadd.f32 %v1286, %v1375
        %1377 = vmatprep.mubr.f32.mxu0 %v953
        %1378 = vmatmul.mubr.f32.gmra.mrb[0].mxu0 %v952
        %v1379 = vpop.f32.mrb[0].mxu0
        %v1380 = vadd.f32 %v1282, %v1379
        %v1381 = vpop.f32.mrb[0].mxu0
        %v1382 = vadd.f32 %v1286, %v1381
        %1383 = vmatprep.mubr.f32.mxu0 %v955
        %1384 = vmatmul.mubr.f32.gmra.mrb[0].mxu0 %v954
        %v1385 = vpop.f32.mrb[0].mxu0
        %v1386 = vadd.f32 %v1282, %v1385
        %v1387 = vpop.f32.mrb[0].mxu0
        %v1388 = vadd.f32 %v1286, %v1387
        %1389 = vmatprep.mubr.f32.mxu0 %v957
        %1390 = vmatmul.mubr.f32.gmra.mrb[0].mxu0 %v956
        %v1391 = vpop.f32.mrb[0].mxu0
        %v1392 = vadd.f32 %v1282, %v1391
        %v1393 = vpop.f32.mrb[0].mxu0
        %v1394 = vadd.f32 %v1286, %v1393
        %1395 = vmatprep.mubr.f32.mxu0 %v959
        %1396 = vmatmul.mubr.f32.gmra.mrb[0].mxu0 %v958
        %v1397 = vpop.f32.mrb[0].mxu0
        %v1398 = vadd.f32 %v1282, %v1397
        %v1399 = vpop.f32.mrb[0].mxu0
        %v1400 = vadd.f32 %v1286, %v1399
        %1401 = vmatprep.mubr.f32.mxu0 %v961
        %1402 = vmatmul.mubr.f32.gmra.mrb[0].mxu0 %v960
        %v1403 = vpop.f32.mrb[0].mxu0
        %v1404 = vadd.f32 %v1282, %v1403
        %v1405 = vpop.f32.mrb[0].mxu0
        %v1406 = vadd.f32 %v1286, %v1405
        %1407 = vmatprep.mubr.f32.mxu0 %v963
        %1408 = vmatmul.mubr.f32.gmra.mrb[0].mxu0 %v962
        %v1409 = vpop.f32.mrb[0].mxu0
        %v1410 = vadd.f32 %v1282, %v1409
        %v1411 = vpop.f32.mrb[0].mxu0
        %v1412 = vadd.f32 %v1286, %v1411
        %1413 = vmatprep.mubr.f32.mxu0 %v965
        %1414 = vmatmul.mubr.f32.gmra.mrb[0].mxu0 %v964
        %v1415 = vpop.f32.mrb[0].mxu0
        %v1416 = vadd.f32 %v1282, %v1415
        %v1417 = vpop.f32.mrb[0].mxu0
        %v1418 = vadd.f32 %v1286, %v1417
        %1419 = vmatprep.mubr.f32.mxu0 %v967
        %1420 = vmatmul.mubr.f32.gmra.mrb[0].mxu0 %v966
        %v1421 = vpop.f32.mrb[0].mxu0
        %v1422 = vadd.f32 %v1282, %v1421
        %v1423 = vpop.f32.mrb[0].mxu0
        %v1424 = vadd.f32 %v1286, %v1423
        %1425 = vmatprep.mubr.f32.mxu0 %v969
        %1426 = vmatmul.mubr.f32.gmra.mrb[0].mxu0 %v968
        %v1427 = vpop.f32.mrb[0].mxu0
        %v1428 = vadd.f32 %v1282, %v1427
        %v1429 = vpop.f32.mrb[0].mxu0
        %v1430 = vadd.f32 %v1286, %v1429
        %1431 = vmatprep.mubr.f32.mxu0 %v971
        %1432 = vmatmul.mubr.f32.gmra.mrb[0].mxu0 %v970
        %v1433 = vpop.f32.mrb[0].mxu0
        %v1434 = vadd.f32 %v1282, %v1433
        %v1435 = vpop.f32.mrb[0].mxu0
        %v1436 = vadd.f32 %v1286, %v1435
        %1437 = vmatprep.mubr.f32.mxu0 %v973
        %1438 = vmatmul.mubr.f32.gmra.mrb[0].mxu0 %v972
        %v1439 = vpop.f32.mrb[0].mxu0
        %v1440 = vadd.f32 %v1282, %v1439
        %v1441 = vpop.f32.mrb[0].mxu0
        %v1442 = vadd.f32 %v1286, %v1441
        %1443 = vmatprep.mubr.f32.mxu0 %v975
        %1444 = vmatmul.mubr.f32.gmra.mrb[0].mxu0 %v974
        %v1445 = vpop.f32.mrb[0].mxu0
        %v1446 = vadd.f32 %v1282, %v1445
        %v1447 = vpop.f32.mrb[0].mxu0
        %v1448 = vadd.f32 %v1286, %v1447
        %1449 = vdwg.mxu0
        %v1450 = vld [vmem:[#allocation10] sm:$0xff]
        %v1451 = vld [vmem:[#allocation10 + $0x8] sm:$0xff]
        %v1452 = vld [vmem:[#allocation10 + $0x10] sm:$0xff]
        %v1453 = vld [vmem:[#allocation10 + $0x18] sm:$0xff]
        %v1454 = vld [vmem:[#allocation10 + $0x20] sm:$0xff]
        %v1455 = vld [vmem:[#allocation10 + $0x28] sm:$0xff]
        %v1456 = vld [vmem:[#allocation10 + $0x30] sm:$0xff]
        %v1457 = vld [vmem:[#allocation10 + $0x38] sm:$0xff]
        %v1458 = vld [vmem:[#allocation10 + $0x40] sm:$0xff]
        %v1459 = vld [vmem:[#allocation10 + $0x48] sm:$0xff]
        %v1460 = vld [vmem:[#allocation10 + $0x50] sm:$0xff]
        %v1461 = vld [vmem:[#allocation10 + $0x58] sm:$0xff]
        %v1462 = vld [vmem:[#allocation10 + $0x60] sm:$0xff]
        %v1463 = vld [vmem:[#allocation10 + $0x68] sm:$0xff]
        %v1464 = vld [vmem:[#allocation10 + $0x70] sm:$0xff]
        %v1465 = vld [vmem:[#allocation10 + $0x78] sm:$0xff]
        %v1466 = vld [vmem:[#allocation10 + $0x80] sm:$0xff]
        %v1467 = vld [vmem:[#allocation10 + $0x88] sm:$0xff]
        %v1468 = vld [vmem:[#allocation10 + $0x90] sm:$0xff]
        %v1469 = vld [vmem:[#allocation10 + $0x98] sm:$0xff]
        %v1470 = vld [vmem:[#allocation10 + $0xa0] sm:$0xff]
        %v1471 = vld [vmem:[#allocation10 + $0xa8] sm:$0xff]
        %v1472 = vld [vmem:[#allocation10 + $0xb0] sm:$0xff]
        %v1473 = vld [vmem:[#allocation10 + $0xb8] sm:$0xff]
        %v1474 = vld [vmem:[#allocation10 + $0xc0] sm:$0xff]
        %v1475 = vld [vmem:[#allocation10 + $0xc8] sm:$0xff]
        %v1476 = vld [vmem:[#allocation10 + $0xd0] sm:$0xff]
        %v1477 = vld [vmem:[#allocation10 + $0xd8] sm:$0xff]
        %v1478 = vld [vmem:[#allocation10 + $0xe0] sm:$0xff]
        %v1479 = vld [vmem:[#allocation10 + $0xe8] sm:$0xff]
        %v1480 = vld [vmem:[#allocation10 + $0xf0] sm:$0xff]
        %v1481 = vld [vmem:[#allocation10 + $0xf8] sm:$0xff]
        %v1482 = vld [vmem:[#allocation10 + $0x100] sm:$0xff]
        %v1483 = vld [vmem:[#allocation10 + $0x108] sm:$0xff]
        %v1484 = vld [vmem:[#allocation10 + $0x110] sm:$0xff]
        %v1485 = vld [vmem:[#allocation10 + $0x118] sm:$0xff]
        %v1486 = vld [vmem:[#allocation10 + $0x120] sm:$0xff]
        %v1487 = vld [vmem:[#allocation10 + $0x128] sm:$0xff]
        %v1488 = vld [vmem:[#allocation10 + $0x130] sm:$0xff]
        %v1489 = vld [vmem:[#allocation10 + $0x138] sm:$0xff]
        %v1490 = vld [vmem:[#allocation10 + $0x140] sm:$0xff]
        %v1491 = vld [vmem:[#allocation10 + $0x148] sm:$0xff]
        %v1492 = vld [vmem:[#allocation10 + $0x150] sm:$0xff]
        %v1493 = vld [vmem:[#allocation10 + $0x158] sm:$0xff]
        %v1494 = vld [vmem:[#allocation10 + $0x160] sm:$0xff]
        %v1495 = vld [vmem:[#allocation10 + $0x168] sm:$0xff]
        %v1496 = vld [vmem:[#allocation10 + $0x170] sm:$0xff]
        %v1497 = vld [vmem:[#allocation10 + $0x178] sm:$0xff]
        %v1498 = vld [vmem:[#allocation10 + $0x180] sm:$0xff]
        %v1499 = vld [vmem:[#allocation10 + $0x188] sm:$0xff]
        %v1500 = vld [vmem:[#allocation10 + $0x190] sm:$0xff]
        %v1501 = vld [vmem:[#allocation10 + $0x198] sm:$0xff]
        %v1502 = vld [vmem:[#allocation10 + $0x1a0] sm:$0xff]
        %v1503 = vld [vmem:[#allocation10 + $0x1a8] sm:$0xff]
        %v1504 = vld [vmem:[#allocation10 + $0x1b0] sm:$0xff]
        %v1505 = vld [vmem:[#allocation10 + $0x1b8] sm:$0xff]
        %v1506 = vld [vmem:[#allocation10 + $0x1c0] sm:$0xff]
        %v1507 = vld [vmem:[#allocation10 + $0x1c8] sm:$0xff]
        %v1508 = vld [vmem:[#allocation10 + $0x1d0] sm:$0xff]
        %v1509 = vld [vmem:[#allocation10 + $0x1d8] sm:$0xff]
        %v1510 = vld [vmem:[#allocation10 + $0x1e0] sm:$0xff]
        %v1511 = vld [vmem:[#allocation10 + $0x1e8] sm:$0xff]
        %v1512 = vld [vmem:[#allocation10 + $0x1f0] sm:$0xff]
        %v1513 = vld [vmem:[#allocation10 + $0x1f8] sm:$0xff]
        %v1514 = vld [vmem:[%s7] sm:$0x3]
        %v1516 = vlaneseq
        %v1517 = vshrl.u32 %v1516, 7
        %v1518 = vsub.s32 0, %v1517
        %v1519 = vrot.slane %v1514, %v1518
        %v1520 = vlaneseq
        %v1521 = vshrl.u32 %v1520, 7
        %v1522 = vsub.s32 1, %v1521
        %v1523 = vrot.slane %v1514, %v1522
        %1526 = vmatprep.subr.mxu0 %v1451
        %1527 = vmatpush1.msra.mxu0 %v1450
        %1528 = vmatprep.subr.mxu0 %v1453
        %1529 = vmatpush1.msra.mxu0 %v1452
        %1530 = vmatprep.subr.mxu0 %v1455
        %1531 = vmatpush1.msra.mxu0 %v1454
        %1532 = vmatprep.subr.mxu0 %v1457
        %1533 = vmatpush1.msra.mxu0 %v1456
        %1534 = vmatprep.subr.mxu0 %v1459
        %1535 = vmatpush1.msra.mxu0 %v1458
        %1536 = vmatprep.subr.mxu0 %v1461
        %1537 = vmatpush1.msra.mxu0 %v1460
        %1538 = vmatprep.subr.mxu0 %v1463
        %1539 = vmatpush1.msra.mxu0 %v1462
        %1540 = vmatprep.subr.mxu0 %v1465
        %1541 = vmatpush1.msra.mxu0 %v1464
        %1542 = vmatprep.subr.mxu0 %v1467
        %1543 = vmatpush1.msra.mxu0 %v1466
        %1544 = vmatprep.subr.mxu0 %v1469
        %1545 = vmatpush1.msra.mxu0 %v1468
        %1546 = vmatprep.subr.mxu0 %v1471
        %1547 = vmatpush1.msra.mxu0 %v1470
        %1548 = vmatprep.subr.mxu0 %v1473
        %1549 = vmatpush1.msra.mxu0 %v1472
        %1550 = vmatprep.subr.mxu0 %v1475
        %1551 = vmatpush1.msra.mxu0 %v1474
        %1552 = vmatprep.subr.mxu0 %v1477
        %1553 = vmatpush1.msra.mxu0 %v1476
        %1554 = vmatprep.subr.mxu0 %v1479
        %1555 = vmatpush1.msra.mxu0 %v1478
        %1556 = vmatprep.subr.mxu0 %v1481
        %1557 = vmatpush1.msra.mxu0 %v1480
        %1558 = vmatprep.subr.mxu0 %v1483
        %1559 = vmatpush1.msra.mxu0 %v1482
        %1560 = vmatprep.subr.mxu0 %v1485
        %1561 = vmatpush1.msra.mxu0 %v1484
        %1562 = vmatprep.subr.mxu0 %v1487
        %1563 = vmatpush1.msra.mxu0 %v1486
        %1564 = vmatprep.subr.mxu0 %v1489
        %1565 = vmatpush1.msra.mxu0 %v1488
        %1566 = vmatprep.subr.mxu0 %v1491
        %1567 = vmatpush1.msra.mxu0 %v1490
        %1568 = vmatprep.subr.mxu0 %v1493
        %1569 = vmatpush1.msra.mxu0 %v1492
        %1570 = vmatprep.subr.mxu0 %v1495
        %1571 = vmatpush1.msra.mxu0 %v1494
        %1572 = vmatprep.subr.mxu0 %v1497
        %1573 = vmatpush1.msra.mxu0 %v1496
        %1574 = vmatprep.subr.mxu0 %v1499
        %1575 = vmatpush1.msra.mxu0 %v1498
        %1576 = vmatprep.subr.mxu0 %v1501
        %1577 = vmatpush1.msra.mxu0 %v1500
        %1578 = vmatprep.subr.mxu0 %v1503
        %1579 = vmatpush1.msra.mxu0 %v1502
        %1580 = vmatprep.subr.mxu0 %v1505
        %1581 = vmatpush1.msra.mxu0 %v1504
        %1582 = vmatprep.subr.mxu0 %v1507
        %1583 = vmatpush1.msra.mxu0 %v1506
        %1584 = vmatprep.subr.mxu0 %v1509
        %1585 = vmatpush1.msra.mxu0 %v1508
        %1586 = vmatprep.subr.mxu0 %v1511
        %1587 = vmatpush1.msra.mxu0 %v1510
        %1588 = vmatprep.subr.mxu0 %v1513
        %1589 = vmatpush1.msra.mxu0 %v1512
        %1590 = vmatprep.mubr.f32.mxu0 %v945
        %1591 = vmatmul.mubr.f32.gmra.mrb[0].mxu0 %v944
        %v1592 = vpop.f32.mrb[0].mxu0
        %v1593 = vadd.f32 %v1519, %v1592
        %v1594 = vpop.f32.mrb[0].mxu0
        %v1595 = vadd.f32 %v1523, %v1594
        %1596 = vmatprep.mubr.f32.mxu0 %v947
        %1597 = vmatmul.mubr.f32.gmra.mrb[0].mxu0 %v946
        %v1598 = vpop.f32.mrb[0].mxu0
        %v1599 = vadd.f32 %v1519, %v1598
        %v1600 = vpop.f32.mrb[0].mxu0
        %v1601 = vadd.f32 %v1523, %v1600
        %1602 = vmatprep.mubr.f32.mxu0 %v949
        %1603 = vmatmul.mubr.f32.gmra.mrb[0].mxu0 %v948
        %v1604 = vpop.f32.mrb[0].mxu0
        %v1605 = vadd.f32 %v1519, %v1604
        %v1606 = vpop.f32.mrb[0].mxu0
        %v1607 = vadd.f32 %v1523, %v1606
        %1608 = vmatprep.mubr.f32.mxu0 %v951
        %1609 = vmatmul.mubr.f32.gmra.mrb[0].mxu0 %v950
        %v1610 = vpop.f32.mrb[0].mxu0
        %v1611 = vadd.f32 %v1519, %v1610
        %v1612 = vpop.f32.mrb[0].mxu0
        %v1613 = vadd.f32 %v1523, %v1612
        %1614 = vmatprep.mubr.f32.mxu0 %v953
        %1615 = vmatmul.mubr.f32.gmra.mrb[0].mxu0 %v952
        %v1616 = vpop.f32.mrb[0].mxu0
        %v1617 = vadd.f32 %v1519, %v1616
        %v1618 = vpop.f32.mrb[0].mxu0
        %v1619 = vadd.f32 %v1523, %v1618
        %1620 = vmatprep.mubr.f32.mxu0 %v955
        %1621 = vmatmul.mubr.f32.gmra.mrb[0].mxu0 %v954
        %v1622 = vpop.f32.mrb[0].mxu0
        %v1623 = vadd.f32 %v1519, %v1622
        %v1624 = vpop.f32.mrb[0].mxu0
        %v1625 = vadd.f32 %v1523, %v1624
        %1626 = vmatprep.mubr.f32.mxu0 %v957
        %1627 = vmatmul.mubr.f32.gmra.mrb[0].mxu0 %v956
        %v1628 = vpop.f32.mrb[0].mxu0
        %v1629 = vadd.f32 %v1519, %v1628
        %v1630 = vpop.f32.mrb[0].mxu0
        %v1631 = vadd.f32 %v1523, %v1630
        %1632 = vmatprep.mubr.f32.mxu0 %v959
        %1633 = vmatmul.mubr.f32.gmra.mrb[0].mxu0 %v958
        %v1634 = vpop.f32.mrb[0].mxu0
        %v1635 = vadd.f32 %v1519, %v1634
        %v1636 = vpop.f32.mrb[0].mxu0
        %v1637 = vadd.f32 %v1523, %v1636
        %1638 = vmatprep.mubr.f32.mxu0 %v961
        %1639 = vmatmul.mubr.f32.gmra.mrb[0].mxu0 %v960
        %v1640 = vpop.f32.mrb[0].mxu0
        %v1641 = vadd.f32 %v1519, %v1640
        %v1642 = vpop.f32.mrb[0].mxu0
        %v1643 = vadd.f32 %v1523, %v1642
        %1644 = vmatprep.mubr.f32.mxu0 %v963
        %1645 = vmatmul.mubr.f32.gmra.mrb[0].mxu0 %v962
        %v1646 = vpop.f32.mrb[0].mxu0
        %v1647 = vadd.f32 %v1519, %v1646
        %v1648 = vpop.f32.mrb[0].mxu0
        %v1649 = vadd.f32 %v1523, %v1648
        %1650 = vmatprep.mubr.f32.mxu0 %v965
        %1651 = vmatmul.mubr.f32.gmra.mrb[0].mxu0 %v964
        %v1652 = vpop.f32.mrb[0].mxu0
        %v1653 = vadd.f32 %v1519, %v1652
        %v1654 = vpop.f32.mrb[0].mxu0
        %v1655 = vadd.f32 %v1523, %v1654
        %1656 = vmatprep.mubr.f32.mxu0 %v967
        %1657 = vmatmul.mubr.f32.gmra.mrb[0].mxu0 %v966
        %v1658 = vpop.f32.mrb[0].mxu0
        %v1659 = vadd.f32 %v1519, %v1658
        %v1660 = vpop.f32.mrb[0].mxu0
        %v1661 = vadd.f32 %v1523, %v1660
        %1662 = vmatprep.mubr.f32.mxu0 %v969
        %1663 = vmatmul.mubr.f32.gmra.mrb[0].mxu0 %v968
        %v1664 = vpop.f32.mrb[0].mxu0
        %v1665 = vadd.f32 %v1519, %v1664
        %v1666 = vpop.f32.mrb[0].mxu0
        %v1667 = vadd.f32 %v1523, %v1666
        %1668 = vmatprep.mubr.f32.mxu0 %v971
        %1669 = vmatmul.mubr.f32.gmra.mrb[0].mxu0 %v970
        %v1670 = vpop.f32.mrb[0].mxu0
        %v1671 = vadd.f32 %v1519, %v1670
        %v1672 = vpop.f32.mrb[0].mxu0
        %v1673 = vadd.f32 %v1523, %v1672
        %1674 = vmatprep.mubr.f32.mxu0 %v973
        %1675 = vmatmul.mubr.f32.gmra.mrb[0].mxu0 %v972
        %v1676 = vpop.f32.mrb[0].mxu0
        %v1677 = vadd.f32 %v1519, %v1676
        %v1678 = vpop.f32.mrb[0].mxu0
        %v1679 = vadd.f32 %v1523, %v1678
        %1680 = vmatprep.mubr.f32.mxu0 %v975
        %1681 = vmatmul.mubr.f32.gmra.mrb[0].mxu0 %v974
        %v1682 = vpop.f32.mrb[0].mxu0
        %v1683 = vadd.f32 %v1519, %v1682
        %v1684 = vpop.f32.mrb[0].mxu0
        %v1685 = vadd.f32 %v1523, %v1684
        %1686 = vdwg.mxu0
        %v1687 = vld [vmem:[%s505] sm:$0x1]
        %1688 = vmatprep.subr.mxu0 0.0
        %1689 = vmatpush1.xpose.msra.mxu0 %v1356
        %1690 = vmatprep.subr.mxu0 0.0
        %1691 = vmatpush1.xpose.msra.mxu0 %v1362
        %1692 = vmatprep.subr.mxu0 0.0
        %1693 = vmatpush1.xpose.msra.mxu0 %v1368
        %1694 = vmatprep.subr.mxu0 0.0
        %1695 = vmatpush1.xpose.msra.mxu0 %v1374
        %1696 = vmatprep.subr.mxu0 0.0
        %1697 = vmatpush1.xpose.msra.mxu0 %v1380
        %1698 = vmatprep.subr.mxu0 0.0
        %1699 = vmatpush1.xpose.msra.mxu0 %v1386
        %1700 = vmatprep.subr.mxu0 0.0
        %1701 = vmatpush1.xpose.msra.mxu0 %v1392
        %1702 = vmatprep.subr.mxu0 0.0
        %1703 = vmatpush1.xpose.msra.mxu0 %v1398
        %1704 = vmatprep.subr.mxu0 0.0
        %1705 = vmatpush1.xpose.msra.mxu0 %v1404
        %1706 = vmatprep.subr.mxu0 0.0
        %1707 = vmatpush1.xpose.msra.mxu0 %v1410
        %1708 = vmatprep.subr.mxu0 0.0
        %1709 = vmatpush1.xpose.msra.mxu0 %v1416
        %1710 = vmatprep.subr.mxu0 0.0
        %1711 = vmatpush1.xpose.msra.mxu0 %v1422
        %1712 = vmatprep.subr.mxu0 0.0
        %1713 = vmatpush1.xpose.msra.mxu0 %v1428
        %1714 = vmatprep.subr.mxu0 0.0
        %1715 = vmatpush1.xpose.msra.mxu0 %v1434
        %1716 = vmatprep.subr.mxu0 0.0
        %1717 = vmatpush1.xpose.msra.mxu0 %v1440
        %1718 = vmatprep.subr.mxu0 0.0
        %1719 = vmatpush1.xpose.msra.mxu0 %v1446
        %1720 = vmatprep.subr.mxu0 0.0
        %1721 = vmatpush1.xpose.msra.mxu0 0.0
        %1722 = vmatprep.subr.mxu0 0.0
        %1723 = vmatpush1.xpose.msra.mxu0 0.0
        %1724 = vmatprep.subr.mxu0 0.0
        %1725 = vmatpush1.xpose.msra.mxu0 0.0
        %1726 = vmatprep.subr.mxu0 0.0
        %1727 = vmatpush1.xpose.msra.mxu0 0.0
        %1728 = vmatprep.subr.mxu0 0.0
        %1729 = vmatpush1.xpose.msra.mxu0 0.0
        %1730 = vmatprep.subr.mxu0 0.0
        %1731 = vmatpush1.xpose.msra.mxu0 0.0
        %1732 = vmatprep.subr.mxu0 0.0
        %1733 = vmatpush1.xpose.msra.mxu0 0.0
        %1734 = vmatprep.subr.mxu0 0.0
        %1735 = vmatpush1.xpose.msra.mxu0 0.0
        %1736 = vmatprep.subr.mxu0 0.0
        %1737 = vmatpush1.xpose.msra.mxu0 0.0
        %1738 = vmatprep.subr.mxu0 0.0
        %1739 = vmatpush1.xpose.msra.mxu0 0.0
        %1740 = vmatprep.subr.mxu0 0.0
        %1741 = vmatpush1.xpose.msra.mxu0 0.0
        %1742 = vmatprep.subr.mxu0 0.0
        %1743 = vmatpush1.xpose.msra.mxu0 0.0
        %1744 = vmatprep.subr.mxu0 0.0
        %1745 = vmatpush1.xpose.msra.mxu0 0.0
        %1746 = vmatprep.subr.mxu0 0.0
        %1747 = vmatpush1.xpose.msra.mxu0 0.0
        %1748 = vmatprep.subr.mxu0 0.0
        %1749 = vmatpush1.xpose.msra.mxu0 0.0
        %1750 = vmatprep.subr.mxu0 0.0
        %1751 = vmatpush1.xpose.msra.mxu0 0.0
        %1752 = vmatprep.mubr.f32.mxu0 0.0
        %1753 = vmatmul.mubr.f32.gmra.mrb[0].mxu0 %v1119
        %v1754 = vpop.f32.mrb[0].mxu0
        %v1755 = vadd.f32 0.0, %v1754
        %v1756 = vpop.f32.mrb[0].mxu0
        %1757 = vmatprep.mubr.f32.mxu0 0.0
        %1758 = vmatmul.mubr.f32.gmra.mrb[0].mxu0 %v1125
        %v1759 = vpop.f32.mrb[0].mxu0
        %v1760 = vadd.f32 0.0, %v1759
        %v1761 = vpop.f32.mrb[0].mxu0
        %1762 = vmatprep.mubr.f32.mxu0 0.0
        %1763 = vmatmul.mubr.f32.gmra.mrb[0].mxu0 %v1131
        %v1764 = vpop.f32.mrb[0].mxu0
        %v1765 = vadd.f32 0.0, %v1764
        %v1766 = vpop.f32.mrb[0].mxu0
        %1767 = vmatprep.mubr.f32.mxu0 0.0
        %1768 = vmatmul.mubr.f32.gmra.mrb[0].mxu0 %v1137
        %v1769 = vpop.f32.mrb[0].mxu0
        %v1770 = vadd.f32 0.0, %v1769
        %v1771 = vpop.f32.mrb[0].mxu0
        %1772 = vmatprep.mubr.f32.mxu0 0.0
        %1773 = vmatmul.mubr.f32.gmra.mrb[0].mxu0 %v1143
        %v1774 = vpop.f32.mrb[0].mxu0
        %v1775 = vadd.f32 0.0, %v1774
        %v1776 = vpop.f32.mrb[0].mxu0
        %1777 = vmatprep.mubr.f32.mxu0 0.0
        %1778 = vmatmul.mubr.f32.gmra.mrb[0].mxu0 %v1149
        %v1779 = vpop.f32.mrb[0].mxu0
        %v1780 = vadd.f32 0.0, %v1779
        %v1781 = vpop.f32.mrb[0].mxu0
        %1782 = vmatprep.mubr.f32.mxu0 0.0
        %1783 = vmatmul.mubr.f32.gmra.mrb[0].mxu0 %v1155
        %v1784 = vpop.f32.mrb[0].mxu0
        %v1785 = vadd.f32 0.0, %v1784
        %v1786 = vpop.f32.mrb[0].mxu0
        %1787 = vmatprep.mubr.f32.mxu0 0.0
        %1788 = vmatmul.mubr.f32.gmra.mrb[0].mxu0 %v1161
        %v1789 = vpop.f32.mrb[0].mxu0
        %v1790 = vadd.f32 0.0, %v1789
        %v1791 = vpop.f32.mrb[0].mxu0
        %1792 = vmatprep.mubr.f32.mxu0 0.0
        %1793 = vmatmul.mubr.f32.gmra.mrb[0].mxu0 %v1167
        %v1794 = vpop.f32.mrb[0].mxu0
        %v1795 = vadd.f32 0.0, %v1794
        %v1796 = vpop.f32.mrb[0].mxu0
        %1797 = vmatprep.mubr.f32.mxu0 0.0
        %1798 = vmatmul.mubr.f32.gmra.mrb[0].mxu0 %v1173
        %v1799 = vpop.f32.mrb[0].mxu0
        %v1800 = vadd.f32 0.0, %v1799
        %v1801 = vpop.f32.mrb[0].mxu0
        %1802 = vmatprep.mubr.f32.mxu0 0.0
        %1803 = vmatmul.mubr.f32.gmra.mrb[0].mxu0 %v1179
        %v1804 = vpop.f32.mrb[0].mxu0
        %v1805 = vadd.f32 0.0, %v1804
        %v1806 = vpop.f32.mrb[0].mxu0
        %1807 = vmatprep.mubr.f32.mxu0 0.0
        %1808 = vmatmul.mubr.f32.gmra.mrb[0].mxu0 %v1185
        %v1809 = vpop.f32.mrb[0].mxu0
        %v1810 = vadd.f32 0.0, %v1809
        %v1811 = vpop.f32.mrb[0].mxu0
        %1812 = vmatprep.mubr.f32.mxu0 0.0
        %1813 = vmatmul.mubr.f32.gmra.mrb[0].mxu0 %v1191
        %v1814 = vpop.f32.mrb[0].mxu0
        %v1815 = vadd.f32 0.0, %v1814
        %v1816 = vpop.f32.mrb[0].mxu0
        %1817 = vmatprep.mubr.f32.mxu0 0.0
        %1818 = vmatmul.mubr.f32.gmra.mrb[0].mxu0 %v1197
        %v1819 = vpop.f32.mrb[0].mxu0
        %v1820 = vadd.f32 0.0, %v1819
        %v1821 = vpop.f32.mrb[0].mxu0
        %1822 = vmatprep.mubr.f32.mxu0 0.0
        %1823 = vmatmul.mubr.f32.gmra.mrb[0].mxu0 %v1203
        %v1824 = vpop.f32.mrb[0].mxu0
        %v1825 = vadd.f32 0.0, %v1824
        %v1826 = vpop.f32.mrb[0].mxu0
        %1827 = vmatprep.mubr.f32.mxu0 0.0
        %1828 = vmatmul.mubr.f32.gmra.mrb[0].mxu0 %v1209
        %v1829 = vpop.f32.mrb[0].mxu0
        %v1830 = vadd.f32 0.0, %v1829
        %v1831 = vpop.f32.mrb[0].mxu0
        %1832 = vdwg.mxu0
        %v1833 = vmul.f32 %v1755, 0.088388346
        %v1834 = vmul.f32 %v1760, 0.088388346
        %v1835 = vmul.f32 %v1765, 0.088388346
        %v1836 = vmul.f32 %v1770, 0.088388346
        %v1837 = vmul.f32 %v1775, 0.088388346
        %v1838 = vmul.f32 %v1780, 0.088388346
        %v1839 = vmul.f32 %v1785, 0.088388346
        %v1840 = vmul.f32 %v1790, 0.088388346
        %v1841 = vmul.f32 %v1795, 0.088388346
        %v1842 = vmul.f32 %v1800, 0.088388346
        %v1843 = vmul.f32 %v1805, 0.088388346
        %v1844 = vmul.f32 %v1810, 0.088388346
        %v1845 = vmul.f32 %v1815, 0.088388346
        %v1846 = vmul.f32 %v1820, 0.088388346
        %v1847 = vmul.f32 %v1825, 0.088388346
        %v1848 = vmul.f32 %v1830, 0.088388346
        %vm1849 = vcmp.eq.s32.totalorder %v1687, 0
        %v1850 = vsel %vm1849, 1, 0
        %v1851 = vlaneseq
        %v1852 = vshrl.u32 %v1851, 7
        %v1853 = vsub.s32 0, %v1852
        %v1854 = vrot.slane %v1850, %v1853
        %vm1855 = vcmp.eq.s32.totalorder %v1854, 1
        %v1856 = vsel %vm1855, -1e+09, %v1833
        %v1857 = vsel %vm1855, -1e+09, %v1834
        %v1858 = vsel %vm1855, -1e+09, %v1835
        %v1859 = vsel %vm1855, -1e+09, %v1836
        %v1860 = vsel %vm1855, -1e+09, %v1837
        %v1861 = vsel %vm1855, -1e+09, %v1838
        %v1862 = vsel %vm1855, -1e+09, %v1839
        %v1863 = vsel %vm1855, -1e+09, %v1840
        %v1864 = vsel %vm1855, -1e+09, %v1841
        %v1865 = vsel %vm1855, -1e+09, %v1842
        %v1866 = vsel %vm1855, -1e+09, %v1843
        %v1867 = vsel %vm1855, -1e+09, %v1844
        %v1868 = vsel %vm1855, -1e+09, %v1845
        %v1869 = vsel %vm1855, -1e+09, %v1846
        %v1870 = vsel %vm1855, -1e+09, %v1847
        %v1871 = vsel %vm1855, -1e+09, %v1848
        %1872 = vmax.xlane.f32.xlu0 %v1856
        %v1873 = vpop.xlane.xlu0 %1872
        %1874 = vmax.xlane.f32.xlu0 %v1857
        %v1875 = vpop.xlane.xlu0 %1874
        %1876 = vmax.xlane.f32.xlu0 %v1858
        %v1877 = vpop.xlane.xlu0 %1876
        %1878 = vmax.xlane.f32.xlu0 %v1859
        %v1879 = vpop.xlane.xlu0 %1878
        %1880 = vmax.xlane.f32.xlu0 %v1860
        %v1881 = vpop.xlane.xlu0 %1880
        %1882 = vmax.xlane.f32.xlu0 %v1861
        %v1883 = vpop.xlane.xlu0 %1882
        %1884 = vmax.xlane.f32.xlu0 %v1862
        %v1885 = vpop.xlane.xlu0 %1884
        %1886 = vmax.xlane.f32.xlu0 %v1863
        %v1887 = vpop.xlane.xlu0 %1886
        %1888 = vmax.xlane.f32.xlu0 %v1864
        %v1889 = vpop.xlane.xlu0 %1888
        %1890 = vmax.xlane.f32.xlu0 %v1865
        %v1891 = vpop.xlane.xlu0 %1890
        %1892 = vmax.xlane.f32.xlu0 %v1866
        %v1893 = vpop.xlane.xlu0 %1892
        %1894 = vmax.xlane.f32.xlu0 %v1867
        %v1895 = vpop.xlane.xlu0 %1894
        %1896 = vmax.xlane.f32.xlu0 %v1868
        %v1897 = vpop.xlane.xlu0 %1896
        %1898 = vmax.xlane.f32.xlu0 %v1869
        %v1899 = vpop.xlane.xlu0 %1898
        %1900 = vmax.xlane.f32.xlu0 %v1870
        %v1901 = vpop.xlane.xlu0 %1900
        %1902 = vmax.xlane.f32.xlu0 %v1871
        %v1903 = vpop.xlane.xlu0 %1902
        %v1904 = vsub.f32 %v1856, %v1873
        %v1905 = vsub.f32 %v1857, %v1875
        %v1906 = vsub.f32 %v1858, %v1877
        %v1907 = vsub.f32 %v1859, %v1879
        %v1908 = vsub.f32 %v1860, %v1881
        %v1909 = vsub.f32 %v1861, %v1883
        %v1910 = vsub.f32 %v1862, %v1885
        %v1911 = vsub.f32 %v1863, %v1887
        %v1912 = vsub.f32 %v1864, %v1889
        %v1913 = vsub.f32 %v1865, %v1891
        %v1914 = vsub.f32 %v1866, %v1893
        %v1915 = vsub.f32 %v1867, %v1895
        %v1916 = vsub.f32 %v1868, %v1897
        %v1917 = vsub.f32 %v1869, %v1899
        %v1918 = vsub.f32 %v1870, %v1901
        %v1919 = vsub.f32 %v1871, %v1903
        %v1920 = vmul.f32 %v1904, 1.442695
        %v1921 = vpow.pop %v1920
        %v1922 = vmul.f32 %v1905, 1.442695
        %v1923 = vpow.pop %v1922
        %v1924 = vmul.f32 %v1906, 1.442695
        %v1925 = vpow.pop %v1924
        %v1926 = vmul.f32 %v1907, 1.442695
        %v1927 = vpow.pop %v1926
        %v1928 = vmul.f32 %v1908, 1.442695
        %v1929 = vpow.pop %v1928
        %v1930 = vmul.f32 %v1909, 1.442695
        %v1931 = vpow.pop %v1930
        %v1932 = vmul.f32 %v1910, 1.442695
        %v1933 = vpow.pop %v1932
        %v1934 = vmul.f32 %v1911, 1.442695
        %v1935 = vpow.pop %v1934
        %v1936 = vmul.f32 %v1912, 1.442695
        %v1937 = vpow.pop %v1936
        %v1938 = vmul.f32 %v1913, 1.442695
        %v1939 = vpow.pop %v1938
        %v1940 = vmul.f32 %v1914, 1.442695
        %v1941 = vpow.pop %v1940
        %v1942 = vmul.f32 %v1915, 1.442695
        %v1943 = vpow.pop %v1942
        %v1944 = vmul.f32 %v1916, 1.442695
        %v1945 = vpow.pop %v1944
        %v1946 = vmul.f32 %v1917, 1.442695
        %v1947 = vpow.pop %v1946
        %v1948 = vmul.f32 %v1918, 1.442695
        %v1949 = vpow.pop %v1948
        %v1950 = vmul.f32 %v1919, 1.442695
        %v1951 = vpow.pop %v1950
        %1952 = vadd.xlane.f32.xlu0 %v1921
        %v1953 = vpop.xlane.xlu0 %1952
        %1954 = vadd.xlane.f32.xlu0 %v1923
        %v1955 = vpop.xlane.xlu0 %1954
        %1956 = vadd.xlane.f32.xlu0 %v1925
        %v1957 = vpop.xlane.xlu0 %1956
        %1958 = vadd.xlane.f32.xlu0 %v1927
        %v1959 = vpop.xlane.xlu0 %1958
        %1960 = vadd.xlane.f32.xlu0 %v1929
        %v1961 = vpop.xlane.xlu0 %1960
        %1962 = vadd.xlane.f32.xlu0 %v1931
        %v1963 = vpop.xlane.xlu0 %1962
        %1964 = vadd.xlane.f32.xlu0 %v1933
        %v1965 = vpop.xlane.xlu0 %1964
        %1966 = vadd.xlane.f32.xlu0 %v1935
        %v1967 = vpop.xlane.xlu0 %1966
        %1968 = vadd.xlane.f32.xlu0 %v1937
        %v1969 = vpop.xlane.xlu0 %1968
        %1970 = vadd.xlane.f32.xlu0 %v1939
        %v1971 = vpop.xlane.xlu0 %1970
        %1972 = vadd.xlane.f32.xlu0 %v1941
        %v1973 = vpop.xlane.xlu0 %1972
        %1974 = vadd.xlane.f32.xlu0 %v1943
        %v1975 = vpop.xlane.xlu0 %1974
        %1976 = vadd.xlane.f32.xlu0 %v1945
        %v1977 = vpop.xlane.xlu0 %1976
        %1978 = vadd.xlane.f32.xlu0 %v1947
        %v1979 = vpop.xlane.xlu0 %1978
        %1980 = vadd.xlane.f32.xlu0 %v1949
        %v1981 = vpop.xlane.xlu0 %1980
        %1982 = vadd.xlane.f32.xlu0 %v1951
        %v1983 = vpop.xlane.xlu0 %1982
        %v1984 = vrcp.pop %v1953
        %v1985 = vmul.f32 %v1921, %v1984
        %v1986 = vrcp.pop %v1955
        %v1987 = vmul.f32 %v1923, %v1986
        %v1988 = vrcp.pop %v1957
        %v1989 = vmul.f32 %v1925, %v1988
        %v1990 = vrcp.pop %v1959
        %v1991 = vmul.f32 %v1927, %v1990
        %v1992 = vrcp.pop %v1961
        %v1993 = vmul.f32 %v1929, %v1992
        %v1994 = vrcp.pop %v1963
        %v1995 = vmul.f32 %v1931, %v1994
        %v1996 = vrcp.pop %v1965
        %v1997 = vmul.f32 %v1933, %v1996
        %v1998 = vrcp.pop %v1967
        %v1999 = vmul.f32 %v1935, %v1998
        %v2000 = vrcp.pop %v1969
        %v2001 = vmul.f32 %v1937, %v2000
        %v2002 = vrcp.pop %v1971
        %v2003 = vmul.f32 %v1939, %v2002
        %v2004 = vrcp.pop %v1973
        %v2005 = vmul.f32 %v1941, %v2004
        %v2006 = vrcp.pop %v1975
        %v2007 = vmul.f32 %v1943, %v2006
        %v2008 = vrcp.pop %v1977
        %v2009 = vmul.f32 %v1945, %v2008
        %v2010 = vrcp.pop %v1979
        %v2011 = vmul.f32 %v1947, %v2010
        %v2012 = vrcp.pop %v1981
        %v2013 = vmul.f32 %v1949, %v2012
        %v2014 = vrcp.pop %v1983
        %v2015 = vmul.f32 %v1951, %v2014
        %2016 = vmatprep.subr.mxu0 0.0
        %2017 = vmatpush1.msra.mxu0 %v1593
        %2018 = vmatprep.subr.mxu0 0.0
        %2019 = vmatpush1.msra.mxu0 %v1599
        %2020 = vmatprep.subr.mxu0 0.0
        %2021 = vmatpush1.msra.mxu0 %v1605
        %2022 = vmatprep.subr.mxu0 0.0
        %2023 = vmatpush1.msra.mxu0 %v1611
        %2024 = vmatprep.subr.mxu0 0.0
        %2025 = vmatpush1.msra.mxu0 %v1617
        %2026 = vmatprep.subr.mxu0 0.0
        %2027 = vmatpush1.msra.mxu0 %v1623
        %2028 = vmatprep.subr.mxu0 0.0
        %2029 = vmatpush1.msra.mxu0 %v1629
        %2030 = vmatprep.subr.mxu0 0.0
        %2031 = vmatpush1.msra.mxu0 %v1635
        %2032 = vmatprep.subr.mxu0 0.0
        %2033 = vmatpush1.msra.mxu0 %v1641
        %2034 = vmatprep.subr.mxu0 0.0
        %2035 = vmatpush1.msra.mxu0 %v1647
        %2036 = vmatprep.subr.mxu0 0.0
        %2037 = vmatpush1.msra.mxu0 %v1653
        %2038 = vmatprep.subr.mxu0 0.0
        %2039 = vmatpush1.msra.mxu0 %v1659
        %2040 = vmatprep.subr.mxu0 0.0
        %2041 = vmatpush1.msra.mxu0 %v1665
        %2042 = vmatprep.subr.mxu0 0.0
        %2043 = vmatpush1.msra.mxu0 %v1671
        %2044 = vmatprep.subr.mxu0 0.0
        %2045 = vmatpush1.msra.mxu0 %v1677
        %2046 = vmatprep.subr.mxu0 0.0
        %2047 = vmatpush1.msra.mxu0 %v1683
        %2048 = vmatprep.subr.mxu0 0.0
        %2049 = vmatpush1.msra.mxu0 0.0
        %2050 = vmatprep.subr.mxu0 0.0
        %2051 = vmatpush1.msra.mxu0 0.0
        %2052 = vmatprep.subr.mxu0 0.0
        %2053 = vmatpush1.msra.mxu0 0.0
        %2054 = vmatprep.subr.mxu0 0.0
        %2055 = vmatpush1.msra.mxu0 0.0
        %2056 = vmatprep.subr.mxu0 0.0
        %2057 = vmatpush1.msra.mxu0 0.0
        %2058 = vmatprep.subr.mxu0 0.0
        %2059 = vmatpush1.msra.mxu0 0.0
        %2060 = vmatprep.subr.mxu0 0.0
        %2061 = vmatpush1.msra.mxu0 0.0
        %2062 = vmatprep.subr.mxu0 0.0
        %2063 = vmatpush1.msra.mxu0 0.0
        %2064 = vmatprep.subr.mxu0 0.0
        %2065 = vmatpush1.msra.mxu0 0.0
        %2066 = vmatprep.subr.mxu0 0.0
        %2067 = vmatpush1.msra.mxu0 0.0
        %2068 = vmatprep.subr.mxu0 0.0
        %2069 = vmatpush1.msra.mxu0 0.0
        %2070 = vmatprep.subr.mxu0 0.0
        %2071 = vmatpush1.msra.mxu0 0.0
        %2072 = vmatprep.subr.mxu0 0.0
        %2073 = vmatpush1.msra.mxu0 0.0
        %2074 = vmatprep.subr.mxu0 0.0
        %2075 = vmatpush1.msra.mxu0 0.0
        %2076 = vmatprep.subr.mxu0 0.0
        %2077 = vmatpush1.msra.mxu0 0.0
        %2078 = vmatprep.subr.mxu0 0.0
        %2079 = vmatpush1.msra.mxu0 0.0
        %2080 = vmatprep.mubr.f32.mxu0 0.0
        %2081 = vmatmul.mubr.f32.gmra.mrb[0].mxu0 %v1985
        %v2082 = vpop.f32.mrb[0].mxu0
        %v2083 = vadd.f32 0.0, %v2082
        %v2084 = vpop.f32.mrb[0].mxu0
        %2085 = vmatprep.mubr.f32.mxu0 0.0
        %2086 = vmatmul.mubr.f32.gmra.mrb[0].mxu0 %v1987
        %v2087 = vpop.f32.mrb[0].mxu0
        %v2088 = vadd.f32 0.0, %v2087
        %v2089 = vpop.f32.mrb[0].mxu0
        %2090 = vmatprep.mubr.f32.mxu0 0.0
        %2091 = vmatmul.mubr.f32.gmra.mrb[0].mxu0 %v1989
        %v2092 = vpop.f32.mrb[0].mxu0
        %v2093 = vadd.f32 0.0, %v2092
        %v2094 = vpop.f32.mrb[0].mxu0
        %2095 = vmatprep.mubr.f32.mxu0 0.0
        %2096 = vmatmul.mubr.f32.gmra.mrb[0].mxu0 %v1991
        %v2097 = vpop.f32.mrb[0].mxu0
        %v2098 = vadd.f32 0.0, %v2097
        %v2099 = vpop.f32.mrb[0].mxu0
        %2100 = vmatprep.mubr.f32.mxu0 0.0
        %2101 = vmatmul.mubr.f32.gmra.mrb[0].mxu0 %v1993
        %v2102 = vpop.f32.mrb[0].mxu0
        %v2103 = vadd.f32 0.0, %v2102
        %v2104 = vpop.f32.mrb[0].mxu0
        %2105 = vmatprep.mubr.f32.mxu0 0.0
        %2106 = vmatmul.mubr.f32.gmra.mrb[0].mxu0 %v1995
        %v2107 = vpop.f32.mrb[0].mxu0
        %v2108 = vadd.f32 0.0, %v2107
        %v2109 = vpop.f32.mrb[0].mxu0
        %2110 = vmatprep.mubr.f32.mxu0 0.0
        %2111 = vmatmul.mubr.f32.gmra.mrb[0].mxu0 %v1997
        %v2112 = vpop.f32.mrb[0].mxu0
        %v2113 = vadd.f32 0.0, %v2112
        %v2114 = vpop.f32.mrb[0].mxu0
        %2115 = vmatprep.mubr.f32.mxu0 0.0
        %2116 = vmatmul.mubr.f32.gmra.mrb[0].mxu0 %v1999
        %v2117 = vpop.f32.mrb[0].mxu0
        %v2118 = vadd.f32 0.0, %v2117
        %v2119 = vpop.f32.mrb[0].mxu0
        %2120 = vmatprep.mubr.f32.mxu0 0.0
        %2121 = vmatmul.mubr.f32.gmra.mrb[0].mxu0 %v2001
        %v2122 = vpop.f32.mrb[0].mxu0
        %v2123 = vadd.f32 0.0, %v2122
        %v2124 = vpop.f32.mrb[0].mxu0
        %2125 = vmatprep.mubr.f32.mxu0 0.0
        %2126 = vmatmul.mubr.f32.gmra.mrb[0].mxu0 %v2003
        %v2127 = vpop.f32.mrb[0].mxu0
        %v2128 = vadd.f32 0.0, %v2127
        %v2129 = vpop.f32.mrb[0].mxu0
        %2130 = vmatprep.mubr.f32.mxu0 0.0
        %2131 = vmatmul.mubr.f32.gmra.mrb[0].mxu0 %v2005
        %v2132 = vpop.f32.mrb[0].mxu0
        %v2133 = vadd.f32 0.0, %v2132
        %v2134 = vpop.f32.mrb[0].mxu0
        %2135 = vmatprep.mubr.f32.mxu0 0.0
        %2136 = vmatmul.mubr.f32.gmra.mrb[0].mxu0 %v2007
        %v2137 = vpop.f32.mrb[0].mxu0
        %v2138 = vadd.f32 0.0, %v2137
        %v2139 = vpop.f32.mrb[0].mxu0
        %2140 = vmatprep.mubr.f32.mxu0 0.0
        %2141 = vmatmul.mubr.f32.gmra.mrb[0].mxu0 %v2009
        %v2142 = vpop.f32.mrb[0].mxu0
        %v2143 = vadd.f32 0.0, %v2142
        %v2144 = vpop.f32.mrb[0].mxu0
        %2145 = vmatprep.mubr.f32.mxu0 0.0
        %2146 = vmatmul.mubr.f32.gmra.mrb[0].mxu0 %v2011
        %v2147 = vpop.f32.mrb[0].mxu0
        %v2148 = vadd.f32 0.0, %v2147
        %v2149 = vpop.f32.mrb[0].mxu0
        %2150 = vmatprep.mubr.f32.mxu0 0.0
        %2151 = vmatmul.mubr.f32.gmra.mrb[0].mxu0 %v2013
        %v2152 = vpop.f32.mrb[0].mxu0
        %v2153 = vadd.f32 0.0, %v2152
        %v2154 = vpop.f32.mrb[0].mxu0
        %2155 = vmatprep.mubr.f32.mxu0 0.0
        %2156 = vmatmul.mubr.f32.gmra.mrb[0].mxu0 %v2015
        %v2157 = vpop.f32.mrb[0].mxu0
        %v2158 = vadd.f32 0.0, %v2157
        %v2159 = vpop.f32.mrb[0].mxu0
        %2160 = vdwg.mxu0
        %2161 = vmatprep.subr.mxu0 0.0
        %2162 = vmatpush1.xpose.msra.mxu0 %v1358
        %2163 = vmatprep.subr.mxu0 0.0
        %2164 = vmatpush1.xpose.msra.mxu0 %v1364
        %2165 = vmatprep.subr.mxu0 0.0
        %2166 = vmatpush1.xpose.msra.mxu0 %v1370
        %2167 = vmatprep.subr.mxu0 0.0
        %2168 = vmatpush1.xpose.msra.mxu0 %v1376
        %2169 = vmatprep.subr.mxu0 0.0
        %2170 = vmatpush1.xpose.msra.mxu0 %v1382
        %2171 = vmatprep.subr.mxu0 0.0
        %2172 = vmatpush1.xpose.msra.mxu0 %v1388
        %2173 = vmatprep.subr.mxu0 0.0
        %2174 = vmatpush1.xpose.msra.mxu0 %v1394
        %2175 = vmatprep.subr.mxu0 0.0
        %2176 = vmatpush1.xpose.msra.mxu0 %v1400
        %2177 = vmatprep.subr.mxu0 0.0
        %2178 = vmatpush1.xpose.msra.mxu0 %v1406
        %2179 = vmatprep.subr.mxu0 0.0
        %2180 = vmatpush1.xpose.msra.mxu0 %v1412
        %2181 = vmatprep.subr.mxu0 0.0
        %2182 = vmatpush1.xpose.msra.mxu0 %v1418
        %2183 = vmatprep.subr.mxu0 0.0
        %2184 = vmatpush1.xpose.msra.mxu0 %v1424
        %2185 = vmatprep.subr.mxu0 0.0
        %2186 = vmatpush1.xpose.msra.mxu0 %v1430
        %2187 = vmatprep.subr.mxu0 0.0
        %2188 = vmatpush1.xpose.msra.mxu0 %v1436
        %2189 = vmatprep.subr.mxu0 0.0
        %2190 = vmatpush1.xpose.msra.mxu0 %v1442
        %2191 = vmatprep.subr.mxu0 0.0
        %2192 = vmatpush1.xpose.msra.mxu0 %v1448
        %2193 = vmatprep.subr.mxu0 0.0
        %2194 = vmatpush1.xpose.msra.mxu0 0.0
        %2195 = vmatprep.subr.mxu0 0.0
        %2196 = vmatpush1.xpose.msra.mxu0 0.0
        %2197 = vmatprep.subr.mxu0 0.0
        %2198 = vmatpush1.xpose.msra.mxu0 0.0
        %2199 = vmatprep.subr.mxu0 0.0
        %2200 = vmatpush1.xpose.msra.mxu0 0.0
        %2201 = vmatprep.subr.mxu0 0.0
        %2202 = vmatpush1.xpose.msra.mxu0 0.0
        %2203 = vmatprep.subr.mxu0 0.0
        %2204 = vmatpush1.xpose.msra.mxu0 0.0
        %2205 = vmatprep.subr.mxu0 0.0
        %2206 = vmatpush1.xpose.msra.mxu0 0.0
        %2207 = vmatprep.subr.mxu0 0.0
        %2208 = vmatpush1.xpose.msra.mxu0 0.0
        %2209 = vmatprep.subr.mxu0 0.0
        %2210 = vmatpush1.xpose.msra.mxu0 0.0
        %2211 = vmatprep.subr.mxu0 0.0
        %2212 = vmatpush1.xpose.msra.mxu0 0.0
        %2213 = vmatprep.subr.mxu0 0.0
        %2214 = vmatpush1.xpose.msra.mxu0 0.0
        %2215 = vmatprep.subr.mxu0 0.0
        %2216 = vmatpush1.xpose.msra.mxu0 0.0
        %2217 = vmatprep.subr.mxu0 0.0
        %2218 = vmatpush1.xpose.msra.mxu0 0.0
        %2219 = vmatprep.subr.mxu0 0.0
        %2220 = vmatpush1.xpose.msra.mxu0 0.0
        %2221 = vmatprep.subr.mxu0 0.0
        %2222 = vmatpush1.xpose.msra.mxu0 0.0
        %2223 = vmatprep.subr.mxu0 0.0
        %2224 = vmatpush1.xpose.msra.mxu0 0.0
        %2225 = vmatprep.mubr.f32.mxu0 0.0
        %2226 = vmatmul.mubr.f32.gmra.mrb[0].mxu0 %v1121
        %v2227 = vpop.f32.mrb[0].mxu0
        %v2228 = vadd.f32 0.0, %v2227
        %v2229 = vpop.f32.mrb[0].mxu0
        %2230 = vmatprep.mubr.f32.mxu0 0.0
        %2231 = vmatmul.mubr.f32.gmra.mrb[0].mxu0 %v1127
        %v2232 = vpop.f32.mrb[0].mxu0
        %v2233 = vadd.f32 0.0, %v2232
        %v2234 = vpop.f32.mrb[0].mxu0
        %2235 = vmatprep.mubr.f32.mxu0 0.0
        %2236 = vmatmul.mubr.f32.gmra.mrb[0].mxu0 %v1133
        %v2237 = vpop.f32.mrb[0].mxu0
        %v2238 = vadd.f32 0.0, %v2237
        %v2239 = vpop.f32.mrb[0].mxu0
        %2240 = vmatprep.mubr.f32.mxu0 0.0
        %2241 = vmatmul.mubr.f32.gmra.mrb[0].mxu0 %v1139
        %v2242 = vpop.f32.mrb[0].mxu0
        %v2243 = vadd.f32 0.0, %v2242
        %v2244 = vpop.f32.mrb[0].mxu0
        %2245 = vmatprep.mubr.f32.mxu0 0.0
        %2246 = vmatmul.mubr.f32.gmra.mrb[0].mxu0 %v1145
        %v2247 = vpop.f32.mrb[0].mxu0
        %v2248 = vadd.f32 0.0, %v2247
        %v2249 = vpop.f32.mrb[0].mxu0
        %2250 = vmatprep.mubr.f32.mxu0 0.0
        %2251 = vmatmul.mubr.f32.gmra.mrb[0].mxu0 %v1151
        %v2252 = vpop.f32.mrb[0].mxu0
        %v2253 = vadd.f32 0.0, %v2252
        %v2254 = vpop.f32.mrb[0].mxu0
        %2255 = vmatprep.mubr.f32.mxu0 0.0
        %2256 = vmatmul.mubr.f32.gmra.mrb[0].mxu0 %v1157
        %v2257 = vpop.f32.mrb[0].mxu0
        %v2258 = vadd.f32 0.0, %v2257
        %v2259 = vpop.f32.mrb[0].mxu0
        %2260 = vmatprep.mubr.f32.mxu0 0.0
        %2261 = vmatmul.mubr.f32.gmra.mrb[0].mxu0 %v1163
        %v2262 = vpop.f32.mrb[0].mxu0
        %v2263 = vadd.f32 0.0, %v2262
        %v2264 = vpop.f32.mrb[0].mxu0
        %2265 = vmatprep.mubr.f32.mxu0 0.0
        %2266 = vmatmul.mubr.f32.gmra.mrb[0].mxu0 %v1169
        %v2267 = vpop.f32.mrb[0].mxu0
        %v2268 = vadd.f32 0.0, %v2267
        %v2269 = vpop.f32.mrb[0].mxu0
        %2270 = vmatprep.mubr.f32.mxu0 0.0
        %2271 = vmatmul.mubr.f32.gmra.mrb[0].mxu0 %v1175
        %v2272 = vpop.f32.mrb[0].mxu0
        %v2273 = vadd.f32 0.0, %v2272
        %v2274 = vpop.f32.mrb[0].mxu0
        %2275 = vmatprep.mubr.f32.mxu0 0.0
        %2276 = vmatmul.mubr.f32.gmra.mrb[0].mxu0 %v1181
        %v2277 = vpop.f32.mrb[0].mxu0
        %v2278 = vadd.f32 0.0, %v2277
        %v2279 = vpop.f32.mrb[0].mxu0
        %2280 = vmatprep.mubr.f32.mxu0 0.0
        %2281 = vmatmul.mubr.f32.gmra.mrb[0].mxu0 %v1187
        %v2282 = vpop.f32.mrb[0].mxu0
        %v2283 = vadd.f32 0.0, %v2282
        %v2284 = vpop.f32.mrb[0].mxu0
        %2285 = vmatprep.mubr.f32.mxu0 0.0
        %2286 = vmatmul.mubr.f32.gmra.mrb[0].mxu0 %v1193
        %v2287 = vpop.f32.mrb[0].mxu0
        %v2288 = vadd.f32 0.0, %v2287
        %v2289 = vpop.f32.mrb[0].mxu0
        %2290 = vmatprep.mubr.f32.mxu0 0.0
        %2291 = vmatmul.mubr.f32.gmra.mrb[0].mxu0 %v1199
        %v2292 = vpop.f32.mrb[0].mxu0
        %v2293 = vadd.f32 0.0, %v2292
        %v2294 = vpop.f32.mrb[0].mxu0
        %2295 = vmatprep.mubr.f32.mxu0 0.0
        %2296 = vmatmul.mubr.f32.gmra.mrb[0].mxu0 %v1205
        %v2297 = vpop.f32.mrb[0].mxu0
        %v2298 = vadd.f32 0.0, %v2297
        %v2299 = vpop.f32.mrb[0].mxu0
        %2300 = vmatprep.mubr.f32.mxu0 0.0
        %2301 = vmatmul.mubr.f32.gmra.mrb[0].mxu0 %v1211
        %v2302 = vpop.f32.mrb[0].mxu0
        %v2303 = vadd.f32 0.0, %v2302
        %v2304 = vpop.f32.mrb[0].mxu0
        %2305 = vdwg.mxu0
        %v2306 = vmul.f32 %v2228, 0.088388346
        %v2307 = vmul.f32 %v2233, 0.088388346
        %v2308 = vmul.f32 %v2238, 0.088388346
        %v2309 = vmul.f32 %v2243, 0.088388346
        %v2310 = vmul.f32 %v2248, 0.088388346
        %v2311 = vmul.f32 %v2253, 0.088388346
        %v2312 = vmul.f32 %v2258, 0.088388346
        %v2313 = vmul.f32 %v2263, 0.088388346
        %v2314 = vmul.f32 %v2268, 0.088388346
        %v2315 = vmul.f32 %v2273, 0.088388346
        %v2316 = vmul.f32 %v2278, 0.088388346
        %v2317 = vmul.f32 %v2283, 0.088388346
        %v2318 = vmul.f32 %v2288, 0.088388346
        %v2319 = vmul.f32 %v2293, 0.088388346
        %v2320 = vmul.f32 %v2298, 0.088388346
        %v2321 = vmul.f32 %v2303, 0.088388346
        %v2322 = vsel %vm1855, -1e+09, %v2306
        %v2323 = vsel %vm1855, -1e+09, %v2307
        %v2324 = vsel %vm1855, -1e+09, %v2308
        %v2325 = vsel %vm1855, -1e+09, %v2309
        %v2326 = vsel %vm1855, -1e+09, %v2310
        %v2327 = vsel %vm1855, -1e+09, %v2311
        %v2328 = vsel %vm1855, -1e+09, %v2312
        %v2329 = vsel %vm1855, -1e+09, %v2313
        %v2330 = vsel %vm1855, -1e+09, %v2314
        %v2331 = vsel %vm1855, -1e+09, %v2315
        %v2332 = vsel %vm1855, -1e+09, %v2316
        %v2333 = vsel %vm1855, -1e+09, %v2317
        %v2334 = vsel %vm1855, -1e+09, %v2318
        %v2335 = vsel %vm1855, -1e+09, %v2319
        %v2336 = vsel %vm1855, -1e+09, %v2320
        %v2337 = vsel %vm1855, -1e+09, %v2321
        %2338 = vmax.xlane.f32.xlu0 %v2322
        %v2339 = vpop.xlane.xlu0 %2338
        %2340 = vmax.xlane.f32.xlu0 %v2323
        %v2341 = vpop.xlane.xlu0 %2340
        %2342 = vmax.xlane.f32.xlu0 %v2324
        %v2343 = vpop.xlane.xlu0 %2342
        %2344 = vmax.xlane.f32.xlu0 %v2325
        %v2345 = vpop.xlane.xlu0 %2344
        %2346 = vmax.xlane.f32.xlu0 %v2326
        %v2347 = vpop.xlane.xlu0 %2346
        %2348 = vmax.xlane.f32.xlu0 %v2327
        %v2349 = vpop.xlane.xlu0 %2348
        %2350 = vmax.xlane.f32.xlu0 %v2328
        %v2351 = vpop.xlane.xlu0 %2350
        %2352 = vmax.xlane.f32.xlu0 %v2329
        %v2353 = vpop.xlane.xlu0 %2352
        %2354 = vmax.xlane.f32.xlu0 %v2330
        %v2355 = vpop.xlane.xlu0 %2354
        %2356 = vmax.xlane.f32.xlu0 %v2331
        %v2357 = vpop.xlane.xlu0 %2356
        %2358 = vmax.xlane.f32.xlu0 %v2332
        %v2359 = vpop.xlane.xlu0 %2358
        %2360 = vmax.xlane.f32.xlu0 %v2333
        %v2361 = vpop.xlane.xlu0 %2360
        %2362 = vmax.xlane.f32.xlu0 %v2334
        %v2363 = vpop.xlane.xlu0 %2362
        %2364 = vmax.xlane.f32.xlu0 %v2335
        %v2365 = vpop.xlane.xlu0 %2364
        %2366 = vmax.xlane.f32.xlu0 %v2336
        %v2367 = vpop.xlane.xlu0 %2366
        %2368 = vmax.xlane.f32.xlu0 %v2337
        %v2369 = vpop.xlane.xlu0 %2368
        %v2370 = vsub.f32 %v2322, %v2339
        %v2371 = vsub.f32 %v2323, %v2341
        %v2372 = vsub.f32 %v2324, %v2343
        %v2373 = vsub.f32 %v2325, %v2345
        %v2374 = vsub.f32 %v2326, %v2347
        %v2375 = vsub.f32 %v2327, %v2349
        %v2376 = vsub.f32 %v2328, %v2351
        %v2377 = vsub.f32 %v2329, %v2353
        %v2378 = vsub.f32 %v2330, %v2355
        %v2379 = vsub.f32 %v2331, %v2357
        %v2380 = vsub.f32 %v2332, %v2359
        %v2381 = vsub.f32 %v2333, %v2361
        %v2382 = vsub.f32 %v2334, %v2363
        %v2383 = vsub.f32 %v2335, %v2365
        %v2384 = vsub.f32 %v2336, %v2367
        %v2385 = vsub.f32 %v2337, %v2369
        %v2386 = vmul.f32 %v2370, 1.442695
        %v2387 = vpow.pop %v2386
        %v2388 = vmul.f32 %v2371, 1.442695
        %v2389 = vpow.pop %v2388
        %v2390 = vmul.f32 %v2372, 1.442695
        %v2391 = vpow.pop %v2390
        %v2392 = vmul.f32 %v2373, 1.442695
        %v2393 = vpow.pop %v2392
        %v2394 = vmul.f32 %v2374, 1.442695
        %v2395 = vpow.pop %v2394
        %v2396 = vmul.f32 %v2375, 1.442695
        %v2397 = vpow.pop %v2396
        %v2398 = vmul.f32 %v2376, 1.442695
        %v2399 = vpow.pop %v2398
        %v2400 = vmul.f32 %v2377, 1.442695
        %v2401 = vpow.pop %v2400
        %v2402 = vmul.f32 %v2378, 1.442695
        %v2403 = vpow.pop %v2402
        %v2404 = vmul.f32 %v2379, 1.442695
        %v2405 = vpow.pop %v2404
        %v2406 = vmul.f32 %v2380, 1.442695
        %v2407 = vpow.pop %v2406
        %v2408 = vmul.f32 %v2381, 1.442695
        %v2409 = vpow.pop %v2408
        %v2410 = vmul.f32 %v2382, 1.442695
        %v2411 = vpow.pop %v2410
        %v2412 = vmul.f32 %v2383, 1.442695
        %v2413 = vpow.pop %v2412
        %v2414 = vmul.f32 %v2384, 1.442695
        %v2415 = vpow.pop %v2414
        %v2416 = vmul.f32 %v2385, 1.442695
        %v2417 = vpow.pop %v2416
        %2418 = vadd.xlane.f32.xlu0 %v2387
        %v2419 = vpop.xlane.xlu0 %2418
        %2420 = vadd.xlane.f32.xlu0 %v2389
        %v2421 = vpop.xlane.xlu0 %2420
        %2422 = vadd.xlane.f32.xlu0 %v2391
        %v2423 = vpop.xlane.xlu0 %2422
        %2424 = vadd.xlane.f32.xlu0 %v2393
        %v2425 = vpop.xlane.xlu0 %2424
        %2426 = vadd.xlane.f32.xlu0 %v2395
        %v2427 = vpop.xlane.xlu0 %2426
        %2428 = vadd.xlane.f32.xlu0 %v2397
        %v2429 = vpop.xlane.xlu0 %2428
        %2430 = vadd.xlane.f32.xlu0 %v2399
        %v2431 = vpop.xlane.xlu0 %2430
        %2432 = vadd.xlane.f32.xlu0 %v2401
        %v2433 = vpop.xlane.xlu0 %2432
        %2434 = vadd.xlane.f32.xlu0 %v2403
        %v2435 = vpop.xlane.xlu0 %2434
        %2436 = vadd.xlane.f32.xlu0 %v2405
        %v2437 = vpop.xlane.xlu0 %2436
        %2438 = vadd.xlane.f32.xlu0 %v2407
        %v2439 = vpop.xlane.xlu0 %2438
        %2440 = vadd.xlane.f32.xlu0 %v2409
        %v2441 = vpop.xlane.xlu0 %2440
        %2442 = vadd.xlane.f32.xlu0 %v2411
        %v2443 = vpop.xlane.xlu0 %2442
        %2444 = vadd.xlane.f32.xlu0 %v2413
        %v2445 = vpop.xlane.xlu0 %2444
        %2446 = vadd.xlane.f32.xlu0 %v2415
        %v2447 = vpop.xlane.xlu0 %2446
        %2448 = vadd.xlane.f32.xlu0 %v2417
        %v2449 = vpop.xlane.xlu0 %2448
        %v2450 = vrcp.pop %v2419
        %v2451 = vmul.f32 %v2387, %v2450
        %v2452 = vrcp.pop %v2421
        %v2453 = vmul.f32 %v2389, %v2452
        %v2454 = vrcp.pop %v2423
        %v2455 = vmul.f32 %v2391, %v2454
        %v2456 = vrcp.pop %v2425
        %v2457 = vmul.f32 %v2393, %v2456
        %v2458 = vrcp.pop %v2427
        %v2459 = vmul.f32 %v2395, %v2458
        %v2460 = vrcp.pop %v2429
        %v2461 = vmul.f32 %v2397, %v2460
        %v2462 = vrcp.pop %v2431
        %v2463 = vmul.f32 %v2399, %v2462
        %v2464 = vrcp.pop %v2433
        %v2465 = vmul.f32 %v2401, %v2464
        %v2466 = vrcp.pop %v2435
        %v2467 = vmul.f32 %v2403, %v2466
        %v2468 = vrcp.pop %v2437
        %v2469 = vmul.f32 %v2405, %v2468
        %v2470 = vrcp.pop %v2439
        %v2471 = vmul.f32 %v2407, %v2470
        %v2472 = vrcp.pop %v2441
        %v2473 = vmul.f32 %v2409, %v2472
        %v2474 = vrcp.pop %v2443
        %v2475 = vmul.f32 %v2411, %v2474
        %v2476 = vrcp.pop %v2445
        %v2477 = vmul.f32 %v2413, %v2476
        %v2478 = vrcp.pop %v2447
        %v2479 = vmul.f32 %v2415, %v2478
        %v2480 = vrcp.pop %v2449
        %v2481 = vmul.f32 %v2417, %v2480
        %2482 = vmatprep.subr.mxu0 0.0
        %2483 = vmatpush1.msra.mxu0 %v1595
        %2484 = vmatprep.subr.mxu0 0.0
        %2485 = vmatpush1.msra.mxu0 %v1601
        %2486 = vmatprep.subr.mxu0 0.0
        %2487 = vmatpush1.msra.mxu0 %v1607
        %2488 = vmatprep.subr.mxu0 0.0
        %2489 = vmatpush1.msra.mxu0 %v1613
        %2490 = vmatprep.subr.mxu0 0.0
        %2491 = vmatpush1.msra.mxu0 %v1619
        %2492 = vmatprep.subr.mxu0 0.0
        %2493 = vmatpush1.msra.mxu0 %v1625
        %2494 = vmatprep.subr.mxu0 0.0
        %2495 = vmatpush1.msra.mxu0 %v1631
        %2496 = vmatprep.subr.mxu0 0.0
        %2497 = vmatpush1.msra.mxu0 %v1637
        %2498 = vmatprep.subr.mxu0 0.0
        %2499 = vmatpush1.msra.mxu0 %v1643
        %2500 = vmatprep.subr.mxu0 0.0
        %2501 = vmatpush1.msra.mxu0 %v1649
        %2502 = vmatprep.subr.mxu0 0.0
        %2503 = vmatpush1.msra.mxu0 %v1655
        %2504 = vmatprep.subr.mxu0 0.0
        %2505 = vmatpush1.msra.mxu0 %v1661
        %2506 = vmatprep.subr.mxu0 0.0
        %2507 = vmatpush1.msra.mxu0 %v1667
        %2508 = vmatprep.subr.mxu0 0.0
        %2509 = vmatpush1.msra.mxu0 %v1673
        %2510 = vmatprep.subr.mxu0 0.0
        %2511 = vmatpush1.msra.mxu0 %v1679
        %2512 = vmatprep.subr.mxu0 0.0
        %2513 = vmatpush1.msra.mxu0 %v1685
        %2514 = vmatprep.subr.mxu0 0.0
        %2515 = vmatpush1.msra.mxu0 0.0
        %2516 = vmatprep.subr.mxu0 0.0
        %2517 = vmatpush1.msra.mxu0 0.0
        %2518 = vmatprep.subr.mxu0 0.0
        %2519 = vmatpush1.msra.mxu0 0.0
        %2520 = vmatprep.subr.mxu0 0.0
        %2521 = vmatpush1.msra.mxu0 0.0
        %2522 = vmatprep.subr.mxu0 0.0
        %2523 = vmatpush1.msra.mxu0 0.0
        %2524 = vmatprep.subr.mxu0 0.0
        %2525 = vmatpush1.msra.mxu0 0.0
        %2526 = vmatprep.subr.mxu0 0.0
        %2527 = vmatpush1.msra.mxu0 0.0
        %2528 = vmatprep.subr.mxu0 0.0
        %2529 = vmatpush1.msra.mxu0 0.0
        %2530 = vmatprep.subr.mxu0 0.0
        %2531 = vmatpush1.msra.mxu0 0.0
        %2532 = vmatprep.subr.mxu0 0.0
        %2533 = vmatpush1.msra.mxu0 0.0
        %2534 = vmatprep.subr.mxu0 0.0
        %2535 = vmatpush1.msra.mxu0 0.0
        %2536 = vmatprep.subr.mxu0 0.0
        %2537 = vmatpush1.msra.mxu0 0.0
        %2538 = vmatprep.subr.mxu0 0.0
        %2539 = vmatpush1.msra.mxu0 0.0
        %2540 = vmatprep.subr.mxu0 0.0
        %2541 = vmatpush1.msra.mxu0 0.0
        %2542 = vmatprep.subr.mxu0 0.0
        %2543 = vmatpush1.msra.mxu0 0.0
        %2544 = vmatprep.subr.mxu0 0.0
        %2545 = vmatpush1.msra.mxu0 0.0
        %2546 = vmatprep.mubr.f32.mxu0 0.0
        %2547 = vmatmul.mubr.f32.gmra.mrb[0].mxu0 %v2451
        %v2548 = vpop.f32.mrb[0].mxu0
        %v2549 = vadd.f32 0.0, %v2548
        %v2550 = vpop.f32.mrb[0].mxu0
        %2551 = vmatprep.mubr.f32.mxu0 0.0
        %2552 = vmatmul.mubr.f32.gmra.mrb[0].mxu0 %v2453
        %v2553 = vpop.f32.mrb[0].mxu0
        %v2554 = vadd.f32 0.0, %v2553
        %v2555 = vpop.f32.mrb[0].mxu0
        %2556 = vmatprep.mubr.f32.mxu0 0.0
        %2557 = vmatmul.mubr.f32.gmra.mrb[0].mxu0 %v2455
        %v2558 = vpop.f32.mrb[0].mxu0
        %v2559 = vadd.f32 0.0, %v2558
        %v2560 = vpop.f32.mrb[0].mxu0
        %2561 = vmatprep.mubr.f32.mxu0 0.0
        %2562 = vmatmul.mubr.f32.gmra.mrb[0].mxu0 %v2457
        %v2563 = vpop.f32.mrb[0].mxu0
        %v2564 = vadd.f32 0.0, %v2563
        %v2565 = vpop.f32.mrb[0].mxu0
        %2566 = vmatprep.mubr.f32.mxu0 0.0
        %2567 = vmatmul.mubr.f32.gmra.mrb[0].mxu0 %v2459
        %v2568 = vpop.f32.mrb[0].mxu0
        %v2569 = vadd.f32 0.0, %v2568
        %v2570 = vpop.f32.mrb[0].mxu0
        %2571 = vmatprep.mubr.f32.mxu0 0.0
        %2572 = vmatmul.mubr.f32.gmra.mrb[0].mxu0 %v2461
        %v2573 = vpop.f32.mrb[0].mxu0
        %v2574 = vadd.f32 0.0, %v2573
        %v2575 = vpop.f32.mrb[0].mxu0
        %2576 = vmatprep.mubr.f32.mxu0 0.0
        %2577 = vmatmul.mubr.f32.gmra.mrb[0].mxu0 %v2463
        %v2578 = vpop.f32.mrb[0].mxu0
        %v2579 = vadd.f32 0.0, %v2578
        %v2580 = vpop.f32.mrb[0].mxu0
        %2581 = vmatprep.mubr.f32.mxu0 0.0
        %2582 = vmatmul.mubr.f32.gmra.mrb[0].mxu0 %v2465
        %v2583 = vpop.f32.mrb[0].mxu0
        %v2584 = vadd.f32 0.0, %v2583
        %v2585 = vpop.f32.mrb[0].mxu0
        %2586 = vmatprep.mubr.f32.mxu0 0.0
        %2587 = vmatmul.mubr.f32.gmra.mrb[0].mxu0 %v2467
        %v2588 = vpop.f32.mrb[0].mxu0
        %v2589 = vadd.f32 0.0, %v2588
        %v2590 = vpop.f32.mrb[0].mxu0
        %2591 = vmatprep.mubr.f32.mxu0 0.0
        %2592 = vmatmul.mubr.f32.gmra.mrb[0].mxu0 %v2469
        %v2593 = vpop.f32.mrb[0].mxu0
        %v2594 = vadd.f32 0.0, %v2593
        %v2595 = vpop.f32.mrb[0].mxu0
        %2596 = vmatprep.mubr.f32.mxu0 0.0
        %2597 = vmatmul.mubr.f32.gmra.mrb[0].mxu0 %v2471
        %v2598 = vpop.f32.mrb[0].mxu0
        %v2599 = vadd.f32 0.0, %v2598
        %v2600 = vpop.f32.mrb[0].mxu0
        %2601 = vmatprep.mubr.f32.mxu0 0.0
        %2602 = vmatmul.mubr.f32.gmra.mrb[0].mxu0 %v2473
        %v2603 = vpop.f32.mrb[0].mxu0
        %v2604 = vadd.f32 0.0, %v2603
        %v2605 = vpop.f32.mrb[0].mxu0
        %2606 = vmatprep.mubr.f32.mxu0 0.0
        %2607 = vmatmul.mubr.f32.gmra.mrb[0].mxu0 %v2475
        %v2608 = vpop.f32.mrb[0].mxu0
        %v2609 = vadd.f32 0.0, %v2608
        %v2610 = vpop.f32.mrb[0].mxu0
        %2611 = vmatprep.mubr.f32.mxu0 0.0
        %2612 = vmatmul.mubr.f32.gmra.mrb[0].mxu0 %v2477
        %v2613 = vpop.f32.mrb[0].mxu0
        %v2614 = vadd.f32 0.0, %v2613
        %v2615 = vpop.f32.mrb[0].mxu0
        %2616 = vmatprep.mubr.f32.mxu0 0.0
        %2617 = vmatmul.mubr.f32.gmra.mrb[0].mxu0 %v2479
        %v2618 = vpop.f32.mrb[0].mxu0
        %v2619 = vadd.f32 0.0, %v2618
        %v2620 = vpop.f32.mrb[0].mxu0
        %2621 = vmatprep.mubr.f32.mxu0 0.0
        %2622 = vmatmul.mubr.f32.gmra.mrb[0].mxu0 %v2481
        %v2623 = vpop.f32.mrb[0].mxu0
        %v2624 = vadd.f32 0.0, %v2623
        %v2625 = vpop.f32.mrb[0].mxu0
        %2626 = vdwg.mxu0
        %v2627 = vld [vmem:[#allocation12] sm:$0xff]
        %v2628 = vld [vmem:[#allocation12 + $0x8] sm:$0xff]
        %v2629 = vld [vmem:[#allocation12 + $0x10] sm:$0xff]
        %v2630 = vld [vmem:[#allocation12 + $0x18] sm:$0xff]
        %v2631 = vld [vmem:[#allocation12 + $0x20] sm:$0xff]
        %v2632 = vld [vmem:[#allocation12 + $0x28] sm:$0xff]
        %v2633 = vld [vmem:[#allocation12 + $0x30] sm:$0xff]
        %v2634 = vld [vmem:[#allocation12 + $0x38] sm:$0xff]
        %v2635 = vld [vmem:[#allocation12 + $0x40] sm:$0xff]
        %v2636 = vld [vmem:[#allocation12 + $0x48] sm:$0xff]
        %v2637 = vld [vmem:[#allocation12 + $0x50] sm:$0xff]
        %v2638 = vld [vmem:[#allocation12 + $0x58] sm:$0xff]
        %v2639 = vld [vmem:[#allocation12 + $0x60] sm:$0xff]
        %v2640 = vld [vmem:[#allocation12 + $0x68] sm:$0xff]
        %v2641 = vld [vmem:[#allocation12 + $0x70] sm:$0xff]
        %v2642 = vld [vmem:[#allocation12 + $0x78] sm:$0xff]
        %v2643 = vld [vmem:[#allocation12 + $0x80] sm:$0xff]
        %v2644 = vld [vmem:[#allocation12 + $0x88] sm:$0xff]
        %v2645 = vld [vmem:[#allocation12 + $0x90] sm:$0xff]
        %v2646 = vld [vmem:[#allocation12 + $0x98] sm:$0xff]
        %v2647 = vld [vmem:[#allocation12 + $0xa0] sm:$0xff]
        %v2648 = vld [vmem:[#allocation12 + $0xa8] sm:$0xff]
        %v2649 = vld [vmem:[#allocation12 + $0xb0] sm:$0xff]
        %v2650 = vld [vmem:[#allocation12 + $0xb8] sm:$0xff]
        %v2651 = vld [vmem:[#allocation12 + $0xc0] sm:$0xff]
        %v2652 = vld [vmem:[#allocation12 + $0xc8] sm:$0xff]
        %v2653 = vld [vmem:[#allocation12 + $0xd0] sm:$0xff]
        %v2654 = vld [vmem:[#allocation12 + $0xd8] sm:$0xff]
        %v2655 = vld [vmem:[#allocation12 + $0xe0] sm:$0xff]
        %v2656 = vld [vmem:[#allocation12 + $0xe8] sm:$0xff]
        %v2657 = vld [vmem:[#allocation12 + $0xf0] sm:$0xff]
        %v2658 = vld [vmem:[#allocation12 + $0xf8] sm:$0xff]
        %v2659 = vld [vmem:[#allocation12 + $0x100] sm:$0xff]
        %v2660 = vld [vmem:[#allocation12 + $0x108] sm:$0xff]
        %v2661 = vld [vmem:[#allocation12 + $0x110] sm:$0xff]
        %v2662 = vld [vmem:[#allocation12 + $0x118] sm:$0xff]
        %v2663 = vld [vmem:[#allocation12 + $0x120] sm:$0xff]
        %v2664 = vld [vmem:[#allocation12 + $0x128] sm:$0xff]
        %v2665 = vld [vmem:[#allocation12 + $0x130] sm:$0xff]
        %v2666 = vld [vmem:[#allocation12 + $0x138] sm:$0xff]
        %v2667 = vld [vmem:[#allocation12 + $0x140] sm:$0xff]
        %v2668 = vld [vmem:[#allocation12 + $0x148] sm:$0xff]
        %v2669 = vld [vmem:[#allocation12 + $0x150] sm:$0xff]
        %v2670 = vld [vmem:[#allocation12 + $0x158] sm:$0xff]
        %v2671 = vld [vmem:[#allocation12 + $0x160] sm:$0xff]
        %v2672 = vld [vmem:[#allocation12 + $0x168] sm:$0xff]
        %v2673 = vld [vmem:[#allocation12 + $0x170] sm:$0xff]
        %v2674 = vld [vmem:[#allocation12 + $0x178] sm:$0xff]
        %v2675 = vld [vmem:[#allocation12 + $0x180] sm:$0xff]
        %v2676 = vld [vmem:[#allocation12 + $0x188] sm:$0xff]
        %v2677 = vld [vmem:[#allocation12 + $0x190] sm:$0xff]
        %v2678 = vld [vmem:[#allocation12 + $0x198] sm:$0xff]
        %v2679 = vld [vmem:[#allocation12 + $0x1a0] sm:$0xff]
        %v2680 = vld [vmem:[#allocation12 + $0x1a8] sm:$0xff]
        %v2681 = vld [vmem:[#allocation12 + $0x1b0] sm:$0xff]
        %v2682 = vld [vmem:[#allocation12 + $0x1b8] sm:$0xff]
        %v2683 = vld [vmem:[#allocation12 + $0x1c0] sm:$0xff]
        %v2684 = vld [vmem:[#allocation12 + $0x1c8] sm:$0xff]
        %v2685 = vld [vmem:[#allocation12 + $0x1d0] sm:$0xff]
        %v2686 = vld [vmem:[#allocation12 + $0x1d8] sm:$0xff]
        %v2687 = vld [vmem:[#allocation12 + $0x1e0] sm:$0xff]
        %v2688 = vld [vmem:[#allocation12 + $0x1e8] sm:$0xff]
        %v2689 = vld [vmem:[#allocation12 + $0x1f0] sm:$0xff]
        %v2690 = vld [vmem:[#allocation12 + $0x1f8] sm:$0xff]
        %v2691 = vld [vmem:[%s9] sm:$0x3]
        %v2693 = vlaneseq
        %v2694 = vshrl.u32 %v2693, 7
        %v2695 = vsub.s32 0, %v2694
        %v2696 = vrot.slane %v2691, %v2695
        %v2697 = vlaneseq
        %v2698 = vshrl.u32 %v2697, 7
        %v2699 = vsub.s32 1, %v2698
        %v2700 = vrot.slane %v2691, %v2699
        %2703 = vmatprep.subr.mxu0 %v2628
        %2704 = vmatpush1.msra.mxu0 %v2627
        %2705 = vmatprep.subr.mxu0 %v2630
        %2706 = vmatpush1.msra.mxu0 %v2629
        %2707 = vmatprep.subr.mxu0 %v2632
        %2708 = vmatpush1.msra.mxu0 %v2631
        %2709 = vmatprep.subr.mxu0 %v2634
        %2710 = vmatpush1.msra.mxu0 %v2633
        %2711 = vmatprep.subr.mxu0 %v2636
        %2712 = vmatpush1.msra.mxu0 %v2635
        %2713 = vmatprep.subr.mxu0 %v2638
        %2714 = vmatpush1.msra.mxu0 %v2637
        %2715 = vmatprep.subr.mxu0 %v2640
        %2716 = vmatpush1.msra.mxu0 %v2639
        %2717 = vmatprep.subr.mxu0 %v2642
        %2718 = vmatpush1.msra.mxu0 %v2641
        %2719 = vmatprep.subr.mxu0 %v2644
        %2720 = vmatpush1.msra.mxu0 %v2643
        %2721 = vmatprep.subr.mxu0 %v2646
        %2722 = vmatpush1.msra.mxu0 %v2645
        %2723 = vmatprep.subr.mxu0 %v2648
        %2724 = vmatpush1.msra.mxu0 %v2647
        %2725 = vmatprep.subr.mxu0 %v2650
        %2726 = vmatpush1.msra.mxu0 %v2649
        %2727 = vmatprep.subr.mxu0 %v2652
        %2728 = vmatpush1.msra.mxu0 %v2651
        %2729 = vmatprep.subr.mxu0 %v2654
        %2730 = vmatpush1.msra.mxu0 %v2653
        %2731 = vmatprep.subr.mxu0 %v2656
        %2732 = vmatpush1.msra.mxu0 %v2655
        %2733 = vmatprep.subr.mxu0 %v2658
        %2734 = vmatpush1.msra.mxu0 %v2657
        %2735 = vmatprep.subr.mxu0 %v2660
        %2736 = vmatpush1.msra.mxu0 %v2659
        %2737 = vmatprep.subr.mxu0 %v2662
        %2738 = vmatpush1.msra.mxu0 %v2661
        %2739 = vmatprep.subr.mxu0 %v2664
        %2740 = vmatpush1.msra.mxu0 %v2663
        %2741 = vmatprep.subr.mxu0 %v2666
        %2742 = vmatpush1.msra.mxu0 %v2665
        %2743 = vmatprep.subr.mxu0 %v2668
        %2744 = vmatpush1.msra.mxu0 %v2667
        %2745 = vmatprep.subr.mxu0 %v2670
        %2746 = vmatpush1.msra.mxu0 %v2669
        %2747 = vmatprep.subr.mxu0 %v2672
        %2748 = vmatpush1.msra.mxu0 %v2671
        %2749 = vmatprep.subr.mxu0 %v2674
        %2750 = vmatpush1.msra.mxu0 %v2673
        %2751 = vmatprep.subr.mxu0 %v2676
        %2752 = vmatpush1.msra.mxu0 %v2675
        %2753 = vmatprep.subr.mxu0 %v2678
        %2754 = vmatpush1.msra.mxu0 %v2677
        %2755 = vmatprep.subr.mxu0 %v2680
        %2756 = vmatpush1.msra.mxu0 %v2679
        %2757 = vmatprep.subr.mxu0 %v2682
        %2758 = vmatpush1.msra.mxu0 %v2681
        %2759 = vmatprep.subr.mxu0 %v2684
        %2760 = vmatpush1.msra.mxu0 %v2683
        %2761 = vmatprep.subr.mxu0 %v2686
        %2762 = vmatpush1.msra.mxu0 %v2685
        %2763 = vmatprep.subr.mxu0 %v2688
        %2764 = vmatpush1.msra.mxu0 %v2687
        %2765 = vmatprep.subr.mxu0 %v2690
        %2766 = vmatpush1.msra.mxu0 %v2689
        %2767 = vmatprep.mubr.f32.mxu0 %v2549
        %2768 = vmatmul.mubr.f32.gmra.mrb[0].mxu0 %v2083
        %v2769 = vpop.f32.mrb[0].mxu0
        %v2770 = vadd.f32 %v2696, %v2769
        %v2771 = vpop.f32.mrb[0].mxu0
        %v2772 = vadd.f32 %v2700, %v2771
        %2773 = vmatprep.mubr.f32.mxu0 %v2554
        %2774 = vmatmul.mubr.f32.gmra.mrb[0].mxu0 %v2088
        %v2775 = vpop.f32.mrb[0].mxu0
        %v2776 = vadd.f32 %v2696, %v2775
        %v2777 = vpop.f32.mrb[0].mxu0
        %v2778 = vadd.f32 %v2700, %v2777
        %2779 = vmatprep.mubr.f32.mxu0 %v2559
        %2780 = vmatmul.mubr.f32.gmra.mrb[0].mxu0 %v2093
        %v2781 = vpop.f32.mrb[0].mxu0
        %v2782 = vadd.f32 %v2696, %v2781
        %v2783 = vpop.f32.mrb[0].mxu0
        %v2784 = vadd.f32 %v2700, %v2783
        %2785 = vmatprep.mubr.f32.mxu0 %v2564
        %2786 = vmatmul.mubr.f32.gmra.mrb[0].mxu0 %v2098
        %v2787 = vpop.f32.mrb[0].mxu0
        %v2788 = vadd.f32 %v2696, %v2787
        %v2789 = vpop.f32.mrb[0].mxu0
        %v2790 = vadd.f32 %v2700, %v2789
        %2791 = vmatprep.mubr.f32.mxu0 %v2569
        %2792 = vmatmul.mubr.f32.gmra.mrb[0].mxu0 %v2103
        %v2793 = vpop.f32.mrb[0].mxu0
        %v2794 = vadd.f32 %v2696, %v2793
        %v2795 = vpop.f32.mrb[0].mxu0
        %v2796 = vadd.f32 %v2700, %v2795
        %2797 = vmatprep.mubr.f32.mxu0 %v2574
        %2798 = vmatmul.mubr.f32.gmra.mrb[0].mxu0 %v2108
        %v2799 = vpop.f32.mrb[0].mxu0
        %v2800 = vadd.f32 %v2696, %v2799
        %v2801 = vpop.f32.mrb[0].mxu0
        %v2802 = vadd.f32 %v2700, %v2801
        %2803 = vmatprep.mubr.f32.mxu0 %v2579
        %2804 = vmatmul.mubr.f32.gmra.mrb[0].mxu0 %v2113
        %v2805 = vpop.f32.mrb[0].mxu0
        %v2806 = vadd.f32 %v2696, %v2805
        %v2807 = vpop.f32.mrb[0].mxu0
        %v2808 = vadd.f32 %v2700, %v2807
        %2809 = vmatprep.mubr.f32.mxu0 %v2584
        %2810 = vmatmul.mubr.f32.gmra.mrb[0].mxu0 %v2118
        %v2811 = vpop.f32.mrb[0].mxu0
        %v2812 = vadd.f32 %v2696, %v2811
        %v2813 = vpop.f32.mrb[0].mxu0
        %v2814 = vadd.f32 %v2700, %v2813
        %2815 = vmatprep.mubr.f32.mxu0 %v2589
        %2816 = vmatmul.mubr.f32.gmra.mrb[0].mxu0 %v2123
        %v2817 = vpop.f32.mrb[0].mxu0
        %v2818 = vadd.f32 %v2696, %v2817
        %v2819 = vpop.f32.mrb[0].mxu0
        %v2820 = vadd.f32 %v2700, %v2819
        %2821 = vmatprep.mubr.f32.mxu0 %v2594
        %2822 = vmatmul.mubr.f32.gmra.mrb[0].mxu0 %v2128
        %v2823 = vpop.f32.mrb[0].mxu0
        %v2824 = vadd.f32 %v2696, %v2823
        %v2825 = vpop.f32.mrb[0].mxu0
        %v2826 = vadd.f32 %v2700, %v2825
        %2827 = vmatprep.mubr.f32.mxu0 %v2599
        %2828 = vmatmul.mubr.f32.gmra.mrb[0].mxu0 %v2133
        %v2829 = vpop.f32.mrb[0].mxu0
        %v2830 = vadd.f32 %v2696, %v2829
        %v2831 = vpop.f32.mrb[0].mxu0
        %v2832 = vadd.f32 %v2700, %v2831
        %2833 = vmatprep.mubr.f32.mxu0 %v2604
        %2834 = vmatmul.mubr.f32.gmra.mrb[0].mxu0 %v2138
        %v2835 = vpop.f32.mrb[0].mxu0
        %v2836 = vadd.f32 %v2696, %v2835
        %v2837 = vpop.f32.mrb[0].mxu0
        %v2838 = vadd.f32 %v2700, %v2837
        %2839 = vmatprep.mubr.f32.mxu0 %v2609
        %2840 = vmatmul.mubr.f32.gmra.mrb[0].mxu0 %v2143
        %v2841 = vpop.f32.mrb[0].mxu0
        %v2842 = vadd.f32 %v2696, %v2841
        %v2843 = vpop.f32.mrb[0].mxu0
        %v2844 = vadd.f32 %v2700, %v2843
        %2845 = vmatprep.mubr.f32.mxu0 %v2614
        %2846 = vmatmul.mubr.f32.gmra.mrb[0].mxu0 %v2148
        %v2847 = vpop.f32.mrb[0].mxu0
        %v2848 = vadd.f32 %v2696, %v2847
        %v2849 = vpop.f32.mrb[0].mxu0
        %v2850 = vadd.f32 %v2700, %v2849
        %2851 = vmatprep.mubr.f32.mxu0 %v2619
        %2852 = vmatmul.mubr.f32.gmra.mrb[0].mxu0 %v2153
        %v2853 = vpop.f32.mrb[0].mxu0
        %v2854 = vadd.f32 %v2696, %v2853
        %v2855 = vpop.f32.mrb[0].mxu0
        %v2856 = vadd.f32 %v2700, %v2855
        %2857 = vmatprep.mubr.f32.mxu0 %v2624
        %2858 = vmatmul.mubr.f32.gmra.mrb[0].mxu0 %v2158
        %v2859 = vpop.f32.mrb[0].mxu0
        %v2860 = vadd.f32 %v2696, %v2859
        %v2861 = vpop.f32.mrb[0].mxu0
        %v2862 = vadd.f32 %v2700, %v2861
        %2863 = vdwg.mxu0
        %v2864 = vadd.f32 %v506, %v2770
        %v2865 = vadd.f32 %v507, %v2772
        %v2866 = vadd.f32 %v508, %v2776
        %v2867 = vadd.f32 %v509, %v2778
        %v2868 = vadd.f32 %v510, %v2782
        %v2869 = vadd.f32 %v511, %v2784
        %v2870 = vadd.f32 %v512, %v2788
        %v2871 = vadd.f32 %v513, %v2790
        %v2872 = vadd.f32 %v514, %v2794
        %v2873 = vadd.f32 %v515, %v2796
        %v2874 = vadd.f32 %v516, %v2800
        %v2875 = vadd.f32 %v517, %v2802
        %v2876 = vadd.f32 %v518, %v2806
        %v2877 = vadd.f32 %v519, %v2808
        %v2878 = vadd.f32 %v520, %v2812
        %v2879 = vadd.f32 %v521, %v2814
        %v2880 = vadd.f32 %v522, %v2818
        %v2881 = vadd.f32 %v523, %v2820
        %v2882 = vadd.f32 %v524, %v2824
        %v2883 = vadd.f32 %v525, %v2826
        %v2884 = vadd.f32 %v526, %v2830
        %v2885 = vadd.f32 %v527, %v2832
        %v2886 = vadd.f32 %v528, %v2836
        %v2887 = vadd.f32 %v529, %v2838
        %v2888 = vadd.f32 %v530, %v2842
        %v2889 = vadd.f32 %v531, %v2844
        %v2890 = vadd.f32 %v532, %v2848
        %v2891 = vadd.f32 %v533, %v2850
        %v2892 = vadd.f32 %v534, %v2854
        %v2893 = vadd.f32 %v535, %v2856
        %v2894 = vadd.f32 %v536, %v2860
        %v2895 = vadd.f32 %v537, %v2862
        %2896 = vst [vmem:[%s502] sm:$0xff] %v2864
        %2897 = vst [vmem:[%s502 + $0x8] sm:$0xff] %v2865
        %2898 = vst [vmem:[%s502 + $0x10] sm:$0xff] %v2866
        %2899 = vst [vmem:[%s502 + $0x18] sm:$0xff] %v2867
        %2900 = vst [vmem:[%s502 + $0x20] sm:$0xff] %v2868
        %2901 = vst [vmem:[%s502 + $0x28] sm:$0xff] %v2869
        %2902 = vst [vmem:[%s502 + $0x30] sm:$0xff] %v2870
        %2903 = vst [vmem:[%s502 + $0x38] sm:$0xff] %v2871
        %2904 = vst [vmem:[%s502 + $0x40] sm:$0xff] %v2872
        %2905 = vst [vmem:[%s502 + $0x48] sm:$0xff] %v2873
        %2906 = vst [vmem:[%s502 + $0x50] sm:$0xff] %v2874
        %2907 = vst [vmem:[%s502 + $0x58] sm:$0xff] %v2875
        %2908 = vst [vmem:[%s502 + $0x60] sm:$0xff] %v2876
        %2909 = vst [vmem:[%s502 + $0x68] sm:$0xff] %v2877
        %2910 = vst [vmem:[%s502 + $0x70] sm:$0xff] %v2878
        %2911 = vst [vmem:[%s502 + $0x78] sm:$0xff] %v2879
        %2912 = vst [vmem:[%s502 + $0x80] sm:$0xff] %v2880
        %2913 = vst [vmem:[%s502 + $0x88] sm:$0xff] %v2881
        %2914 = vst [vmem:[%s502 + $0x90] sm:$0xff] %v2882
        %2915 = vst [vmem:[%s502 + $0x98] sm:$0xff] %v2883
        %2916 = vst [vmem:[%s502 + $0xa0] sm:$0xff] %v2884
        %2917 = vst [vmem:[%s502 + $0xa8] sm:$0xff] %v2885
        %2918 = vst [vmem:[%s502 + $0xb0] sm:$0xff] %v2886
        %2919 = vst [vmem:[%s502 + $0xb8] sm:$0xff] %v2887
        %2920 = vst [vmem:[%s502 + $0xc0] sm:$0xff] %v2888
        %2921 = vst [vmem:[%s502 + $0xc8] sm:$0xff] %v2889
        %2922 = vst [vmem:[%s502 + $0xd0] sm:$0xff] %v2890
        %2923 = vst [vmem:[%s502 + $0xd8] sm:$0xff] %v2891
        %2924 = vst [vmem:[%s502 + $0xe0] sm:$0xff] %v2892
        %2925 = vst [vmem:[%s502 + $0xe8] sm:$0xff] %v2893
        %2926 = vst [vmem:[%s502 + $0xf0] sm:$0xff] %v2894
        %2927 = vst [vmem:[%s502 + $0xf8] sm:$0xff] %v2895
        %s2928 = sand.u32 %s303, 1
        %s2929 = scalar_lea.sflag [#allocation6], %s2928
        %s2930 = sand.u32 %s303, 1
        %s2931 = smul.addr %s2930, 256
        %s2932 = scalar_lea.vmem [#allocation13], %s2931
        // Predicated region
        $region89: #{tpu_custom_call.1} parent=67 // pred_check
          %p2933 = pneg %p313
        $region90: #{tpu_custom_call.1} parent=67 // pred_check_branch
          %2935 = sbr.rel (%p2933) target = $region92
        $region91: #{tpu_custom_call.1} parent=67 // pred_region
          %s2937 = ssub.s32 4096, 4096
          %2938 = vsyncadd %s2929, %s2937
          %s2939 = smul.addr %s33, 32
          %s2940 = smul.addr %s2939, 128
          %s2941 = scalar_lea.hbm %s12, %s2940
          %s2942 = sshll.u32 %s2932, 4
          %s2943 = int_to_ptr.vmem [resolvable:$true] %s2942
          %2948 = dma.vmem_to_hbm [thread:$0]  %s2943, 4096, %s2941, %s2929, 256, 256, 16
        $region92: #{tpu_custom_call.1} parent=67 // pred_fallthru
          _
      $region68: #{tpu_custom_call.1} parent=5 // pred_fallthru
        _
      %p2949 = scmp.le.s32.totalorder 2, %s28
      // Predicated region
      $region93: #{tpu_custom_call.1} parent=5 // pred_check
        %p2950 = pneg %p2949
      $region94: #{tpu_custom_call.1} parent=5 // pred_check_branch
        %2952 = sbr.rel (%p2950) target = $region96
      $region95: #{tpu_custom_call.1} parent=5 // pred_region
        %s2953 = ssub.s32 %s28, 2
        // Predicated region
        $region97: #{tpu_custom_call.1} parent=95 // pred_check
          %p2954 = pneg %p319
        $region98: #{tpu_custom_call.1} parent=95 // pred_check_branch
          %2956 = sbr.rel (%p2954) target = $region100
        $region99: #{tpu_custom_call.1} parent=95 // pred_region
          %s2957 = sand.u32 %s304, 1
          %s2958 = scalar_lea.sflag [#allocation6], %s2957
          %s2959 = sand.u32 %s304, 1
          %s2960 = smul.addr %s2959, 256
          %s2961 = scalar_lea.vmem [#allocation13], %s2960
          %2962 = dma.done %s2958, 4096
        $region100: #{tpu_custom_call.1} parent=95 // pred_fallthru
          _
      $region96: #{tpu_custom_call.1} parent=5 // pred_fallthru
        _
    $region6: #{tpu_custom_call.1} parent=1 // loop_footer
      %s32 = sadd.s32 1, %s28
    $region7: #{tpu_custom_call.1} parent=1 // loop_footer_branch
      %27 = sbr.rel target = $region3
    $region8: #{tpu_custom_call.1} parent=1 // loop_exit
      _
    %2963 = vsyncpa [#allocation5], 1
    %s2964 = scalar_lea.sflag [#allocation5], 1
    %2965 = vsyncpa %s2964, 1
    %2966 = vsyncpa [#allocation8], 1
    %2967 = vsyncpa [#allocation11], 1
    %2968 = vsyncpa [#allocation6], 1
    %s2969 = scalar_lea.sflag [#allocation6], 1
    %2970 = vsyncpa %s2969, 1

</llo_original>
